<compile_context>
chip_gen: v7x
topology: tpu7x:2x2x1
jax: 0.10.0
libtpu: 0.0.40
codegen_flags: <defaults>
</compile_context>

<pallas_src>
import jax
import jax.numpy as jnp
import numpy as np
from jax import lax
from jax.experimental import pallas as pl
from jax.experimental.pallas import tpu as pltpu


def _bottleneck_kernel(x_ref, w1p_ref, s1p_ref, b1p_ref,
                       w2_ref, s2_ref, b2_ref,
                       w3_ref, s3_ref, b3_ref, out_ref):
    _, TH, W, Cout = out_ref.shape
    H = x_ref.shape[1]
    Cin = x_ref.shape[3]
    C = w2_ref.shape[2]

    t = pl.program_id(1)
    nt = pl.num_programs(1)
    h0 = pl.multiple_of(t * TH, TH)

    # TH-row strip plus a clamped 1-row halo on each side (halo rows that fall
    # outside the image are zeroed below, *after* conv1+bn1+relu, which is the
    # tensor conv2's zero padding actually applies to).
    top = jnp.maximum(h0 - 1, 0)
    bot = jnp.minimum(h0 + TH, H - 1)
    x_strip = jnp.concatenate(
        [x_ref[0, pl.ds(top, 1), :, :],
         x_ref[0, pl.ds(h0, TH), :, :],
         x_ref[0, pl.ds(bot, 1), :, :]], axis=0)          # (TH+2, W, Cin) bf16
    x2d = x_strip.reshape((TH + 2) * W, Cin)

    # Fused conv1(1x1)+bn1 and projection conv(1x1)+bn: one MXU matmul, split.
    h1p = jnp.dot(x2d, w1p_ref[...], preferred_element_type=jnp.float32)
    h1p = h1p * s1p_ref[...] + b1p_ref[...]
    proj = h1p[W:(TH + 1) * W, C:]                        # (TH*W, Cout) f32
    h1 = jnp.maximum(h1p[:, :C], 0.0).reshape(TH + 2, W, C)

    # conv2 zero padding along H: zero halo rows lying outside the image.
    row = lax.broadcasted_iota(jnp.int32, (TH + 2, 1, C), 0)
    valid = jnp.logical_and(jnp.logical_or(row > 0, t > 0),
                            jnp.logical_or(row < TH + 1, t < nt - 1))
    h1 = jnp.where(valid, h1, 0.0).astype(jnp.bfloat16)

    # conv2 zero padding along W: pre-build the three W-shifted taps once.
    zcol = jnp.zeros((TH + 2, 1, C), jnp.bfloat16)
    h1_w = (jnp.concatenate([zcol, h1[:, :W - 1, :]], axis=1),   # dj = -1
            h1,                                                  # dj =  0
            jnp.concatenate([h1[:, 1:, :], zcol], axis=1))       # dj = +1

    # conv2 (3x3, stride 1, pad 1) + bn2 + relu: 9 shifted bf16 matmuls,
    # f32 accumulation.  H-taps are cheap static slices of the halo'd strip.
    acc = jnp.zeros((TH * W, C), jnp.float32)
    for a in range(3):        # di = a - 1
        for b in range(3):    # dj = b - 1
            patch = h1_w[b][a:a + TH].reshape(TH * W, C)
            acc = acc + jnp.dot(patch, w2_ref[a, b],
                                preferred_element_type=jnp.float32)
    h2 = jnp.maximum(acc * s2_ref[...] + b2_ref[...], 0.0).astype(jnp.bfloat16)

    # conv3 (1x1) + bn3, residual add (projection branch), final ReLU.
    h3 = jnp.dot(h2, w3_ref[...], preferred_element_type=jnp.float32)
    h3 = h3 * s3_ref[...] + b3_ref[...]
    out = jnp.maximum(h3 + proj, 0.0)
    out_ref[...] = out.reshape(1, TH, W, Cout).astype(out_ref.dtype)


def _round_up(x, m):
    return -(-x // m) * m


def _pad_to(a, shape):
    return jnp.pad(a, [(0, s - d) for d, s in zip(a.shape, shape)])


def bottleneck_forward(x_nchw, p, *, row_tile=8, lane=128):
    N, Cin, H, W = x_nchw.shape
    C = p["w1"].shape[1]
    Cout = p["w3"].shape[1]
    th = min(row_tile, H)
    assert H % th == 0, "image height must be divisible by the row-strip size"
    Cin_p, C_p, Cout_p = (_round_up(c, lane) for c in (Cin, C, Cout))

    # NHWC, channels zero-padded to lane multiples, bf16 operands for the MXU.
    x = jnp.transpose(x_nchw, (0, 2, 3, 1)).astype(jnp.float32)
    x = _pad_to(x, (N, H, W, Cin_p)).astype(jnp.bfloat16)

    # Fused conv1 + projection weights and folded-BN params (padded).
    w1p = jnp.concatenate([_pad_to(p["w1"], (Cin_p, C_p)),
                           _pad_to(p["wp"], (Cin_p, Cout_p))],
                          axis=1).astype(jnp.bfloat16)
    s1p = jnp.concatenate([_pad_to(p["s1"], (1, C_p)),
                           _pad_to(p["sp"], (1, Cout_p))], axis=1).astype(jnp.float32)
    b1p = jnp.concatenate([_pad_to(p["b1"], (1, C_p)),
                           _pad_to(p["bp"], (1, Cout_p))], axis=1).astype(jnp.float32)
    w2 = _pad_to(p["w2"], (3, 3, C_p, C_p)).astype(jnp.bfloat16)
    w3 = _pad_to(p["w3"], (C_p, Cout_p)).astype(jnp.bfloat16)
    s2 = _pad_to(p["s2"], (1, C_p)).astype(jnp.float32)
    b2 = _pad_to(p["b2"], (1, C_p)).astype(jnp.float32)
    s3 = _pad_to(p["s3"], (1, Cout_p)).astype(jnp.float32)
    b3 = _pad_to(p["b3"], (1, Cout_p)).astype(jnp.float32)

    def whole(a):  # full-array block; never re-fetched across grid steps
        return pl.BlockSpec(a.shape, lambda n, t: (0,) * a.ndim)

    out_nhwc = pl.pallas_call(
        _bottleneck_kernel,
        out_shape=jax.ShapeDtypeStruct((N, H, W, Cout_p), jnp.float32),
        grid_spec=pltpu.PrefetchScalarGridSpec(
            num_scalar_prefetch=0,
            grid=(N, H // th),
            in_specs=[
                pl.BlockSpec((1, H, W, Cin_p), lambda n, t: (n, 0, 0, 0)),
                whole(w1p), whole(s1p), whole(b1p),
                whole(w2), whole(s2), whole(b2),
                whole(w3), whole(s3), whole(b3),
            ],
            out_specs=pl.BlockSpec((1, th, W, Cout_p),
                                   lambda n, t: (n, t, 0, 0)),
        ),
        compiler_params=pltpu.CompilerParams(
            dimension_semantics=("parallel", "parallel"),
            vmem_limit_bytes=48 * 1024 * 1024),
    )(x, w1p, s1p, b1p, w2, s2, b2, w3, s3, b3)

    out = out_nhwc[..., :Cout]
    return jnp.transpose(out, (0, 3, 1, 2))


def _fold_bn(gamma, beta, mean, var, eps=1e-5):
    scale = gamma / jnp.sqrt(var + eps)
    bias = beta - mean * scale
    return scale.reshape(1, -1), bias.reshape(1, -1)


def make_params(key, in_channels, channels, expansion=4):
    cout = expansion * channels
    keys = jax.random.split(key, 20)

    def nrm(k, shape, s=0.1):
        return (s * jax.random.normal(k, shape)).astype(jnp.float32)

    def bn(k, c):
        k1, k2, k3, k4 = jax.random.split(k, 4)
        gamma = 1.0 + 0.1 * jax.random.normal(k1, (c,))
        beta = 0.1 * jax.random.normal(k2, (c,))
        mean = 0.1 * jax.random.normal(k3, (c,))
        var = jnp.abs(jax.random.normal(k4, (c,))) + 0.5
        return _fold_bn(gamma.astype(jnp.float32), beta.astype(jnp.float32),
                        mean.astype(jnp.float32), var.astype(jnp.float32))

    s1, b1 = bn(keys[4], channels)
    s2, b2 = bn(keys[5], channels)
    s3, b3 = bn(keys[6], cout)
    sp, bp = bn(keys[7], cout)
    return {
        # conv weights stored as (Cin, Cout) / (kh, kw, Cin, Cout) for NHWC matmuls
        "w1": nrm(keys[0], (in_channels, channels)),
        "w2": nrm(keys[1], (3, 3, channels, channels)),
        "w3": nrm(keys[2], (channels, cout)),
        "wp": nrm(keys[3], (in_channels, cout)),
        "s1": s1, "b1": b1, "s2": s2, "b2": b2,
        "s3": s3, "b3": b3, "sp": sp, "bp": bp,
    }


def reference_forward(x_nchw, p):
    """Pure-JAX (XLA, f32) reference with identical semantics, for validation."""
    x = jnp.transpose(x_nchw, (0, 2, 3, 1)).astype(jnp.float32)
    N, H, W, _ = x.shape

    def conv1x1(h, w):
        return jnp.einsum("nhwc,cd->nhwd", h, w)

    h = jnp.maximum(conv1x1(x, p["w1"]) * p["s1"][0] + p["b1"][0], 0.0)
    hp = jnp.pad(h, ((0, 0), (1, 1), (1, 1), (0, 0)))
    acc = jnp.zeros(h.shape[:3] + (p["w2"].shape[-1],), jnp.float32)
    for di in range(3):
        for dj in range(3):
            acc = acc + jnp.einsum("nhwc,cd->nhwd",
                                   hp[:, di:di + H, dj:dj + W, :], p["w2"][di, dj])
    h = jnp.maximum(acc * p["s2"][0] + p["b2"][0], 0.0)
    h = conv1x1(h, p["w3"]) * p["s3"][0] + p["b3"][0]
    proj = conv1x1(x, p["wp"]) * p["sp"][0] + p["bp"][0]
    out = jnp.maximum(h + proj, 0.0)
    return jnp.transpose(out, (0, 3, 1, 2))


if __name__ == "__main__":
    # Small shapes consistent with the module: x is NCHW (like PyTorch).
    N, in_channels, channels, H, W = 2, 4, 8, 16, 16   # stride=1, projection active
    key = jax.random.PRNGKey(0)
    kx, kp = jax.random.split(key)
    x = jax.random.normal(kx, (N, in_channels, H, W), dtype=jnp.float32)
    params = make_params(kp, in_channels, channels)

    out = jax.block_until_ready(bottleneck_forward(x, params))
    ref = jax.block_until_ready(reference_forward(x, params))

    assert out.shape == (N, 4 * channels, H, W), out.shape
    # bf16 matmul operands (f32 accumulation) vs f32 reference -> loosened tols.
    np.testing.assert_allclose(np.asarray(out), np.asarray(ref), rtol=2e-2, atol=2e-2)
    print("KERNEL_OK")
</pallas_src>

<mosaic_0001>
module attributes {stable_mosaic.version = 11 : i64} {
  func.func @_bottleneck_kernel(%arg0: i32, %arg1: i32, %arg2: memref<1x16x16x128xbf16, #tpu.memory_space<vmem>>, %arg3: memref<128x256xbf16, #tpu.memory_space<vmem>>, %arg4: memref<1x256xf32, #tpu.memory_space<vmem>>, %arg5: memref<1x256xf32, #tpu.memory_space<vmem>>, %arg6: memref<3x3x128x128xbf16, #tpu.memory_space<vmem>>, %arg7: memref<1x128xf32, #tpu.memory_space<vmem>>, %arg8: memref<1x128xf32, #tpu.memory_space<vmem>>, %arg9: memref<128x128xbf16, #tpu.memory_space<vmem>>, %arg10: memref<1x128xf32, #tpu.memory_space<vmem>>, %arg11: memref<1x128xf32, #tpu.memory_space<vmem>>, %arg12: memref<1x8x16x128xf32, #tpu.memory_space<vmem>>) attributes {dimension_semantics = [#tpu.dimension_semantics<parallel>, #tpu.dimension_semantics<parallel>], iteration_bounds = array<i64: 2, 2>, scalar_prefetch = 0 : i64, scratch_operands = 0 : i64, tpu.core_type = #tpu.core_type<tc>, window_params = [{transform_indices = @transform_0, window_bounds = array<i64: 1, 16, 16, 128>}, {pipeline_mode = #tpu.pipeline_mode<synchronous>, transform_indices = @transform_1, window_bounds = array<i64: 128, 256>}, {pipeline_mode = #tpu.pipeline_mode<synchronous>, transform_indices = @transform_2, window_bounds = array<i64: 1, 256>}, {pipeline_mode = #tpu.pipeline_mode<synchronous>, transform_indices = @transform_3, window_bounds = array<i64: 1, 256>}, {pipeline_mode = #tpu.pipeline_mode<synchronous>, transform_indices = @transform_4, window_bounds = array<i64: 3, 3, 128, 128>}, {pipeline_mode = #tpu.pipeline_mode<synchronous>, transform_indices = @transform_5, window_bounds = array<i64: 1, 128>}, {pipeline_mode = #tpu.pipeline_mode<synchronous>, transform_indices = @transform_6, window_bounds = array<i64: 1, 128>}, {pipeline_mode = #tpu.pipeline_mode<synchronous>, transform_indices = @transform_7, window_bounds = array<i64: 128, 128>}, {pipeline_mode = #tpu.pipeline_mode<synchronous>, transform_indices = @transform_8, window_bounds = array<i64: 1, 128>}, {pipeline_mode = #tpu.pipeline_mode<synchronous>, transform_indices = @transform_9, window_bounds = array<i64: 1, 128>}, {transform_indices = @transform_10, window_bounds = array<i64: 1, 8, 16, 128>}]} {
    %c8_i32 = arith.constant 8 : i32
    %0 = arith.muli %arg1, %c8_i32 : i32
    %1 = tpu.assume_multiple %0, 8 : i32
    %c1_i32 = arith.constant 1 : i32
    %2 = arith.subi %1, %c1_i32 : i32
    %c0_i32 = arith.constant 0 : i32
    %3 = arith.maxsi %2, %c0_i32 : i32
    %c8_i32_0 = arith.constant 8 : i32
    %4 = arith.addi %1, %c8_i32_0 : i32
    %c15_i32 = arith.constant 15 : i32
    %5 = arith.minsi %4, %c15_i32 : i32
    %c0 = arith.constant 0 : index
    %6 = arith.index_cast %3 : i32 to index
    %c0_1 = arith.constant 0 : index
    %c0_2 = arith.constant 0 : index
    %7 = vector.load %arg2[%c0, %6, %c0_1, %c0_2] : memref<1x16x16x128xbf16, #tpu.memory_space<vmem>>, vector<1x1x16x128xbf16>
    %8 = vector.shape_cast %7 : vector<1x1x16x128xbf16> to vector<1x16x128xbf16>
    %c0_3 = arith.constant 0 : index
    %9 = arith.index_cast %1 : i32 to index
    %c0_4 = arith.constant 0 : index
    %c0_5 = arith.constant 0 : index
    %10 = vector.load %arg2[%c0_3, %9, %c0_4, %c0_5] : memref<1x16x16x128xbf16, #tpu.memory_space<vmem>>, vector<1x8x16x128xbf16>
    %11 = vector.shape_cast %10 : vector<1x8x16x128xbf16> to vector<8x16x128xbf16>
    %c0_6 = arith.constant 0 : index
    %12 = arith.index_cast %5 : i32 to index
    %c0_7 = arith.constant 0 : index
    %c0_8 = arith.constant 0 : index
    %13 = vector.load %arg2[%c0_6, %12, %c0_7, %c0_8] : memref<1x16x16x128xbf16, #tpu.memory_space<vmem>>, vector<1x1x16x128xbf16>
    %14 = vector.shape_cast %13 : vector<1x1x16x128xbf16> to vector<1x16x128xbf16>
    %15 = tpu.concatenate %8, %11, %14 in 0 : vector<1x16x128xbf16>, vector<8x16x128xbf16>, vector<1x16x128xbf16> -> vector<10x16x128xbf16>
    %16 = vector.shape_cast %15 : vector<10x16x128xbf16> to vector<160x128xbf16>
    %c0_9 = arith.constant 0 : index
    %c0_10 = arith.constant 0 : index
    %17 = vector.load %arg3[%c0_9, %c0_10] : memref<128x256xbf16, #tpu.memory_space<vmem>>, vector<128x256xbf16>
    %cst = arith.constant dense<0.000000e+00> : vector<160x256xf32>
    %18 = tpu.matmul %16, %17, %cst {dimension_numbers = #tpu.dot_dimension_numbers<[1], [0], [0], [1], [0, 0, 1, 1], [], []>} : vector<160x128xbf16>, vector<128x256xbf16>, vector<160x256xf32> -> vector<160x256xf32>
    %c0_11 = arith.constant 0 : index
    %c0_12 = arith.constant 0 : index
    %19 = vector.load %arg4[%c0_11, %c0_12] : memref<1x256xf32, #tpu.memory_space<vmem>>, vector<1x256xf32>
    %20 = vector.broadcast %19 : vector<1x256xf32> to vector<160x256xf32>
    %21 = arith.mulf %18, %20 : vector<160x256xf32>
    %c0_13 = arith.constant 0 : index
    %c0_14 = arith.constant 0 : index
    %22 = vector.load %arg5[%c0_13, %c0_14] : memref<1x256xf32, #tpu.memory_space<vmem>>, vector<1x256xf32>
    %23 = vector.broadcast %22 : vector<1x256xf32> to vector<160x256xf32>
    %24 = arith.addf %21, %23 : vector<160x256xf32>
    %25 = vector.extract_strided_slice %24 {offsets = [16, 128], sizes = [128, 128], strides = [1, 1]} : vector<160x256xf32> to vector<128x128xf32>
    %26 = vector.extract_strided_slice %24 {offsets = [0, 0], sizes = [160, 128], strides = [1, 1]} : vector<160x256xf32> to vector<160x128xf32>
    %cst_15 = arith.constant 0.000000e+00 : f32
    %27 = vector.broadcast %cst_15 : f32 to vector<160x128xf32>
    %28 = arith.maximumf %26, %27 : vector<160x128xf32>
    %29 = vector.shape_cast %28 : vector<160x128xf32> to vector<10x16x128xf32>
    %30 = tpu.iota {dimensions = array<i32: 0>} : vector<10x1x128xi32>
    %c0_i32_16 = arith.constant 0 : i32
    %31 = vector.broadcast %c0_i32_16 : i32 to vector<10x1x128xi32>
    %32 = arith.cmpi sgt, %30, %31 : vector<10x1x128xi32>
    %c0_i32_17 = arith.constant 0 : i32
    %33 = arith.cmpi sgt, %arg1, %c0_i32_17 : i32
    %34 = vector.broadcast %33 : i1 to vector<10x1x128xi1>
    %35 = arith.ori %32, %34 : vector<10x1x128xi1>
    %c9_i32 = arith.constant 9 : i32
    %36 = vector.broadcast %c9_i32 : i32 to vector<10x1x128xi32>
    %37 = arith.cmpi slt, %30, %36 : vector<10x1x128xi32>
    %c1_i32_18 = arith.constant 1 : i32
    %38 = arith.cmpi slt, %arg1, %c1_i32_18 : i32
    %39 = vector.broadcast %38 : i1 to vector<10x1x128xi1>
    %40 = arith.ori %37, %39 : vector<10x1x128xi1>
    %41 = arith.andi %35, %40 : vector<10x1x128xi1>
    %cst_19 = arith.constant 0.000000e+00 : f32
    %42 = vector.shape_cast %41 : vector<10x1x128xi1> to vector<10x1x128xi1>
    %43 = vector.broadcast %42 : vector<10x1x128xi1> to vector<10x16x128xi1>
    %44 = vector.broadcast %cst_19 : f32 to vector<10x16x128xf32>
    %45 = arith.select %43, %29, %44 : vector<10x16x128xi1>, vector<10x16x128xf32>
    %46 = arith.truncf %45 : vector<10x16x128xf32> to vector<10x16x128xbf16>
    %cst_20 = arith.constant 0.000000e+00 : bf16
    %47 = vector.broadcast %cst_20 : bf16 to vector<10x1x128xbf16>
    %48 = vector.extract_strided_slice %46 {offsets = [0, 0, 0], sizes = [10, 15, 128], strides = [1, 1, 1]} : vector<10x16x128xbf16> to vector<10x15x128xbf16>
    %49 = tpu.concatenate %47, %48 in 1 : vector<10x1x128xbf16>, vector<10x15x128xbf16> -> vector<10x16x128xbf16>
    %50 = vector.extract_strided_slice %46 {offsets = [0, 1, 0], sizes = [10, 15, 128], strides = [1, 1, 1]} : vector<10x16x128xbf16> to vector<10x15x128xbf16>
    %51 = tpu.concatenate %50, %47 in 1 : vector<10x15x128xbf16>, vector<10x1x128xbf16> -> vector<10x16x128xbf16>
    %cst_21 = arith.constant 0.000000e+00 : f32
    %52 = vector.broadcast %cst_21 : f32 to vector<128x128xf32>
    %53 = vector.extract_strided_slice %49 {offsets = [0, 0, 0], sizes = [8, 16, 128], strides = [1, 1, 1]} : vector<10x16x128xbf16> to vector<8x16x128xbf16>
    %54 = vector.shape_cast %53 : vector<8x16x128xbf16> to vector<128x128xbf16>
    %c0_22 = arith.constant 0 : index
    %c0_23 = arith.constant 0 : index
    %c0_24 = arith.constant 0 : index
    %c0_25 = arith.constant 0 : index
    %55 = vector.load %arg6[%c0_22, %c0_23, %c0_24, %c0_25] : memref<3x3x128x128xbf16, #tpu.memory_space<vmem>>, vector<1x1x128x128xbf16>
    %56 = vector.shape_cast %55 : vector<1x1x128x128xbf16> to vector<128x128xbf16>
    %cst_26 = arith.constant dense<0.000000e+00> : vector<128x128xf32>
    %57 = tpu.matmul %54, %56, %cst_26 {dimension_numbers = #tpu.dot_dimension_numbers<[1], [0], [0], [1], [0, 0, 1, 1], [], []>} : vector<128x128xbf16>, vector<128x128xbf16>, vector<128x128xf32> -> vector<128x128xf32>
    %58 = arith.addf %52, %57 : vector<128x128xf32>
    %59 = vector.extract_strided_slice %46 {offsets = [0, 0, 0], sizes = [8, 16, 128], strides = [1, 1, 1]} : vector<10x16x128xbf16> to vector<8x16x128xbf16>
    %60 = vector.shape_cast %59 : vector<8x16x128xbf16> to vector<128x128xbf16>
    %c0_27 = arith.constant 0 : index
    %c1 = arith.constant 1 : index
    %c0_28 = arith.constant 0 : index
    %c0_29 = arith.constant 0 : index
    %61 = vector.load %arg6[%c0_27, %c1, %c0_28, %c0_29] : memref<3x3x128x128xbf16, #tpu.memory_space<vmem>>, vector<1x1x128x128xbf16>
    %62 = vector.shape_cast %61 : vector<1x1x128x128xbf16> to vector<128x128xbf16>
    %cst_30 = arith.constant dense<0.000000e+00> : vector<128x128xf32>
    %63 = tpu.matmul %60, %62, %cst_30 {dimension_numbers = #tpu.dot_dimension_numbers<[1], [0], [0], [1], [0, 0, 1, 1], [], []>} : vector<128x128xbf16>, vector<128x128xbf16>, vector<128x128xf32> -> vector<128x128xf32>
    %64 = arith.addf %58, %63 : vector<128x128xf32>
    %65 = vector.extract_strided_slice %51 {offsets = [0, 0, 0], sizes = [8, 16, 128], strides = [1, 1, 1]} : vector<10x16x128xbf16> to vector<8x16x128xbf16>
    %66 = vector.shape_cast %65 : vector<8x16x128xbf16> to vector<128x128xbf16>
    %c0_31 = arith.constant 0 : index
    %c2 = arith.constant 2 : index
    %c0_32 = arith.constant 0 : index
    %c0_33 = arith.constant 0 : index
    %67 = vector.load %arg6[%c0_31, %c2, %c0_32, %c0_33] : memref<3x3x128x128xbf16, #tpu.memory_space<vmem>>, vector<1x1x128x128xbf16>
    %68 = vector.shape_cast %67 : vector<1x1x128x128xbf16> to vector<128x128xbf16>
    %cst_34 = arith.constant dense<0.000000e+00> : vector<128x128xf32>
    %69 = tpu.matmul %66, %68, %cst_34 {dimension_numbers = #tpu.dot_dimension_numbers<[1], [0], [0], [1], [0, 0, 1, 1], [], []>} : vector<128x128xbf16>, vector<128x128xbf16>, vector<128x128xf32> -> vector<128x128xf32>
    %70 = arith.addf %64, %69 : vector<128x128xf32>
    %71 = vector.extract_strided_slice %49 {offsets = [1, 0, 0], sizes = [8, 16, 128], strides = [1, 1, 1]} : vector<10x16x128xbf16> to vector<8x16x128xbf16>
    %72 = vector.shape_cast %71 : vector<8x16x128xbf16> to vector<128x128xbf16>
    %c1_35 = arith.constant 1 : index
    %c0_36 = arith.constant 0 : index
    %c0_37 = arith.constant 0 : index
    %c0_38 = arith.constant 0 : index
    %73 = vector.load %arg6[%c1_35, %c0_36, %c0_37, %c0_38] : memref<3x3x128x128xbf16, #tpu.memory_space<vmem>>, vector<1x1x128x128xbf16>
    %74 = vector.shape_cast %73 : vector<1x1x128x128xbf16> to vector<128x128xbf16>
    %cst_39 = arith.constant dense<0.000000e+00> : vector<128x128xf32>
    %75 = tpu.matmul %72, %74, %cst_39 {dimension_numbers = #tpu.dot_dimension_numbers<[1], [0], [0], [1], [0, 0, 1, 1], [], []>} : vector<128x128xbf16>, vector<128x128xbf16>, vector<128x128xf32> -> vector<128x128xf32>
    %76 = arith.addf %70, %75 : vector<128x128xf32>
    %77 = vector.extract_strided_slice %46 {offsets = [1, 0, 0], sizes = [8, 16, 128], strides = [1, 1, 1]} : vector<10x16x128xbf16> to vector<8x16x128xbf16>
    %78 = vector.shape_cast %77 : vector<8x16x128xbf16> to vector<128x128xbf16>
    %c1_40 = arith.constant 1 : index
    %c1_41 = arith.constant 1 : index
    %c0_42 = arith.constant 0 : index
    %c0_43 = arith.constant 0 : index
    %79 = vector.load %arg6[%c1_40, %c1_41, %c0_42, %c0_43] : memref<3x3x128x128xbf16, #tpu.memory_space<vmem>>, vector<1x1x128x128xbf16>
    %80 = vector.shape_cast %79 : vector<1x1x128x128xbf16> to vector<128x128xbf16>
    %cst_44 = arith.constant dense<0.000000e+00> : vector<128x128xf32>
    %81 = tpu.matmul %78, %80, %cst_44 {dimension_numbers = #tpu.dot_dimension_numbers<[1], [0], [0], [1], [0, 0, 1, 1], [], []>} : vector<128x128xbf16>, vector<128x128xbf16>, vector<128x128xf32> -> vector<128x128xf32>
    %82 = arith.addf %76, %81 : vector<128x128xf32>
    %83 = vector.extract_strided_slice %51 {offsets = [1, 0, 0], sizes = [8, 16, 128], strides = [1, 1, 1]} : vector<10x16x128xbf16> to vector<8x16x128xbf16>
    %84 = vector.shape_cast %83 : vector<8x16x128xbf16> to vector<128x128xbf16>
    %c1_45 = arith.constant 1 : index
    %c2_46 = arith.constant 2 : index
    %c0_47 = arith.constant 0 : index
    %c0_48 = arith.constant 0 : index
    %85 = vector.load %arg6[%c1_45, %c2_46, %c0_47, %c0_48] : memref<3x3x128x128xbf16, #tpu.memory_space<vmem>>, vector<1x1x128x128xbf16>
    %86 = vector.shape_cast %85 : vector<1x1x128x128xbf16> to vector<128x128xbf16>
    %cst_49 = arith.constant dense<0.000000e+00> : vector<128x128xf32>
    %87 = tpu.matmul %84, %86, %cst_49 {dimension_numbers = #tpu.dot_dimension_numbers<[1], [0], [0], [1], [0, 0, 1, 1], [], []>} : vector<128x128xbf16>, vector<128x128xbf16>, vector<128x128xf32> -> vector<128x128xf32>
    %88 = arith.addf %82, %87 : vector<128x128xf32>
    %89 = vector.extract_strided_slice %49 {offsets = [2, 0, 0], sizes = [8, 16, 128], strides = [1, 1, 1]} : vector<10x16x128xbf16> to vector<8x16x128xbf16>
    %90 = vector.shape_cast %89 : vector<8x16x128xbf16> to vector<128x128xbf16>
    %c2_50 = arith.constant 2 : index
    %c0_51 = arith.constant 0 : index
    %c0_52 = arith.constant 0 : index
    %c0_53 = arith.constant 0 : index
    %91 = vector.load %arg6[%c2_50, %c0_51, %c0_52, %c0_53] : memref<3x3x128x128xbf16, #tpu.memory_space<vmem>>, vector<1x1x128x128xbf16>
    %92 = vector.shape_cast %91 : vector<1x1x128x128xbf16> to vector<128x128xbf16>
    %cst_54 = arith.constant dense<0.000000e+00> : vector<128x128xf32>
    %93 = tpu.matmul %90, %92, %cst_54 {dimension_numbers = #tpu.dot_dimension_numbers<[1], [0], [0], [1], [0, 0, 1, 1], [], []>} : vector<128x128xbf16>, vector<128x128xbf16>, vector<128x128xf32> -> vector<128x128xf32>
    %94 = arith.addf %88, %93 : vector<128x128xf32>
    %95 = vector.extract_strided_slice %46 {offsets = [2, 0, 0], sizes = [8, 16, 128], strides = [1, 1, 1]} : vector<10x16x128xbf16> to vector<8x16x128xbf16>
    %96 = vector.shape_cast %95 : vector<8x16x128xbf16> to vector<128x128xbf16>
    %c2_55 = arith.constant 2 : index
    %c1_56 = arith.constant 1 : index
    %c0_57 = arith.constant 0 : index
    %c0_58 = arith.constant 0 : index
    %97 = vector.load %arg6[%c2_55, %c1_56, %c0_57, %c0_58] : memref<3x3x128x128xbf16, #tpu.memory_space<vmem>>, vector<1x1x128x128xbf16>
    %98 = vector.shape_cast %97 : vector<1x1x128x128xbf16> to vector<128x128xbf16>
    %cst_59 = arith.constant dense<0.000000e+00> : vector<128x128xf32>
    %99 = tpu.matmul %96, %98, %cst_59 {dimension_numbers = #tpu.dot_dimension_numbers<[1], [0], [0], [1], [0, 0, 1, 1], [], []>} : vector<128x128xbf16>, vector<128x128xbf16>, vector<128x128xf32> -> vector<128x128xf32>
    %100 = arith.addf %94, %99 : vector<128x128xf32>
    %101 = vector.extract_strided_slice %51 {offsets = [2, 0, 0], sizes = [8, 16, 128], strides = [1, 1, 1]} : vector<10x16x128xbf16> to vector<8x16x128xbf16>
    %102 = vector.shape_cast %101 : vector<8x16x128xbf16> to vector<128x128xbf16>
    %c2_60 = arith.constant 2 : index
    %c2_61 = arith.constant 2 : index
    %c0_62 = arith.constant 0 : index
    %c0_63 = arith.constant 0 : index
    %103 = vector.load %arg6[%c2_60, %c2_61, %c0_62, %c0_63] : memref<3x3x128x128xbf16, #tpu.memory_space<vmem>>, vector<1x1x128x128xbf16>
    %104 = vector.shape_cast %103 : vector<1x1x128x128xbf16> to vector<128x128xbf16>
    %cst_64 = arith.constant dense<0.000000e+00> : vector<128x128xf32>
    %105 = tpu.matmul %102, %104, %cst_64 {dimension_numbers = #tpu.dot_dimension_numbers<[1], [0], [0], [1], [0, 0, 1, 1], [], []>} : vector<128x128xbf16>, vector<128x128xbf16>, vector<128x128xf32> -> vector<128x128xf32>
    %106 = arith.addf %100, %105 : vector<128x128xf32>
    %c0_65 = arith.constant 0 : index
    %c0_66 = arith.constant 0 : index
    %107 = vector.load %arg7[%c0_65, %c0_66] : memref<1x128xf32, #tpu.memory_space<vmem>>, vector<1x128xf32>
    %108 = vector.broadcast %107 : vector<1x128xf32> to vector<128x128xf32>
    %109 = arith.mulf %106, %108 : vector<128x128xf32>
    %c0_67 = arith.constant 0 : index
    %c0_68 = arith.constant 0 : index
    %110 = vector.load %arg8[%c0_67, %c0_68] : memref<1x128xf32, #tpu.memory_space<vmem>>, vector<1x128xf32>
    %111 = vector.broadcast %110 : vector<1x128xf32> to vector<128x128xf32>
    %112 = arith.addf %109, %111 : vector<128x128xf32>
    %cst_69 = arith.constant 0.000000e+00 : f32
    %113 = vector.broadcast %cst_69 : f32 to vector<128x128xf32>
    %114 = arith.maximumf %112, %113 : vector<128x128xf32>
    %115 = arith.truncf %114 : vector<128x128xf32> to vector<128x128xbf16>
    %c0_70 = arith.constant 0 : index
    %c0_71 = arith.constant 0 : index
    %116 = vector.load %arg9[%c0_70, %c0_71] : memref<128x128xbf16, #tpu.memory_space<vmem>>, vector<128x128xbf16>
    %cst_72 = arith.constant dense<0.000000e+00> : vector<128x128xf32>
    %117 = tpu.matmul %115, %116, %cst_72 {dimension_numbers = #tpu.dot_dimension_numbers<[1], [0], [0], [1], [0, 0, 1, 1], [], []>} : vector<128x128xbf16>, vector<128x128xbf16>, vector<128x128xf32> -> vector<128x128xf32>
    %c0_73 = arith.constant 0 : index
    %c0_74 = arith.constant 0 : index
    %118 = vector.load %arg10[%c0_73, %c0_74] : memref<1x128xf32, #tpu.memory_space<vmem>>, vector<1x128xf32>
    %119 = vector.broadcast %118 : vector<1x128xf32> to vector<128x128xf32>
    %120 = arith.mulf %117, %119 : vector<128x128xf32>
    %c0_75 = arith.constant 0 : index
    %c0_76 = arith.constant 0 : index
    %121 = vector.load %arg11[%c0_75, %c0_76] : memref<1x128xf32, #tpu.memory_space<vmem>>, vector<1x128xf32>
    %122 = vector.broadcast %121 : vector<1x128xf32> to vector<128x128xf32>
    %123 = arith.addf %120, %122 : vector<128x128xf32>
    %124 = arith.addf %123, %25 : vector<128x128xf32>
    %cst_77 = arith.constant 0.000000e+00 : f32
    %125 = vector.broadcast %cst_77 : f32 to vector<128x128xf32>
    %126 = arith.maximumf %124, %125 : vector<128x128xf32>
    %127 = vector.shape_cast %126 : vector<128x128xf32> to vector<1x8x16x128xf32>
    %c0_78 = arith.constant 0 : index
    %c0_79 = arith.constant 0 : index
    %c0_80 = arith.constant 0 : index
    %c0_81 = arith.constant 0 : index
    %128 = vector.load %arg12[%c0_78, %c0_79, %c0_80, %c0_81] : memref<1x8x16x128xf32, #tpu.memory_space<vmem>>, vector<1x8x16x128xf32>
    tpu.vector_store %arg12[%c0_78, %c0_79, %c0_80, %c0_81], %127 {strides = array<i32>} : memref<1x8x16x128xf32, #tpu.memory_space<vmem>>, vector<1x8x16x128xf32>,
    return
  }
  func.func @transform_0(%arg0: i32, %arg1: i32) -> (i32, i32, i32, i32) {
    %c0_i32 = arith.constant 0 : i32
    %c0_i32_0 = arith.constant 0 : i32
    %c0_i32_1 = arith.constant 0 : i32
    %c0_i32_2 = arith.constant 0 : i32
    return %arg0, %c0_i32, %c0_i32_0, %c0_i32_1 : i32, i32, i32, i32
  }
  func.func @transform_1(%arg0: i32, %arg1: i32) -> (i32, i32) {
    %c0_i32 = arith.constant 0 : i32
    %c0_i32_0 = arith.constant 0 : i32
    %c0_i32_1 = arith.constant 0 : i32
    return %c0_i32, %c0_i32_0 : i32, i32
  }
  func.func @transform_2(%arg0: i32, %arg1: i32) -> (i32, i32) {
    %c0_i32 = arith.constant 0 : i32
    %c0_i32_0 = arith.constant 0 : i32
    %c0_i32_1 = arith.constant 0 : i32
    return %c0_i32, %c0_i32_0 : i32, i32
  }
  func.func @transform_3(%arg0: i32, %arg1: i32) -> (i32, i32) {
    %c0_i32 = arith.constant 0 : i32
    %c0_i32_0 = arith.constant 0 : i32
    %c0_i32_1 = arith.constant 0 : i32
    return %c0_i32, %c0_i32_0 : i32, i32
  }
  func.func @transform_4(%arg0: i32, %arg1: i32) -> (i32, i32, i32, i32) {
    %c0_i32 = arith.constant 0 : i32
    %c0_i32_0 = arith.constant 0 : i32
    %c0_i32_1 = arith.constant 0 : i32
    %c0_i32_2 = arith.constant 0 : i32
    %c0_i32_3 = arith.constant 0 : i32
    return %c0_i32, %c0_i32_0, %c0_i32_1, %c0_i32_2 : i32, i32, i32, i32
  }
  func.func @transform_5(%arg0: i32, %arg1: i32) -> (i32, i32) {
    %c0_i32 = arith.constant 0 : i32
    %c0_i32_0 = arith.constant 0 : i32
    %c0_i32_1 = arith.constant 0 : i32
    return %c0_i32, %c0_i32_0 : i32, i32
  }
  func.func @transform_6(%arg0: i32, %arg1: i32) -> (i32, i32) {
    %c0_i32 = arith.constant 0 : i32
    %c0_i32_0 = arith.constant 0 : i32
    %c0_i32_1 = arith.constant 0 : i32
    return %c0_i32, %c0_i32_0 : i32, i32
  }
  func.func @transform_7(%arg0: i32, %arg1: i32) -> (i32, i32) {
    %c0_i32 = arith.constant 0 : i32
    %c0_i32_0 = arith.constant 0 : i32
    %c0_i32_1 = arith.constant 0 : i32
    return %c0_i32, %c0_i32_0 : i32, i32
  }
  func.func @transform_8(%arg0: i32, %arg1: i32) -> (i32, i32) {
    %c0_i32 = arith.constant 0 : i32
    %c0_i32_0 = arith.constant 0 : i32
    %c0_i32_1 = arith.constant 0 : i32
    return %c0_i32, %c0_i32_0 : i32, i32
  }
  func.func @transform_9(%arg0: i32, %arg1: i32) -> (i32, i32) {
    %c0_i32 = arith.constant 0 : i32
    %c0_i32_0 = arith.constant 0 : i32
    %c0_i32_1 = arith.constant 0 : i32
    return %c0_i32, %c0_i32_0 : i32, i32
  }
  func.func @transform_10(%arg0: i32, %arg1: i32) -> (i32, i32, i32, i32) {
    %c0_i32 = arith.constant 0 : i32
    %c0_i32_0 = arith.constant 0 : i32
    %c0_i32_1 = arith.constant 0 : i32
    return %arg0, %arg1, %c0_i32, %c0_i32_0 : i32, i32, i32, i32
  }
}

</mosaic_0001>

<llo_original>
// kernel: tpu_custom_call.1
$region0: #{tpu_custom_call.1}
  #allocation0 [shape = 'u32[]', space=smem, size = 0x4, offset = 0x4, fixed_abs, tag = 'smem constant byte address 0x4 - core index']
  #allocation1 [shape = 'u32[144,128]{1,0:T(1,128)}', space=vmem, size = 0x12000, scoped, tag = 'internal scratch']
  %s0 = inlined_call_operand.hbm [shape: bf16[2,16,16,128], index: 0, kind: input, shape index: {}]
  %s1 = inlined_call_operand.hbm [shape: bf16[128,256], index: 1, kind: input, shape index: {}]
  %s2 = inlined_call_operand.vmem [shape: f32[1,256], index: 2, kind: input, shape index: {}]
  %s3 = inlined_call_operand.vmem [shape: f32[1,256], index: 3, kind: input, shape index: {}]
  %s4 = inlined_call_operand.hbm [shape: bf16[3,3,128,128], index: 4, kind: input, shape index: {}]
  %s5 = inlined_call_operand.vmem [shape: f32[1,128], index: 5, kind: input, shape index: {}]
  %s6 = inlined_call_operand.vmem [shape: f32[1,128], index: 6, kind: input, shape index: {}]
  %s7 = inlined_call_operand.hbm [shape: bf16[128,128], index: 7, kind: input, shape index: {}]
  %s8 = inlined_call_operand.vmem [shape: f32[1,128], index: 8, kind: input, shape index: {}]
  %s9 = inlined_call_operand.vmem [shape: f32[1,128], index: 9, kind: input, shape index: {}]
  %s10 = inlined_call_operand.hbm [shape: f32[2,16,16,128], index: 10, kind: output, shape index: {}]
  %s11 = sld [smem:[#allocation0]]
  $region89: #{tpu_custom_call.1} parent=0
    _
  %s13 = ssub.s32 1, %s11
  %s14 = scalar_select 0, %s13, %s11
  $region1: #{tpu_custom_call.1} parent=0
    #allocation2 [shape = 'u8[131072]{0}', space=vmem, size = 0x20000, scoped, tag = 'input window, operand 0']
    #allocation3 [shape = 's32[2]{0}', space=sflag, size = 0x8, scoped, tag = 'scoped memory for tpu_custom_call.1']
    #allocation4 [shape = 's32[2]{0}', space=sflag, size = 0x8, scoped, tag = 'scoped memory for tpu_custom_call.1']
    #allocation5 [shape = 'u8[65536]{0}', space=vmem, size = 0x10000, scoped, tag = 'input window, operand 1, single buffered']
    #allocation6 [shape = 's32[1]{0}', space=sflag, size = 0x4, scoped, tag = 'scoped memory for tpu_custom_call.1']
    #allocation7 [shape = 'u8[294912]{0}', space=vmem, size = 0x48000, scoped, tag = 'input window, operand 4, single buffered']
    #allocation8 [shape = 'u8[32768]{0}', space=vmem, size = 0x8000, scoped, tag = 'input window, operand 7, single buffered']
    #allocation9 [shape = 's32[1]{0}', space=sflag, size = 0x4, scoped, tag = 'scoped memory for tpu_custom_call.1']
    #allocation10 [shape = 'u8[131072]{0}', space=vmem, size = 0x20000, scoped, tag = 'output window, operand 0']
    %15 = vsyncpa [#allocation3], 0
    %s16 = scalar_lea.sflag [#allocation3], 1
    %17 = vsyncpa %s16, 0
    %18 = vsyncpa [#allocation6], 0
    %19 = vsyncpa [#allocation9], 0
    %20 = vsyncpa [#allocation4], 0
    %s21 = scalar_lea.sflag [#allocation4], 1
    %22 = vsyncpa %s21, 0
    loop: start=0, step=1, limit=6
    $region2: #{tpu_custom_call.1} parent=1 // loop_pre_header
      _
    $region3: #{tpu_custom_call.1} parent=1 // loop_header
      %s24 = sphi 0, %s28
      %p25 = scmp.ge.s32.totalorder %s24, 6
      %s31 = sphi 0, %s43
      %s32 = sphi 0, %s39
      %s33 = sphi 0, %s31
      %s34 = sphi 0, %s32
      %s35 = sphi 0, %s33
      %s36 = sphi 0, %s34
      %s46 = sphi 0, %s48
      %s49 = sphi 0, %s46
      %s50 = sphi 0, %s49
      %s66 = sphi 0, %s50
      %s70 = sphi 0, %s70
      %s72 = sphi 0, %s70
      %s73 = sphi 0, %s72
      %s87 = sphi 0, %s73
      %s91 = sphi 0, %s91
      %s93 = sphi 0, %s91
      %s94 = sphi 0, %s93
      %s108 = sphi 0, %s94
      %s112 = sphi 0, %s112
      %s114 = sphi 0, %s112
      %s115 = sphi 0, %s114
      %s129 = sphi 0, %s115
      %s133 = sphi 0, %s133
      %s135 = sphi 0, %s133
      %s136 = sphi 0, %s135
      %s150 = sphi 0, %s136
      %s154 = sphi 0, %s154
      %s156 = sphi 0, %s154
      %s157 = sphi 0, %s156
      %s171 = sphi 0, %s157
      %s175 = sphi 0, %s175
      %s177 = sphi 0, %s175
      %s178 = sphi 0, %s177
      %s192 = sphi 0, %s178
      %s196 = sphi 0, %s196
      %s198 = sphi 0, %s196
      %s199 = sphi 0, %s198
      %s213 = sphi 0, %s199
      %s217 = sphi 0, %s217
      %s219 = sphi 0, %s217
      %s220 = sphi 0, %s219
      %s234 = sphi 0, %s220
      %s238 = sphi 0, %s238
      %s240 = sphi 0, %s238
      %s241 = sphi 0, %s240
      %s255 = sphi 0, %s241
      %s263 = sphi 0, %s265
      %s266 = sphi 0, %s263
      %s267 = sphi 0, %s266
      %s283 = sphi 0, %s267
    $region4: #{tpu_custom_call.1} parent=1 // loop_header_branch
      %27 = sbr.rel (%p25) target = $region8
    $region5: #{tpu_custom_call.1} parent=1 // loop_body
      %s29 = ssub.s32 %s24, 1
      %s30 = ssub.s32 %s24, 2
      %s37 = sadd.s32 1, %s32
      %p38 = scmp.ge.s32.totalorder %s37, 2
      %s39 = scalar_select %p38, 0, %s37
      %s40 = sadd.s32 1, %s31
      %s41 = scalar_select %p38, %s40, %s31
      %p42 = scmp.ge.s32.totalorder %s41, 2
      %s43 = scalar_select %p42, 0, %s41
      %s44 = ssub.s32 %s31, %s43
      %p45 = scmp.eq.s32.totalorder %s44, 0
      %s47 = sadd.s32 %s46, 1
      %s48 = scalar_select %p45, %s46, %s47
      %p51 = pneg %p45
      %p52 = scmp.eq.s32.totalorder %s24, 3
      %p53 = por %p51, %p52
      %p54 = scmp.ne.s32.totalorder %s46, %s49
      %p55 = scmp.eq.s32.totalorder %s24, 0
      %p56 = por %p54, %p55
      %p57 = scmp.ne.s32.totalorder %s46, %s49
      %p58 = scmp.eq.s32.totalorder %s29, 3
      %p59 = por %p57, %p58
      %p60 = scmp.ne.s32.totalorder %s49, %s50
      %p61 = scmp.eq.s32.totalorder %s29, 0
      %p62 = por %p60, %p61
      %p63 = scmp.ne.s32.totalorder %s49, %s50
      %p64 = scmp.eq.s32.totalorder %s30, 3
      %p65 = por %p63, %p64
      %p67 = scmp.ne.s32.totalorder %s50, %s66
      %p68 = scmp.eq.s32.totalorder %s30, 0
      %p69 = por %p67, %p68
      %s71 = sadd.s32 %s70, 1
      %p74 = scmp.eq.s32.totalorder %s24, 3
      %p75 = scmp.ne.s32.totalorder %s70, %s72
      %p76 = scmp.eq.s32.totalorder %s24, 0
      %p77 = por %p75, %p76
      %p78 = scmp.ne.s32.totalorder %s70, %s72
      %p79 = scmp.eq.s32.totalorder %s29, 3
      %p80 = por %p78, %p79
      %p81 = scmp.ne.s32.totalorder %s72, %s73
      %p82 = scmp.eq.s32.totalorder %s29, 0
      %p83 = por %p81, %p82
      %p84 = scmp.ne.s32.totalorder %s72, %s73
      %p85 = scmp.eq.s32.totalorder %s30, 3
      %p86 = por %p84, %p85
      %p88 = scmp.ne.s32.totalorder %s73, %s87
      %p89 = scmp.eq.s32.totalorder %s30, 0
      %p90 = por %p88, %p89
      %s92 = sadd.s32 %s91, 1
      %p95 = scmp.eq.s32.totalorder %s24, 3
      %p96 = scmp.ne.s32.totalorder %s91, %s93
      %p97 = scmp.eq.s32.totalorder %s24, 0
      %p98 = por %p96, %p97
      %p99 = scmp.ne.s32.totalorder %s91, %s93
      %p100 = scmp.eq.s32.totalorder %s29, 3
      %p101 = por %p99, %p100
      %p102 = scmp.ne.s32.totalorder %s93, %s94
      %p103 = scmp.eq.s32.totalorder %s29, 0
      %p104 = por %p102, %p103
      %p105 = scmp.ne.s32.totalorder %s93, %s94
      %p106 = scmp.eq.s32.totalorder %s30, 3
      %p107 = por %p105, %p106
      %p109 = scmp.ne.s32.totalorder %s94, %s108
      %p110 = scmp.eq.s32.totalorder %s30, 0
      %p111 = por %p109, %p110
      %s113 = sadd.s32 %s112, 1
      %p116 = scmp.eq.s32.totalorder %s24, 3
      %p117 = scmp.ne.s32.totalorder %s112, %s114
      %p118 = scmp.eq.s32.totalorder %s24, 0
      %p119 = por %p117, %p118
      %p120 = scmp.ne.s32.totalorder %s112, %s114
      %p121 = scmp.eq.s32.totalorder %s29, 3
      %p122 = por %p120, %p121
      %p123 = scmp.ne.s32.totalorder %s114, %s115
      %p124 = scmp.eq.s32.totalorder %s29, 0
      %p125 = por %p123, %p124
      %p126 = scmp.ne.s32.totalorder %s114, %s115
      %p127 = scmp.eq.s32.totalorder %s30, 3
      %p128 = por %p126, %p127
      %p130 = scmp.ne.s32.totalorder %s115, %s129
      %p131 = scmp.eq.s32.totalorder %s30, 0
      %p132 = por %p130, %p131
      %s134 = sadd.s32 %s133, 1
      %p137 = scmp.eq.s32.totalorder %s24, 3
      %p138 = scmp.ne.s32.totalorder %s133, %s135
      %p139 = scmp.eq.s32.totalorder %s24, 0
      %p140 = por %p138, %p139
      %p141 = scmp.ne.s32.totalorder %s133, %s135
      %p142 = scmp.eq.s32.totalorder %s29, 3
      %p143 = por %p141, %p142
      %p144 = scmp.ne.s32.totalorder %s135, %s136
      %p145 = scmp.eq.s32.totalorder %s29, 0
      %p146 = por %p144, %p145
      %p147 = scmp.ne.s32.totalorder %s135, %s136
      %p148 = scmp.eq.s32.totalorder %s30, 3
      %p149 = por %p147, %p148
      %p151 = scmp.ne.s32.totalorder %s136, %s150
      %p152 = scmp.eq.s32.totalorder %s30, 0
      %p153 = por %p151, %p152
      %s155 = sadd.s32 %s154, 1
      %p158 = scmp.eq.s32.totalorder %s24, 3
      %p159 = scmp.ne.s32.totalorder %s154, %s156
      %p160 = scmp.eq.s32.totalorder %s24, 0
      %p161 = por %p159, %p160
      %p162 = scmp.ne.s32.totalorder %s154, %s156
      %p163 = scmp.eq.s32.totalorder %s29, 3
      %p164 = por %p162, %p163
      %p165 = scmp.ne.s32.totalorder %s156, %s157
      %p166 = scmp.eq.s32.totalorder %s29, 0
      %p167 = por %p165, %p166
      %p168 = scmp.ne.s32.totalorder %s156, %s157
      %p169 = scmp.eq.s32.totalorder %s30, 3
      %p170 = por %p168, %p169
      %p172 = scmp.ne.s32.totalorder %s157, %s171
      %p173 = scmp.eq.s32.totalorder %s30, 0
      %p174 = por %p172, %p173
      %s176 = sadd.s32 %s175, 1
      %p179 = scmp.eq.s32.totalorder %s24, 3
      %p180 = scmp.ne.s32.totalorder %s175, %s177
      %p181 = scmp.eq.s32.totalorder %s24, 0
      %p182 = por %p180, %p181
      %p183 = scmp.ne.s32.totalorder %s175, %s177
      %p184 = scmp.eq.s32.totalorder %s29, 3
      %p185 = por %p183, %p184
      %p186 = scmp.ne.s32.totalorder %s177, %s178
      %p187 = scmp.eq.s32.totalorder %s29, 0
      %p188 = por %p186, %p187
      %p189 = scmp.ne.s32.totalorder %s177, %s178
      %p190 = scmp.eq.s32.totalorder %s30, 3
      %p191 = por %p189, %p190
      %p193 = scmp.ne.s32.totalorder %s178, %s192
      %p194 = scmp.eq.s32.totalorder %s30, 0
      %p195 = por %p193, %p194
      %s197 = sadd.s32 %s196, 1
      %p200 = scmp.eq.s32.totalorder %s24, 3
      %p201 = scmp.ne.s32.totalorder %s196, %s198
      %p202 = scmp.eq.s32.totalorder %s24, 0
      %p203 = por %p201, %p202
      %p204 = scmp.ne.s32.totalorder %s196, %s198
      %p205 = scmp.eq.s32.totalorder %s29, 3
      %p206 = por %p204, %p205
      %p207 = scmp.ne.s32.totalorder %s198, %s199
      %p208 = scmp.eq.s32.totalorder %s29, 0
      %p209 = por %p207, %p208
      %p210 = scmp.ne.s32.totalorder %s198, %s199
      %p211 = scmp.eq.s32.totalorder %s30, 3
      %p212 = por %p210, %p211
      %p214 = scmp.ne.s32.totalorder %s199, %s213
      %p215 = scmp.eq.s32.totalorder %s30, 0
      %p216 = por %p214, %p215
      %s218 = sadd.s32 %s217, 1
      %p221 = scmp.eq.s32.totalorder %s24, 3
      %p222 = scmp.ne.s32.totalorder %s217, %s219
      %p223 = scmp.eq.s32.totalorder %s24, 0
      %p224 = por %p222, %p223
      %p225 = scmp.ne.s32.totalorder %s217, %s219
      %p226 = scmp.eq.s32.totalorder %s29, 3
      %p227 = por %p225, %p226
      %p228 = scmp.ne.s32.totalorder %s219, %s220
      %p229 = scmp.eq.s32.totalorder %s29, 0
      %p230 = por %p228, %p229
      %p231 = scmp.ne.s32.totalorder %s219, %s220
      %p232 = scmp.eq.s32.totalorder %s30, 3
      %p233 = por %p231, %p232
      %p235 = scmp.ne.s32.totalorder %s220, %s234
      %p236 = scmp.eq.s32.totalorder %s30, 0
      %p237 = por %p235, %p236
      %s239 = sadd.s32 %s238, 1
      %p242 = scmp.eq.s32.totalorder %s24, 3
      %p243 = scmp.ne.s32.totalorder %s238, %s240
      %p244 = scmp.eq.s32.totalorder %s24, 0
      %p245 = por %p243, %p244
      %p246 = scmp.ne.s32.totalorder %s238, %s240
      %p247 = scmp.eq.s32.totalorder %s29, 3
      %p248 = por %p246, %p247
      %p249 = scmp.ne.s32.totalorder %s240, %s241
      %p250 = scmp.eq.s32.totalorder %s29, 0
      %p251 = por %p249, %p250
      %p252 = scmp.ne.s32.totalorder %s240, %s241
      %p253 = scmp.eq.s32.totalorder %s30, 3
      %p254 = por %p252, %p253
      %p256 = scmp.ne.s32.totalorder %s241, %s255
      %p257 = scmp.eq.s32.totalorder %s30, 0
      %p258 = por %p256, %p257
      %s259 = ssub.s32 %s31, %s43
      %s260 = ssub.s32 %s32, %s39
      %s261 = sor.u32 %s259, %s260
      %p262 = scmp.eq.s32.totalorder %s261, 0
      %s264 = sadd.s32 %s263, 1
      %s265 = scalar_select %p262, %s263, %s264
      %p268 = pneg %p262
      %p269 = scmp.eq.s32.totalorder %s24, 3
      %p270 = por %p268, %p269
      %p271 = scmp.ne.s32.totalorder %s263, %s266
      %p272 = scmp.eq.s32.totalorder %s24, 0
      %p273 = por %p271, %p272
      %p274 = scmp.ne.s32.totalorder %s263, %s266
      %p275 = scmp.eq.s32.totalorder %s29, 3
      %p276 = por %p274, %p275
      %p277 = scmp.ne.s32.totalorder %s266, %s267
      %p278 = scmp.eq.s32.totalorder %s29, 0
      %p279 = por %p277, %p278
      %p280 = scmp.ne.s32.totalorder %s266, %s267
      %p281 = scmp.eq.s32.totalorder %s30, 3
      %p282 = por %p280, %p281
      %p284 = scmp.ne.s32.totalorder %s267, %s283
      %p285 = scmp.eq.s32.totalorder %s30, 0
      %p286 = por %p284, %p285
      %p287 = scmp.le.s32.totalorder 1, %s24
      %p288 = scmp.lt.s32.totalorder %s24, 5
      %p289 = pnand %p287, %p288
      %p290 = pneg %p289
      // Predicated region
      $region9: #{tpu_custom_call.1} parent=5 // pred_check
        _
      $region10: #{tpu_custom_call.1} parent=5 // pred_check_branch
        %292 = sbr.rel (%p289) target = $region12
      $region11: #{tpu_custom_call.1} parent=5 // pred_region
        %s293 = ssub.s32 %s24, 1
        // Predicated region
        $region13: #{tpu_custom_call.1} parent=11 // pred_check
          %p294 = pneg %p83
        $region14: #{tpu_custom_call.1} parent=11 // pred_check_branch
          %296 = sbr.rel (%p294) target = $region16
        $region15: #{tpu_custom_call.1} parent=11 // pred_region
          %s298 = ssub.s32 2048, 2048
          %299 = vsyncadd [#allocation6], %s298
          %s300 = sshll.u32 [#allocation5], 4
          %s301 = int_to_ptr.vmem [resolvable:$true] %s300
          %306 = dma.hbm_to_vmem [thread:$0]  %s1, 2048, %s301, [#allocation6], 128, 128, 8
        $region16: #{tpu_custom_call.1} parent=11 // pred_fallthru
          _
        // Predicated region
        $region17: #{tpu_custom_call.1} parent=11 // pred_check
          %p307 = pneg %p104
        $region18: #{tpu_custom_call.1} parent=11 // pred_check_branch
          %309 = sbr.rel (%p307) target = $region20
        $region19: #{tpu_custom_call.1} parent=11 // pred_region
          _
        $region20: #{tpu_custom_call.1} parent=11 // pred_fallthru
          _
        // Predicated region
        $region21: #{tpu_custom_call.1} parent=11 // pred_check
          %p310 = pneg %p125
        $region22: #{tpu_custom_call.1} parent=11 // pred_check_branch
          %312 = sbr.rel (%p310) target = $region24
        $region23: #{tpu_custom_call.1} parent=11 // pred_region
          _
        $region24: #{tpu_custom_call.1} parent=11 // pred_fallthru
          _
        // Predicated region
        $region25: #{tpu_custom_call.1} parent=11 // pred_check
          %p313 = pneg %p146
        $region26: #{tpu_custom_call.1} parent=11 // pred_check_branch
          %315 = sbr.rel (%p313) target = $region28
        $region27: #{tpu_custom_call.1} parent=11 // pred_region
          %s317 = ssub.s32 9216, 9216
          %318 = vsyncadd [#allocation6], %s317
          %s319 = sshll.u32 [#allocation7], 4
          %s320 = int_to_ptr.vmem [resolvable:$true] %s319
          %325 = dma.hbm_to_vmem [thread:$0]  %s4, 9216, %s320, [#allocation6], 64, 64, 4
        $region28: #{tpu_custom_call.1} parent=11 // pred_fallthru
          _
        // Predicated region
        $region29: #{tpu_custom_call.1} parent=11 // pred_check
          %p326 = pneg %p167
        $region30: #{tpu_custom_call.1} parent=11 // pred_check_branch
          %328 = sbr.rel (%p326) target = $region32
        $region31: #{tpu_custom_call.1} parent=11 // pred_region
          _
        $region32: #{tpu_custom_call.1} parent=11 // pred_fallthru
          _
        // Predicated region
        $region33: #{tpu_custom_call.1} parent=11 // pred_check
          %p329 = pneg %p188
        $region34: #{tpu_custom_call.1} parent=11 // pred_check_branch
          %331 = sbr.rel (%p329) target = $region36
        $region35: #{tpu_custom_call.1} parent=11 // pred_region
          _
        $region36: #{tpu_custom_call.1} parent=11 // pred_fallthru
          _
        // Predicated region
        $region37: #{tpu_custom_call.1} parent=11 // pred_check
          %p332 = pneg %p209
        $region38: #{tpu_custom_call.1} parent=11 // pred_check_branch
          %334 = sbr.rel (%p332) target = $region40
        $region39: #{tpu_custom_call.1} parent=11 // pred_region
          %s336 = ssub.s32 1024, 1024
          %337 = vsyncadd [#allocation9], %s336
          %s338 = sshll.u32 [#allocation8], 4
          %s339 = int_to_ptr.vmem [resolvable:$true] %s338
          %344 = dma.hbm_to_vmem [thread:$0]  %s7, 1024, %s339, [#allocation9], 64, 64, 4
        $region40: #{tpu_custom_call.1} parent=11 // pred_fallthru
          _
        // Predicated region
        $region41: #{tpu_custom_call.1} parent=11 // pred_check
          %p345 = pneg %p230
        $region42: #{tpu_custom_call.1} parent=11 // pred_check_branch
          %347 = sbr.rel (%p345) target = $region44
        $region43: #{tpu_custom_call.1} parent=11 // pred_region
          _
        $region44: #{tpu_custom_call.1} parent=11 // pred_fallthru
          _
        // Predicated region
        $region45: #{tpu_custom_call.1} parent=11 // pred_check
          %p348 = pneg %p251
        $region46: #{tpu_custom_call.1} parent=11 // pred_check_branch
          %350 = sbr.rel (%p348) target = $region48
        $region47: #{tpu_custom_call.1} parent=11 // pred_region
          _
        $region48: #{tpu_custom_call.1} parent=11 // pred_fallthru
          _
      $region12: #{tpu_custom_call.1} parent=5 // pred_fallthru
        _
      %p351 = scmp.lt.s32.totalorder %s24, 4
      // Predicated region
      $region49: #{tpu_custom_call.1} parent=5 // pred_check
        %p352 = pneg %p351
      $region50: #{tpu_custom_call.1} parent=5 // pred_check_branch
        %354 = sbr.rel (%p352) target = $region52
      $region51: #{tpu_custom_call.1} parent=5 // pred_region
        // Predicated region
        $region53: #{tpu_custom_call.1} parent=51 // pred_check
          %p355 = pneg %p56
        $region54: #{tpu_custom_call.1} parent=51 // pred_check_branch
          %357 = sbr.rel (%p355) target = $region56
        $region55: #{tpu_custom_call.1} parent=51 // pred_region
          %s358 = sand.u32 %s46, 1
          %s359 = scalar_lea.sflag [#allocation3], %s358
          %s360 = sand.u32 %s46, 1
          %s361 = smul.addr %s360, 128
          %s362 = scalar_lea.vmem [#allocation2], %s361
          %s364 = ssub.s32 2048, 2048
          %365 = vsyncadd %s359, %s364
          %s366 = smul.addr %s31, 32
          %s367 = smul.addr %s366, 64
          %s368 = scalar_lea.hbm %s0, %s367
          %s369 = sshll.u32 %s362, 4
          %s370 = int_to_ptr.vmem [resolvable:$true] %s369
          %375 = dma.hbm_to_vmem [thread:$0]  %s368, 2048, %s370, %s359, 64, 64, 4
        $region56: #{tpu_custom_call.1} parent=51 // pred_fallthru
          _
      $region52: #{tpu_custom_call.1} parent=5 // pred_fallthru
        _
      %p376 = scmp.le.s32.totalorder 1, %s24
      %p377 = scmp.lt.s32.totalorder %s24, 5
      %p378 = pnand %p376, %p377
      %p379 = pneg %p378
      // Predicated region
      $region57: #{tpu_custom_call.1} parent=5 // pred_check
        _
      $region58: #{tpu_custom_call.1} parent=5 // pred_check_branch
        %381 = sbr.rel (%p378) target = $region60
      $region59: #{tpu_custom_call.1} parent=5 // pred_region
        %s382 = ssub.s32 %s24, 1
        %s383 = sand.u32 %s49, 1
        %s384 = scalar_lea.sflag [#allocation3], %s383
        %s385 = sand.u32 %s49, 1
        %s386 = smul.addr %s385, 128
        %s387 = scalar_lea.vmem [#allocation2], %s386
        // Predicated region
        $region61: #{tpu_custom_call.1} parent=59 // pred_check
          %p388 = pneg %p62
        $region62: #{tpu_custom_call.1} parent=59 // pred_check_branch
          %390 = sbr.rel (%p388) target = $region64
        $region63: #{tpu_custom_call.1} parent=59 // pred_region
          %391 = dma.done %s384, 2048
        $region64: #{tpu_custom_call.1} parent=59 // pred_fallthru
          _
        // Predicated region
        $region65: #{tpu_custom_call.1} parent=59 // pred_check
          %p392 = pneg %p83
        $region66: #{tpu_custom_call.1} parent=59 // pred_check_branch
          %394 = sbr.rel (%p392) target = $region68
        $region67: #{tpu_custom_call.1} parent=59 // pred_region
          %395 = dma.done [#allocation6], 2048
        $region68: #{tpu_custom_call.1} parent=59 // pred_fallthru
          _
        // Predicated region
        $region69: #{tpu_custom_call.1} parent=59 // pred_check
          %p396 = pneg %p146
        $region70: #{tpu_custom_call.1} parent=59 // pred_check_branch
          %398 = sbr.rel (%p396) target = $region72
        $region71: #{tpu_custom_call.1} parent=59 // pred_region
          %399 = dma.done [#allocation6], 9216
        $region72: #{tpu_custom_call.1} parent=59 // pred_fallthru
          _
        // Predicated region
        $region73: #{tpu_custom_call.1} parent=59 // pred_check
          %p400 = pneg %p209
        $region74: #{tpu_custom_call.1} parent=59 // pred_check_branch
          %402 = sbr.rel (%p400) target = $region76
        $region75: #{tpu_custom_call.1} parent=59 // pred_region
          %403 = dma.done [#allocation9], 1024
        $region76: #{tpu_custom_call.1} parent=59 // pred_fallthru
          _
        %s404 = sand.u32 %s49, 1
        %s405 = scalar_lea.sflag [#allocation3], %s404
        %s406 = sand.u32 %s49, 1
        %s407 = smul.addr %s406, 128
        %s408 = scalar_lea.vmem [#allocation2], %s407
        %p409 = pneg %p62
        %p410 = pneg %p59
        %p411 = pneg %p83
        %p412 = pneg %p80
        %p413 = pneg %p104
        %p414 = pneg %p101
        %p415 = pneg %p125
        %p416 = pneg %p122
        %p417 = pneg %p146
        %p418 = pneg %p143
        %p419 = pneg %p167
        %p420 = pneg %p164
        %p421 = pneg %p188
        %p422 = pneg %p185
        %p423 = pneg %p209
        %p424 = pneg %p206
        %p425 = pneg %p230
        %p426 = pneg %p227
        %p427 = pneg %p251
        %p428 = pneg %p248
        %p429 = pneg %p279
        %p430 = pneg %p276
        %s431 = sand.u32 %s266, 1
        %s432 = scalar_lea.sflag [#allocation4], %s431
        %s433 = sand.u32 %s266, 1
        %s434 = smul.addr %s433, 128
        %s435 = scalar_lea.vmem [#allocation10], %s434
        %s436 = smul.u32 8, %s34
        %s438 = smul.u32 %s34, 8
        %s439 = ssub.s32 %s438, 1
        %p440 = scmp.gt.s32.totalorder %s439, 0
        %s441 = scalar_select %p440, %s439, 0
        %s442 = sadd.s32 %s438, 8
        %p443 = scmp.lt.s32.totalorder %s442, 15
        %s444 = scalar_select %p443, %s442, 15
        %s445 = smul.u32 %s441, 2
        %s446 = smul.addr %s445, 4
        %s447 = scalar_lea.vmem %s387, %s446 [#allocation2]
        %v448 = vld [vmem:[%s447] sm:$0xf]
        %v449 = vld [vmem:[%s447 + $0x4] sm:$0xf]
        %s450 = smul.u32 %s438, 2
        %s451 = smul.addr %s450, 4
        %s452 = scalar_lea.vmem %s387, %s451 [#allocation2]
        %v453 = vld [vmem:[%s452] sm:$0xf]
        %v454 = vld [vmem:[%s452 + $0x4] sm:$0xf]
        %v455 = vld [vmem:[%s452 + $0x8] sm:$0xf]
        %v456 = vld [vmem:[%s452 + $0xc] sm:$0xf]
        %v457 = vld [vmem:[%s452 + $0x10] sm:$0xf]
        %v458 = vld [vmem:[%s452 + $0x14] sm:$0xf]
        %v459 = vld [vmem:[%s452 + $0x18] sm:$0xf]
        %v460 = vld [vmem:[%s452 + $0x1c] sm:$0xf]
        %v461 = vld [vmem:[%s452 + $0x20] sm:$0xf]
        %v462 = vld [vmem:[%s452 + $0x24] sm:$0xf]
        %v463 = vld [vmem:[%s452 + $0x28] sm:$0xf]
        %v464 = vld [vmem:[%s452 + $0x2c] sm:$0xf]
        %v465 = vld [vmem:[%s452 + $0x30] sm:$0xf]
        %v466 = vld [vmem:[%s452 + $0x34] sm:$0xf]
        %v467 = vld [vmem:[%s452 + $0x38] sm:$0xf]
        %v468 = vld [vmem:[%s452 + $0x3c] sm:$0xf]
        %s469 = smul.u32 %s444, 2
        %s470 = smul.addr %s469, 4
        %s471 = scalar_lea.vmem %s387, %s470 [#allocation2]
        %v472 = vld [vmem:[%s471] sm:$0xf]
        %v473 = vld [vmem:[%s471 + $0x4] sm:$0xf]
        %v474 = vld [vmem:[#allocation5] sm:$0xff]
        %v475 = vld [vmem:[#allocation5 + $0x8] sm:$0xff]
        %v476 = vld [vmem:[#allocation5 + $0x10] sm:$0xff]
        %v477 = vld [vmem:[#allocation5 + $0x18] sm:$0xff]
        %v478 = vld [vmem:[#allocation5 + $0x20] sm:$0xff]
        %v479 = vld [vmem:[#allocation5 + $0x28] sm:$0xff]
        %v480 = vld [vmem:[#allocation5 + $0x30] sm:$0xff]
        %v481 = vld [vmem:[#allocation5 + $0x38] sm:$0xff]
        %v482 = vld [vmem:[#allocation5 + $0x40] sm:$0xff]
        %v483 = vld [vmem:[#allocation5 + $0x48] sm:$0xff]
        %v484 = vld [vmem:[#allocation5 + $0x50] sm:$0xff]
        %v485 = vld [vmem:[#allocation5 + $0x58] sm:$0xff]
        %v486 = vld [vmem:[#allocation5 + $0x60] sm:$0xff]
        %v487 = vld [vmem:[#allocation5 + $0x68] sm:$0xff]
        %v488 = vld [vmem:[#allocation5 + $0x70] sm:$0xff]
        %v489 = vld [vmem:[#allocation5 + $0x78] sm:$0xff]
        %v510 = vunpack.c.l.b16 %v448
        %v511 = vunpack.c.l.b16 %v449
        %v512 = vunpack.c.l.b16 %v453
        %v513 = vunpack.c.l.b16 %v454
        %v514 = vunpack.c.l.b16 %v455
        %v515 = vunpack.c.l.b16 %v456
        %v516 = vunpack.c.l.b16 %v457
        %v517 = vunpack.c.l.b16 %v458
        %v518 = vunpack.c.l.b16 %v459
        %v519 = vunpack.c.l.b16 %v460
        %v520 = vunpack.c.l.b16 %v461
        %v521 = vunpack.c.l.b16 %v462
        %v522 = vunpack.c.l.b16 %v463
        %v523 = vunpack.c.l.b16 %v464
        %v524 = vunpack.c.l.b16 %v465
        %v525 = vunpack.c.l.b16 %v466
        %v526 = vunpack.c.l.b16 %v467
        %v527 = vunpack.c.l.b16 %v468
        %v528 = vunpack.c.l.b16 %v472
        %v529 = vunpack.c.l.b16 %v473
        %v530 = vpack.c.b16 %v511, %v510
        %v531 = vpack.c.b16 %v513, %v512
        %v532 = vpack.c.b16 %v515, %v514
        %v533 = vpack.c.b16 %v517, %v516
        %v534 = vpack.c.b16 %v519, %v518
        %v535 = vpack.c.b16 %v521, %v520
        %v536 = vpack.c.b16 %v523, %v522
        %v537 = vpack.c.b16 %v525, %v524
        %v538 = vpack.c.b16 %v527, %v526
        %v539 = vpack.c.b16 %v529, %v528
        %v566 = vunpack.c.l.b16 %v474
        %v567 = vunpack.c.h.b16 %v474
        %v568 = vunpack.c.l.b16 %v475
        %v569 = vunpack.c.h.b16 %v475
        %v570 = vunpack.c.l.b16 %v476
        %v571 = vunpack.c.h.b16 %v476
        %v572 = vunpack.c.l.b16 %v477
        %v573 = vunpack.c.h.b16 %v477
        %v574 = vunpack.c.l.b16 %v478
        %v575 = vunpack.c.h.b16 %v478
        %v576 = vunpack.c.l.b16 %v479
        %v577 = vunpack.c.h.b16 %v479
        %v578 = vunpack.c.l.b16 %v480
        %v579 = vunpack.c.h.b16 %v480
        %v580 = vunpack.c.l.b16 %v481
        %v581 = vunpack.c.h.b16 %v481
        %v582 = vunpack.c.l.b16 %v482
        %v583 = vunpack.c.h.b16 %v482
        %v584 = vunpack.c.l.b16 %v483
        %v585 = vunpack.c.h.b16 %v483
        %v586 = vunpack.c.l.b16 %v484
        %v587 = vunpack.c.h.b16 %v484
        %v588 = vunpack.c.l.b16 %v485
        %v589 = vunpack.c.h.b16 %v485
        %v590 = vunpack.c.l.b16 %v486
        %v591 = vunpack.c.h.b16 %v486
        %v592 = vunpack.c.l.b16 %v487
        %v593 = vunpack.c.h.b16 %v487
        %v594 = vunpack.c.l.b16 %v488
        %v595 = vunpack.c.h.b16 %v488
        %v596 = vunpack.c.l.b16 %v489
        %v597 = vunpack.c.h.b16 %v489
        %v598 = vpack.c.b16 %v568, %v566
        %v599 = vpack.c.b16 %v569, %v567
        %v600 = vpack.c.b16 %v572, %v570
        %v601 = vpack.c.b16 %v573, %v571
        %v602 = vpack.c.b16 %v576, %v574
        %v603 = vpack.c.b16 %v577, %v575
        %v604 = vpack.c.b16 %v580, %v578
        %v605 = vpack.c.b16 %v581, %v579
        %v606 = vpack.c.b16 %v584, %v582
        %v607 = vpack.c.b16 %v585, %v583
        %v608 = vpack.c.b16 %v588, %v586
        %v609 = vpack.c.b16 %v589, %v587
        %v610 = vpack.c.b16 %v592, %v590
        %v611 = vpack.c.b16 %v593, %v591
        %v612 = vpack.c.b16 %v596, %v594
        %v613 = vpack.c.b16 %v597, %v595
        %630 = vmatprep.subr.bf16.mxu0 %v599
        %631 = vmatpush1.bf16.msra.mxu0 %v598
        %632 = vmatprep.subr.bf16.mxu0 %v601
        %633 = vmatpush1.bf16.msra.mxu0 %v600
        %634 = vmatprep.subr.bf16.mxu0 %v603
        %635 = vmatpush1.bf16.msra.mxu0 %v602
        %636 = vmatprep.subr.bf16.mxu0 %v605
        %637 = vmatpush1.bf16.msra.mxu0 %v604
        %638 = vmatprep.subr.bf16.mxu0 %v607
        %639 = vmatpush1.bf16.msra.mxu0 %v606
        %640 = vmatprep.subr.bf16.mxu0 %v609
        %641 = vmatpush1.bf16.msra.mxu0 %v608
        %642 = vmatprep.subr.bf16.mxu0 %v611
        %643 = vmatpush1.bf16.msra.mxu0 %v610
        %644 = vmatprep.subr.bf16.mxu0 %v613
        %645 = vmatpush1.bf16.msra.mxu0 %v612
        %646 = vmatprep.subr.bf16.mxu0 0
        %647 = vmatpush1.bf16.msra.mxu0 0
        %648 = vmatprep.subr.bf16.mxu0 0
        %649 = vmatpush1.bf16.msra.mxu0 0
        %650 = vmatprep.subr.bf16.mxu0 0
        %651 = vmatpush1.bf16.msra.mxu0 0
        %652 = vmatprep.subr.bf16.mxu0 0
        %653 = vmatpush1.bf16.msra.mxu0 0
        %654 = vmatprep.subr.bf16.mxu0 0
        %655 = vmatpush1.bf16.msra.mxu0 0
        %656 = vmatprep.subr.bf16.mxu0 0
        %657 = vmatpush1.bf16.msra.mxu0 0
        %658 = vmatprep.subr.bf16.mxu0 0
        %659 = vmatpush1.bf16.msra.mxu0 0
        %660 = vmatprep.subr.bf16.mxu0 0
        %661 = vmatpush1.bf16.msra.mxu0 0
        %662 = vmatprep.mubr.bf16.mxu0 0
        %663 = vmatmul.mubr.bf16.gmra.mrb[0].mxu0 %v530
        %v664 = vpop.f32.mrb[0].mxu0
        %v665 = vadd.f32 0.0, %v664
        %v666 = vpop.f32.mrb[0].mxu0
        %v667 = vpop.f32.mrb[0].mxu0
        %v668 = vadd.f32 0.0, %v667
        %v669 = vpop.f32.mrb[0].mxu0
        %670 = vmatprep.mubr.bf16.mxu0 0
        %671 = vmatmul.mubr.bf16.gmra.mrb[0].mxu0 %v531
        %v672 = vpop.f32.mrb[0].mxu0
        %v673 = vadd.f32 0.0, %v672
        %v674 = vpop.f32.mrb[0].mxu0
        %v675 = vadd.f32 0.0, %v674
        %v676 = vpop.f32.mrb[0].mxu0
        %v677 = vadd.f32 0.0, %v676
        %v678 = vpop.f32.mrb[0].mxu0
        %v679 = vadd.f32 0.0, %v678
        %680 = vmatprep.mubr.bf16.mxu0 0
        %681 = vmatmul.mubr.bf16.gmra.mrb[0].mxu0 %v532
        %v682 = vpop.f32.mrb[0].mxu0
        %v683 = vadd.f32 0.0, %v682
        %v684 = vpop.f32.mrb[0].mxu0
        %v685 = vadd.f32 0.0, %v684
        %v686 = vpop.f32.mrb[0].mxu0
        %v687 = vadd.f32 0.0, %v686
        %v688 = vpop.f32.mrb[0].mxu0
        %v689 = vadd.f32 0.0, %v688
        %690 = vmatprep.mubr.bf16.mxu0 0
        %691 = vmatmul.mubr.bf16.gmra.mrb[0].mxu0 %v533
        %v692 = vpop.f32.mrb[0].mxu0
        %v693 = vadd.f32 0.0, %v692
        %v694 = vpop.f32.mrb[0].mxu0
        %v695 = vadd.f32 0.0, %v694
        %v696 = vpop.f32.mrb[0].mxu0
        %v697 = vadd.f32 0.0, %v696
        %v698 = vpop.f32.mrb[0].mxu0
        %v699 = vadd.f32 0.0, %v698
        %700 = vmatprep.mubr.bf16.mxu0 0
        %701 = vmatmul.mubr.bf16.gmra.mrb[0].mxu0 %v534
        %v702 = vpop.f32.mrb[0].mxu0
        %v703 = vadd.f32 0.0, %v702
        %v704 = vpop.f32.mrb[0].mxu0
        %v705 = vadd.f32 0.0, %v704
        %v706 = vpop.f32.mrb[0].mxu0
        %v707 = vadd.f32 0.0, %v706
        %v708 = vpop.f32.mrb[0].mxu0
        %v709 = vadd.f32 0.0, %v708
        %710 = vmatprep.mubr.bf16.mxu0 0
        %711 = vmatmul.mubr.bf16.gmra.mrb[0].mxu0 %v535
        %v712 = vpop.f32.mrb[0].mxu0
        %v713 = vadd.f32 0.0, %v712
        %v714 = vpop.f32.mrb[0].mxu0
        %v715 = vadd.f32 0.0, %v714
        %v716 = vpop.f32.mrb[0].mxu0
        %v717 = vadd.f32 0.0, %v716
        %v718 = vpop.f32.mrb[0].mxu0
        %v719 = vadd.f32 0.0, %v718
        %720 = vmatprep.mubr.bf16.mxu0 0
        %721 = vmatmul.mubr.bf16.gmra.mrb[0].mxu0 %v536
        %v722 = vpop.f32.mrb[0].mxu0
        %v723 = vadd.f32 0.0, %v722
        %v724 = vpop.f32.mrb[0].mxu0
        %v725 = vadd.f32 0.0, %v724
        %v726 = vpop.f32.mrb[0].mxu0
        %v727 = vadd.f32 0.0, %v726
        %v728 = vpop.f32.mrb[0].mxu0
        %v729 = vadd.f32 0.0, %v728
        %730 = vmatprep.mubr.bf16.mxu0 0
        %731 = vmatmul.mubr.bf16.gmra.mrb[0].mxu0 %v537
        %v732 = vpop.f32.mrb[0].mxu0
        %v733 = vadd.f32 0.0, %v732
        %v734 = vpop.f32.mrb[0].mxu0
        %v735 = vadd.f32 0.0, %v734
        %v736 = vpop.f32.mrb[0].mxu0
        %v737 = vadd.f32 0.0, %v736
        %v738 = vpop.f32.mrb[0].mxu0
        %v739 = vadd.f32 0.0, %v738
        %740 = vmatprep.mubr.bf16.mxu0 0
        %741 = vmatmul.mubr.bf16.gmra.mrb[0].mxu0 %v538
        %v742 = vpop.f32.mrb[0].mxu0
        %v743 = vadd.f32 0.0, %v742
        %v744 = vpop.f32.mrb[0].mxu0
        %v745 = vadd.f32 0.0, %v744
        %v746 = vpop.f32.mrb[0].mxu0
        %v747 = vadd.f32 0.0, %v746
        %v748 = vpop.f32.mrb[0].mxu0
        %v749 = vadd.f32 0.0, %v748
        %750 = vmatprep.mubr.bf16.mxu0 0
        %751 = vmatmul.mubr.bf16.gmra.mrb[0].mxu0 %v539
        %v752 = vpop.f32.mrb[0].mxu0
        %v753 = vadd.f32 0.0, %v752
        %v754 = vpop.f32.mrb[0].mxu0
        %v755 = vpop.f32.mrb[0].mxu0
        %v756 = vadd.f32 0.0, %v755
        %v757 = vpop.f32.mrb[0].mxu0
        %758 = vdwg.mxu0
        %v759 = vld [vmem:[%s2] sm:$0x3]
        %v761 = vlaneseq
        %v762 = vshrl.u32 %v761, 7
        %v763 = vsub.s32 0, %v762
        %v764 = vrot.slane %v759, %v763
        %v765 = vlaneseq
        %v766 = vshrl.u32 %v765, 7
        %v767 = vsub.s32 1, %v766
        %v768 = vrot.slane %v759, %v767
        %v771 = vmul.f32 %v665, %v764
        %v772 = vmul.f32 %v668, %v764
        %v773 = vmul.f32 %v673, %v764
        %v774 = vmul.f32 %v675, %v768
        %v775 = vmul.f32 %v677, %v764
        %v776 = vmul.f32 %v679, %v768
        %v777 = vmul.f32 %v683, %v764
        %v778 = vmul.f32 %v685, %v768
        %v779 = vmul.f32 %v687, %v764
        %v780 = vmul.f32 %v689, %v768
        %v781 = vmul.f32 %v693, %v764
        %v782 = vmul.f32 %v695, %v768
        %v783 = vmul.f32 %v697, %v764
        %v784 = vmul.f32 %v699, %v768
        %v785 = vmul.f32 %v703, %v764
        %v786 = vmul.f32 %v705, %v768
        %v787 = vmul.f32 %v707, %v764
        %v788 = vmul.f32 %v709, %v768
        %v789 = vmul.f32 %v713, %v764
        %v790 = vmul.f32 %v715, %v768
        %v791 = vmul.f32 %v717, %v764
        %v792 = vmul.f32 %v719, %v768
        %v793 = vmul.f32 %v723, %v764
        %v794 = vmul.f32 %v725, %v768
        %v795 = vmul.f32 %v727, %v764
        %v796 = vmul.f32 %v729, %v768
        %v797 = vmul.f32 %v733, %v764
        %v798 = vmul.f32 %v735, %v768
        %v799 = vmul.f32 %v737, %v764
        %v800 = vmul.f32 %v739, %v768
        %v801 = vmul.f32 %v743, %v764
        %v802 = vmul.f32 %v745, %v768
        %v803 = vmul.f32 %v747, %v764
        %v804 = vmul.f32 %v749, %v768
        %v805 = vmul.f32 %v753, %v764
        %v806 = vmul.f32 %v756, %v764
        %v807 = vld [vmem:[%s3] sm:$0x3]
        %v809 = vlaneseq
        %v810 = vshrl.u32 %v809, 7
        %v811 = vsub.s32 0, %v810
        %v812 = vrot.slane %v807, %v811
        %v813 = vlaneseq
        %v814 = vshrl.u32 %v813, 7
        %v815 = vsub.s32 1, %v814
        %v816 = vrot.slane %v807, %v815
        %v819 = vadd.f32 %v771, %v812
        %v820 = vadd.f32 %v772, %v812
        %v821 = vadd.f32 %v773, %v812
        %v822 = vadd.f32 %v774, %v816
        %v823 = vadd.f32 %v775, %v812
        %v824 = vadd.f32 %v776, %v816
        %v825 = vadd.f32 %v777, %v812
        %v826 = vadd.f32 %v778, %v816
        %v827 = vadd.f32 %v779, %v812
        %v828 = vadd.f32 %v780, %v816
        %v829 = vadd.f32 %v781, %v812
        %v830 = vadd.f32 %v782, %v816
        %v831 = vadd.f32 %v783, %v812
        %v832 = vadd.f32 %v784, %v816
        %v833 = vadd.f32 %v785, %v812
        %v834 = vadd.f32 %v786, %v816
        %v835 = vadd.f32 %v787, %v812
        %v836 = vadd.f32 %v788, %v816
        %v837 = vadd.f32 %v789, %v812
        %v838 = vadd.f32 %v790, %v816
        %v839 = vadd.f32 %v791, %v812
        %v840 = vadd.f32 %v792, %v816
        %v841 = vadd.f32 %v793, %v812
        %v842 = vadd.f32 %v794, %v816
        %v843 = vadd.f32 %v795, %v812
        %v844 = vadd.f32 %v796, %v816
        %v845 = vadd.f32 %v797, %v812
        %v846 = vadd.f32 %v798, %v816
        %v847 = vadd.f32 %v799, %v812
        %v848 = vadd.f32 %v800, %v816
        %v849 = vadd.f32 %v801, %v812
        %v850 = vadd.f32 %v802, %v816
        %v851 = vadd.f32 %v803, %v812
        %v852 = vadd.f32 %v804, %v816
        %v853 = vadd.f32 %v805, %v812
        %v854 = vadd.f32 %v806, %v812
        %v855 = vmax.f32 %v819, 0.0
        %v856 = vmax.f32 %v820, 0.0
        %v857 = vmax.f32 %v821, 0.0
        %v858 = vmax.f32 %v823, 0.0
        %v859 = vmax.f32 %v825, 0.0
        %v860 = vmax.f32 %v827, 0.0
        %v861 = vmax.f32 %v829, 0.0
        %v862 = vmax.f32 %v831, 0.0
        %v863 = vmax.f32 %v833, 0.0
        %v864 = vmax.f32 %v835, 0.0
        %v865 = vmax.f32 %v837, 0.0
        %v866 = vmax.f32 %v839, 0.0
        %v867 = vmax.f32 %v841, 0.0
        %v868 = vmax.f32 %v843, 0.0
        %v869 = vmax.f32 %v845, 0.0
        %v870 = vmax.f32 %v847, 0.0
        %v871 = vmax.f32 %v849, 0.0
        %v872 = vmax.f32 %v851, 0.0
        %v873 = vmax.f32 %v853, 0.0
        %v874 = vmax.f32 %v854, 0.0
        %p875 = scmp.gt.s32.totalorder %s34, 0
        %s876 = scalar_select %p875, 1, 0
        %v877 = vstv %s876
        %vm878 = vcmp.eq.s32.totalorder %v877, 1
        %p879 = scmp.lt.s32.totalorder %s34, 1
        %s880 = scalar_select %p879, 1, 0
        %v881 = vstv %s880
        %vm882 = vcmp.eq.s32.totalorder %v881, 1
        %v883 = vsel %vm878, 1, 0
        %v884 = vsel %vm882, 1, 0
        %vm885 = vcmp.eq.s32.totalorder %v883, 1
        %vm886 = vcmp.eq.s32.totalorder %v884, 1
        %v887 = vsel %vm885, %v855, 0.0
        %v888 = vsel %vm885, %v856, 0.0
        %v889 = vsel 1, %v857, 0.0
        %v890 = vsel 1, %v858, 0.0
        %v891 = vsel 1, %v859, 0.0
        %v892 = vsel 1, %v860, 0.0
        %v893 = vsel 1, %v861, 0.0
        %v894 = vsel 1, %v862, 0.0
        %v895 = vsel 1, %v863, 0.0
        %v896 = vsel 1, %v864, 0.0
        %v897 = vsel 1, %v865, 0.0
        %v898 = vsel 1, %v866, 0.0
        %v899 = vsel 1, %v867, 0.0
        %v900 = vsel 1, %v868, 0.0
        %v901 = vsel 1, %v869, 0.0
        %v902 = vsel 1, %v870, 0.0
        %v903 = vsel 1, %v871, 0.0
        %v904 = vsel 1, %v872, 0.0
        %v905 = vsel %vm886, %v873, 0.0
        %v906 = vsel %vm886, %v874, 0.0
        %v907 = vpack.c.bf16 %v888, %v887
        %v908 = vpack.c.bf16 %v890, %v889
        %v909 = vpack.c.bf16 %v892, %v891
        %v910 = vpack.c.bf16 %v894, %v893
        %v911 = vpack.c.bf16 %v896, %v895
        %v912 = vpack.c.bf16 %v898, %v897
        %v913 = vpack.c.bf16 %v900, %v899
        %v914 = vpack.c.bf16 %v902, %v901
        %v915 = vpack.c.bf16 %v904, %v903
        %v916 = vpack.c.bf16 %v906, %v905
        %v918 = vshrl.u32 %v907, 16
        %v920 = vrot.slane %v918, 7
        %v921 = vshll.u32 %v907, 16
        %v923 = vor.u32 %v920, %v921
        %v925 = vshrl.u32 %v908, 16
        %v927 = vrot.slane %v925, 7
        %v928 = vshll.u32 %v908, 16
        %v930 = vor.u32 %v927, %v928
        %v932 = vshrl.u32 %v909, 16
        %v934 = vrot.slane %v932, 7
        %v935 = vshll.u32 %v909, 16
        %v937 = vor.u32 %v934, %v935
        %v939 = vshrl.u32 %v910, 16
        %v941 = vrot.slane %v939, 7
        %v942 = vshll.u32 %v910, 16
        %v944 = vor.u32 %v941, %v942
        %v946 = vshrl.u32 %v911, 16
        %v948 = vrot.slane %v946, 7
        %v949 = vshll.u32 %v911, 16
        %v951 = vor.u32 %v948, %v949
        %v953 = vshrl.u32 %v912, 16
        %v955 = vrot.slane %v953, 7
        %v956 = vshll.u32 %v912, 16
        %v958 = vor.u32 %v955, %v956
        %v960 = vshrl.u32 %v913, 16
        %v962 = vrot.slane %v960, 7
        %v963 = vshll.u32 %v913, 16
        %v965 = vor.u32 %v962, %v963
        %v967 = vshrl.u32 %v914, 16
        %v969 = vrot.slane %v967, 7
        %v970 = vshll.u32 %v914, 16
        %v972 = vor.u32 %v969, %v970
        %v974 = vshrl.u32 %v915, 16
        %v976 = vrot.slane %v974, 7
        %v977 = vshll.u32 %v915, 16
        %v979 = vor.u32 %v976, %v977
        %v981 = vshrl.u32 %v916, 16
        %v983 = vrot.slane %v981, 7
        %v984 = vshll.u32 %v916, 16
        %v986 = vor.u32 %v983, %v984
        %vm997 = vcmask 1040384
        %vm998 = vsmask.f32 256
        %vm999 = vmand %vm997, %vm998
        %v1000 = vsel %vm999, 0, %v923
        %v1001 = vsel %vm999, 0, %v930
        %v1002 = vsel %vm999, 0, %v937
        %v1003 = vsel %vm999, 0, %v944
        %v1004 = vsel %vm999, 0, %v951
        %v1005 = vsel %vm999, 0, %v958
        %v1006 = vsel %vm999, 0, %v965
        %v1007 = vsel %vm999, 0, %v972
        %v1008 = vsel %vm999, 0, %v979
        %v1009 = vsel %vm999, 0, %v986
        %v1010 = vrot.slane %v921, 1
        %v1011 = vor.u32 %v918, %v1010
        %v1012 = vrot.slane %v928, 1
        %v1013 = vor.u32 %v925, %v1012
        %v1014 = vrot.slane %v935, 1
        %v1015 = vor.u32 %v932, %v1014
        %v1016 = vrot.slane %v942, 1
        %v1017 = vor.u32 %v939, %v1016
        %v1018 = vrot.slane %v949, 1
        %v1019 = vor.u32 %v946, %v1018
        %v1020 = vrot.slane %v956, 1
        %v1021 = vor.u32 %v953, %v1020
        %v1022 = vrot.slane %v963, 1
        %v1023 = vor.u32 %v960, %v1022
        %v1024 = vrot.slane %v970, 1
        %v1025 = vor.u32 %v967, %v1024
        %v1026 = vrot.slane %v977, 1
        %v1027 = vor.u32 %v974, %v1026
        %v1028 = vrot.slane %v984, 1
        %v1029 = vor.u32 %v981, %v1028
        %vm1040 = vcmask 1047552
        %vm1041 = vsmask.f32 7424
        %vm1042 = vmand %vm1040, %vm1041
        %v1043 = vsel %vm1042, %v1011, 0
        %v1044 = vsel %vm1042, %v1013, 0
        %v1045 = vsel %vm1042, %v1015, 0
        %v1046 = vsel %vm1042, %v1017, 0
        %v1047 = vsel %vm1042, %v1019, 0
        %v1048 = vsel %vm1042, %v1021, 0
        %v1049 = vsel %vm1042, %v1023, 0
        %v1050 = vsel %vm1042, %v1025, 0
        %v1051 = vsel %vm1042, %v1027, 0
        %v1052 = vsel %vm1042, %v1029, 0
        %v1053 = vld [vmem:[#allocation7] sm:$0xf]
        %v1054 = vld [vmem:[#allocation7 + $0x4] sm:$0xf]
        %v1055 = vld [vmem:[#allocation7 + $0x8] sm:$0xf]
        %v1056 = vld [vmem:[#allocation7 + $0xc] sm:$0xf]
        %v1057 = vld [vmem:[#allocation7 + $0x10] sm:$0xf]
        %v1058 = vld [vmem:[#allocation7 + $0x14] sm:$0xf]
        %v1059 = vld [vmem:[#allocation7 + $0x18] sm:$0xf]
        %v1060 = vld [vmem:[#allocation7 + $0x1c] sm:$0xf]
        %v1061 = vld [vmem:[#allocation7 + $0x20] sm:$0xf]
        %v1062 = vld [vmem:[#allocation7 + $0x24] sm:$0xf]
        %v1063 = vld [vmem:[#allocation7 + $0x28] sm:$0xf]
        %v1064 = vld [vmem:[#allocation7 + $0x2c] sm:$0xf]
        %v1065 = vld [vmem:[#allocation7 + $0x30] sm:$0xf]
        %v1066 = vld [vmem:[#allocation7 + $0x34] sm:$0xf]
        %v1067 = vld [vmem:[#allocation7 + $0x38] sm:$0xf]
        %v1068 = vld [vmem:[#allocation7 + $0x3c] sm:$0xf]
        %s1069 = scalar_lea.vmem [#allocation7], 64
        %v1070 = vld [vmem:[%s1069] sm:$0xf]
        %v1071 = vld [vmem:[%s1069 + $0x4] sm:$0xf]
        %v1072 = vld [vmem:[%s1069 + $0x8] sm:$0xf]
        %v1073 = vld [vmem:[%s1069 + $0xc] sm:$0xf]
        %v1074 = vld [vmem:[%s1069 + $0x10] sm:$0xf]
        %v1075 = vld [vmem:[%s1069 + $0x14] sm:$0xf]
        %v1076 = vld [vmem:[%s1069 + $0x18] sm:$0xf]
        %v1077 = vld [vmem:[%s1069 + $0x1c] sm:$0xf]
        %v1078 = vld [vmem:[%s1069 + $0x20] sm:$0xf]
        %v1079 = vld [vmem:[%s1069 + $0x24] sm:$0xf]
        %v1080 = vld [vmem:[%s1069 + $0x28] sm:$0xf]
        %v1081 = vld [vmem:[%s1069 + $0x2c] sm:$0xf]
        %v1082 = vld [vmem:[%s1069 + $0x30] sm:$0xf]
        %v1083 = vld [vmem:[%s1069 + $0x34] sm:$0xf]
        %v1084 = vld [vmem:[%s1069 + $0x38] sm:$0xf]
        %v1085 = vld [vmem:[%s1069 + $0x3c] sm:$0xf]
        %v1102 = vunpack.c.l.b16 %v1070
        %v1103 = vunpack.c.l.b16 %v1071
        %v1104 = vunpack.c.l.b16 %v1072
        %v1105 = vunpack.c.l.b16 %v1073
        %v1106 = vunpack.c.l.b16 %v1074
        %v1107 = vunpack.c.l.b16 %v1075
        %v1108 = vunpack.c.l.b16 %v1076
        %v1109 = vunpack.c.l.b16 %v1077
        %v1110 = vunpack.c.l.b16 %v1078
        %v1111 = vunpack.c.l.b16 %v1079
        %v1112 = vunpack.c.l.b16 %v1080
        %v1113 = vunpack.c.l.b16 %v1081
        %v1114 = vunpack.c.l.b16 %v1082
        %v1115 = vunpack.c.l.b16 %v1083
        %v1116 = vunpack.c.l.b16 %v1084
        %v1117 = vunpack.c.l.b16 %v1085
        %v1118 = vpack.c.b16 %v1103, %v1102
        %v1119 = vpack.c.b16 %v1105, %v1104
        %v1120 = vpack.c.b16 %v1107, %v1106
        %v1121 = vpack.c.b16 %v1109, %v1108
        %v1122 = vpack.c.b16 %v1111, %v1110
        %v1123 = vpack.c.b16 %v1113, %v1112
        %v1124 = vpack.c.b16 %v1115, %v1114
        %v1125 = vpack.c.b16 %v1117, %v1116
        %1134 = vmatprep.subr.bf16.mxu0 0
        %1135 = vmatpush1.bf16.msra.mxu0 %v1118
        %1136 = vmatprep.subr.bf16.mxu0 0
        %1137 = vmatpush1.bf16.msra.mxu0 %v1119
        %1138 = vmatprep.subr.bf16.mxu0 0
        %1139 = vmatpush1.bf16.msra.mxu0 %v1120
        %1140 = vmatprep.subr.bf16.mxu0 0
        %1141 = vmatpush1.bf16.msra.mxu0 %v1121
        %1142 = vmatprep.subr.bf16.mxu0 0
        %1143 = vmatpush1.bf16.msra.mxu0 %v1122
        %1144 = vmatprep.subr.bf16.mxu0 0
        %1145 = vmatpush1.bf16.msra.mxu0 %v1123
        %1146 = vmatprep.subr.bf16.mxu0 0
        %1147 = vmatpush1.bf16.msra.mxu0 %v1124
        %1148 = vmatprep.subr.bf16.mxu0 0
        %1149 = vmatpush1.bf16.msra.mxu0 %v1125
        %1150 = vmatprep.subr.bf16.mxu0 0
        %1151 = vmatpush1.bf16.msra.mxu0 0
        %1152 = vmatprep.subr.bf16.mxu0 0
        %1153 = vmatpush1.bf16.msra.mxu0 0
        %1154 = vmatprep.subr.bf16.mxu0 0
        %1155 = vmatpush1.bf16.msra.mxu0 0
        %1156 = vmatprep.subr.bf16.mxu0 0
        %1157 = vmatpush1.bf16.msra.mxu0 0
        %1158 = vmatprep.subr.bf16.mxu0 0
        %1159 = vmatpush1.bf16.msra.mxu0 0
        %1160 = vmatprep.subr.bf16.mxu0 0
        %1161 = vmatpush1.bf16.msra.mxu0 0
        %1162 = vmatprep.subr.bf16.mxu0 0
        %1163 = vmatpush1.bf16.msra.mxu0 0
        %1164 = vmatprep.subr.bf16.mxu0 0
        %1165 = vmatpush1.bf16.msra.mxu0 0
        %1166 = vmatprep.mubr.bf16.mxu0 0
        %1167 = vmatmul.mubr.bf16.gmra.mrb[0].mxu0 %v907
        %v1168 = vpop.f32.mrb[0].mxu0
        %v1169 = vadd.f32 0.0, %v1168
        %v1170 = vpop.f32.mrb[0].mxu0
        %v1171 = vpop.f32.mrb[0].mxu0
        %v1172 = vadd.f32 0.0, %v1171
        %v1173 = vpop.f32.mrb[0].mxu0
        %1174 = vmatprep.mubr.bf16.mxu0 0
        %1175 = vmatmul.mubr.bf16.gmra.mrb[0].mxu0 %v908
        %v1176 = vpop.f32.mrb[0].mxu0
        %v1177 = vadd.f32 0.0, %v1176
        %v1178 = vpop.f32.mrb[0].mxu0
        %v1179 = vpop.f32.mrb[0].mxu0
        %v1180 = vadd.f32 0.0, %v1179
        %v1181 = vpop.f32.mrb[0].mxu0
        %1182 = vmatprep.mubr.bf16.mxu0 0
        %1183 = vmatmul.mubr.bf16.gmra.mrb[0].mxu0 %v909
        %v1184 = vpop.f32.mrb[0].mxu0
        %v1185 = vadd.f32 0.0, %v1184
        %v1186 = vpop.f32.mrb[0].mxu0
        %v1187 = vpop.f32.mrb[0].mxu0
        %v1188 = vadd.f32 0.0, %v1187
        %v1189 = vpop.f32.mrb[0].mxu0
        %1190 = vmatprep.mubr.bf16.mxu0 0
        %1191 = vmatmul.mubr.bf16.gmra.mrb[0].mxu0 %v910
        %v1192 = vpop.f32.mrb[0].mxu0
        %v1193 = vadd.f32 0.0, %v1192
        %v1194 = vpop.f32.mrb[0].mxu0
        %v1195 = vpop.f32.mrb[0].mxu0
        %v1196 = vadd.f32 0.0, %v1195
        %v1197 = vpop.f32.mrb[0].mxu0
        %1198 = vmatprep.mubr.bf16.mxu0 0
        %1199 = vmatmul.mubr.bf16.gmra.mrb[0].mxu0 %v911
        %v1200 = vpop.f32.mrb[0].mxu0
        %v1201 = vadd.f32 0.0, %v1200
        %v1202 = vpop.f32.mrb[0].mxu0
        %v1203 = vpop.f32.mrb[0].mxu0
        %v1204 = vadd.f32 0.0, %v1203
        %v1205 = vpop.f32.mrb[0].mxu0
        %1206 = vmatprep.mubr.bf16.mxu0 0
        %1207 = vmatmul.mubr.bf16.gmra.mrb[0].mxu0 %v912
        %v1208 = vpop.f32.mrb[0].mxu0
        %v1209 = vadd.f32 0.0, %v1208
        %v1210 = vpop.f32.mrb[0].mxu0
        %v1211 = vpop.f32.mrb[0].mxu0
        %v1212 = vadd.f32 0.0, %v1211
        %v1213 = vpop.f32.mrb[0].mxu0
        %1214 = vmatprep.mubr.bf16.mxu0 0
        %1215 = vmatmul.mubr.bf16.gmra.mrb[0].mxu0 %v913
        %v1216 = vpop.f32.mrb[0].mxu0
        %v1217 = vadd.f32 0.0, %v1216
        %v1218 = vpop.f32.mrb[0].mxu0
        %v1219 = vpop.f32.mrb[0].mxu0
        %v1220 = vadd.f32 0.0, %v1219
        %v1221 = vpop.f32.mrb[0].mxu0
        %1222 = vmatprep.mubr.bf16.mxu0 0
        %1223 = vmatmul.mubr.bf16.gmra.mrb[0].mxu0 %v914
        %v1224 = vpop.f32.mrb[0].mxu0
        %v1225 = vadd.f32 0.0, %v1224
        %v1226 = vpop.f32.mrb[0].mxu0
        %v1227 = vpop.f32.mrb[0].mxu0
        %v1228 = vadd.f32 0.0, %v1227
        %v1229 = vpop.f32.mrb[0].mxu0
        %1230 = vdwg.mxu0
        %v1247 = vunpack.c.l.b16 %v1053
        %v1248 = vunpack.c.l.b16 %v1054
        %v1249 = vunpack.c.l.b16 %v1055
        %v1250 = vunpack.c.l.b16 %v1056
        %v1251 = vunpack.c.l.b16 %v1057
        %v1252 = vunpack.c.l.b16 %v1058
        %v1253 = vunpack.c.l.b16 %v1059
        %v1254 = vunpack.c.l.b16 %v1060
        %v1255 = vunpack.c.l.b16 %v1061
        %v1256 = vunpack.c.l.b16 %v1062
        %v1257 = vunpack.c.l.b16 %v1063
        %v1258 = vunpack.c.l.b16 %v1064
        %v1259 = vunpack.c.l.b16 %v1065
        %v1260 = vunpack.c.l.b16 %v1066
        %v1261 = vunpack.c.l.b16 %v1067
        %v1262 = vunpack.c.l.b16 %v1068
        %v1263 = vpack.c.b16 %v1248, %v1247
        %v1264 = vpack.c.b16 %v1250, %v1249
        %v1265 = vpack.c.b16 %v1252, %v1251
        %v1266 = vpack.c.b16 %v1254, %v1253
        %v1267 = vpack.c.b16 %v1256, %v1255
        %v1268 = vpack.c.b16 %v1258, %v1257
        %v1269 = vpack.c.b16 %v1260, %v1259
        %v1270 = vpack.c.b16 %v1262, %v1261
        %1279 = vmatprep.subr.bf16.mxu0 0
        %1280 = vmatpush1.bf16.msra.mxu0 %v1263
        %1281 = vmatprep.subr.bf16.mxu0 0
        %1282 = vmatpush1.bf16.msra.mxu0 %v1264
        %1283 = vmatprep.subr.bf16.mxu0 0
        %1284 = vmatpush1.bf16.msra.mxu0 %v1265
        %1285 = vmatprep.subr.bf16.mxu0 0
        %1286 = vmatpush1.bf16.msra.mxu0 %v1266
        %1287 = vmatprep.subr.bf16.mxu0 0
        %1288 = vmatpush1.bf16.msra.mxu0 %v1267
        %1289 = vmatprep.subr.bf16.mxu0 0
        %1290 = vmatpush1.bf16.msra.mxu0 %v1268
        %1291 = vmatprep.subr.bf16.mxu0 0
        %1292 = vmatpush1.bf16.msra.mxu0 %v1269
        %1293 = vmatprep.subr.bf16.mxu0 0
        %1294 = vmatpush1.bf16.msra.mxu0 %v1270
        %1295 = vmatprep.subr.bf16.mxu0 0
        %1296 = vmatpush1.bf16.msra.mxu0 0
        %1297 = vmatprep.subr.bf16.mxu0 0
        %1298 = vmatpush1.bf16.msra.mxu0 0
        %1299 = vmatprep.subr.bf16.mxu0 0
        %1300 = vmatpush1.bf16.msra.mxu0 0
        %1301 = vmatprep.subr.bf16.mxu0 0
        %1302 = vmatpush1.bf16.msra.mxu0 0
        %1303 = vmatprep.subr.bf16.mxu0 0
        %1304 = vmatpush1.bf16.msra.mxu0 0
        %1305 = vmatprep.subr.bf16.mxu0 0
        %1306 = vmatpush1.bf16.msra.mxu0 0
        %1307 = vmatprep.subr.bf16.mxu0 0
        %1308 = vmatpush1.bf16.msra.mxu0 0
        %1309 = vmatprep.subr.bf16.mxu0 0
        %1310 = vmatpush1.bf16.msra.mxu0 0
        %1311 = vmatprep.mubr.bf16.mxu0 0
        %1312 = vmatmul.mubr.bf16.gmra.mrb[0].mxu0 %v1000
        %v1313 = vpop.f32.mrb[0].mxu0
        %v1314 = vadd.f32 %v1169, %v1313
        %v1315 = vpop.f32.mrb[0].mxu0
        %v1316 = vpop.f32.mrb[0].mxu0
        %v1317 = vadd.f32 %v1172, %v1316
        %v1318 = vpop.f32.mrb[0].mxu0
        %1319 = vmatprep.mubr.bf16.mxu0 0
        %1320 = vmatmul.mubr.bf16.gmra.mrb[0].mxu0 %v1001
        %v1321 = vpop.f32.mrb[0].mxu0
        %v1322 = vadd.f32 %v1177, %v1321
        %v1323 = vpop.f32.mrb[0].mxu0
        %v1324 = vpop.f32.mrb[0].mxu0
        %v1325 = vadd.f32 %v1180, %v1324
        %v1326 = vpop.f32.mrb[0].mxu0
        %1327 = vmatprep.mubr.bf16.mxu0 0
        %1328 = vmatmul.mubr.bf16.gmra.mrb[0].mxu0 %v1002
        %v1329 = vpop.f32.mrb[0].mxu0
        %v1330 = vadd.f32 %v1185, %v1329
        %v1331 = vpop.f32.mrb[0].mxu0
        %v1332 = vpop.f32.mrb[0].mxu0
        %v1333 = vadd.f32 %v1188, %v1332
        %v1334 = vpop.f32.mrb[0].mxu0
        %1335 = vmatprep.mubr.bf16.mxu0 0
        %1336 = vmatmul.mubr.bf16.gmra.mrb[0].mxu0 %v1003
        %v1337 = vpop.f32.mrb[0].mxu0
        %v1338 = vadd.f32 %v1193, %v1337
        %v1339 = vpop.f32.mrb[0].mxu0
        %v1340 = vpop.f32.mrb[0].mxu0
        %v1341 = vadd.f32 %v1196, %v1340
        %v1342 = vpop.f32.mrb[0].mxu0
        %1343 = vmatprep.mubr.bf16.mxu0 0
        %1344 = vmatmul.mubr.bf16.gmra.mrb[0].mxu0 %v1004
        %v1345 = vpop.f32.mrb[0].mxu0
        %v1346 = vadd.f32 %v1201, %v1345
        %v1347 = vpop.f32.mrb[0].mxu0
        %v1348 = vpop.f32.mrb[0].mxu0
        %v1349 = vadd.f32 %v1204, %v1348
        %v1350 = vpop.f32.mrb[0].mxu0
        %1351 = vmatprep.mubr.bf16.mxu0 0
        %1352 = vmatmul.mubr.bf16.gmra.mrb[0].mxu0 %v1005
        %v1353 = vpop.f32.mrb[0].mxu0
        %v1354 = vadd.f32 %v1209, %v1353
        %v1355 = vpop.f32.mrb[0].mxu0
        %v1356 = vpop.f32.mrb[0].mxu0
        %v1357 = vadd.f32 %v1212, %v1356
        %v1358 = vpop.f32.mrb[0].mxu0
        %1359 = vmatprep.mubr.bf16.mxu0 0
        %1360 = vmatmul.mubr.bf16.gmra.mrb[0].mxu0 %v1006
        %v1361 = vpop.f32.mrb[0].mxu0
        %v1362 = vadd.f32 %v1217, %v1361
        %v1363 = vpop.f32.mrb[0].mxu0
        %v1364 = vpop.f32.mrb[0].mxu0
        %v1365 = vadd.f32 %v1220, %v1364
        %v1366 = vpop.f32.mrb[0].mxu0
        %1367 = vmatprep.mubr.bf16.mxu0 0
        %1368 = vmatmul.mubr.bf16.gmra.mrb[0].mxu0 %v1007
        %v1369 = vpop.f32.mrb[0].mxu0
        %v1370 = vadd.f32 %v1225, %v1369
        %v1371 = vpop.f32.mrb[0].mxu0
        %v1372 = vpop.f32.mrb[0].mxu0
        %v1373 = vadd.f32 %v1228, %v1372
        %v1374 = vpop.f32.mrb[0].mxu0
        %1375 = vdwg.mxu0
        %s1376 = scalar_lea.vmem [#allocation7], 128
        %v1377 = vld [vmem:[%s1376] sm:$0xf]
        %v1378 = vld [vmem:[%s1376 + $0x4] sm:$0xf]
        %v1379 = vld [vmem:[%s1376 + $0x8] sm:$0xf]
        %v1380 = vld [vmem:[%s1376 + $0xc] sm:$0xf]
        %v1381 = vld [vmem:[%s1376 + $0x10] sm:$0xf]
        %v1382 = vld [vmem:[%s1376 + $0x14] sm:$0xf]
        %v1383 = vld [vmem:[%s1376 + $0x18] sm:$0xf]
        %v1384 = vld [vmem:[%s1376 + $0x1c] sm:$0xf]
        %v1385 = vld [vmem:[%s1376 + $0x20] sm:$0xf]
        %v1386 = vld [vmem:[%s1376 + $0x24] sm:$0xf]
        %v1387 = vld [vmem:[%s1376 + $0x28] sm:$0xf]
        %v1388 = vld [vmem:[%s1376 + $0x2c] sm:$0xf]
        %v1389 = vld [vmem:[%s1376 + $0x30] sm:$0xf]
        %v1390 = vld [vmem:[%s1376 + $0x34] sm:$0xf]
        %v1391 = vld [vmem:[%s1376 + $0x38] sm:$0xf]
        %v1392 = vld [vmem:[%s1376 + $0x3c] sm:$0xf]
        %v1409 = vunpack.c.l.b16 %v1377
        %v1410 = vunpack.c.l.b16 %v1378
        %v1411 = vunpack.c.l.b16 %v1379
        %v1412 = vunpack.c.l.b16 %v1380
        %v1413 = vunpack.c.l.b16 %v1381
        %v1414 = vunpack.c.l.b16 %v1382
        %v1415 = vunpack.c.l.b16 %v1383
        %v1416 = vunpack.c.l.b16 %v1384
        %v1417 = vunpack.c.l.b16 %v1385
        %v1418 = vunpack.c.l.b16 %v1386
        %v1419 = vunpack.c.l.b16 %v1387
        %v1420 = vunpack.c.l.b16 %v1388
        %v1421 = vunpack.c.l.b16 %v1389
        %v1422 = vunpack.c.l.b16 %v1390
        %v1423 = vunpack.c.l.b16 %v1391
        %v1424 = vunpack.c.l.b16 %v1392
        %v1425 = vpack.c.b16 %v1410, %v1409
        %v1426 = vpack.c.b16 %v1412, %v1411
        %v1427 = vpack.c.b16 %v1414, %v1413
        %v1428 = vpack.c.b16 %v1416, %v1415
        %v1429 = vpack.c.b16 %v1418, %v1417
        %v1430 = vpack.c.b16 %v1420, %v1419
        %v1431 = vpack.c.b16 %v1422, %v1421
        %v1432 = vpack.c.b16 %v1424, %v1423
        %1441 = vmatprep.subr.bf16.mxu0 0
        %1442 = vmatpush1.bf16.msra.mxu0 %v1425
        %1443 = vmatprep.subr.bf16.mxu0 0
        %1444 = vmatpush1.bf16.msra.mxu0 %v1426
        %1445 = vmatprep.subr.bf16.mxu0 0
        %1446 = vmatpush1.bf16.msra.mxu0 %v1427
        %1447 = vmatprep.subr.bf16.mxu0 0
        %1448 = vmatpush1.bf16.msra.mxu0 %v1428
        %1449 = vmatprep.subr.bf16.mxu0 0
        %1450 = vmatpush1.bf16.msra.mxu0 %v1429
        %1451 = vmatprep.subr.bf16.mxu0 0
        %1452 = vmatpush1.bf16.msra.mxu0 %v1430
        %1453 = vmatprep.subr.bf16.mxu0 0
        %1454 = vmatpush1.bf16.msra.mxu0 %v1431
        %1455 = vmatprep.subr.bf16.mxu0 0
        %1456 = vmatpush1.bf16.msra.mxu0 %v1432
        %1457 = vmatprep.subr.bf16.mxu0 0
        %1458 = vmatpush1.bf16.msra.mxu0 0
        %1459 = vmatprep.subr.bf16.mxu0 0
        %1460 = vmatpush1.bf16.msra.mxu0 0
        %1461 = vmatprep.subr.bf16.mxu0 0
        %1462 = vmatpush1.bf16.msra.mxu0 0
        %1463 = vmatprep.subr.bf16.mxu0 0
        %1464 = vmatpush1.bf16.msra.mxu0 0
        %1465 = vmatprep.subr.bf16.mxu0 0
        %1466 = vmatpush1.bf16.msra.mxu0 0
        %1467 = vmatprep.subr.bf16.mxu0 0
        %1468 = vmatpush1.bf16.msra.mxu0 0
        %1469 = vmatprep.subr.bf16.mxu0 0
        %1470 = vmatpush1.bf16.msra.mxu0 0
        %1471 = vmatprep.subr.bf16.mxu0 0
        %1472 = vmatpush1.bf16.msra.mxu0 0
        %1473 = vmatprep.mubr.bf16.mxu0 0
        %1474 = vmatmul.mubr.bf16.gmra.mrb[0].mxu0 %v1043
        %v1475 = vpop.f32.mrb[0].mxu0
        %v1476 = vadd.f32 0.0, %v1475
        %v1477 = vpop.f32.mrb[0].mxu0
        %v1478 = vpop.f32.mrb[0].mxu0
        %v1479 = vadd.f32 0.0, %v1478
        %v1480 = vpop.f32.mrb[0].mxu0
        %1481 = vmatprep.mubr.bf16.mxu0 0
        %1482 = vmatmul.mubr.bf16.gmra.mrb[0].mxu0 %v1044
        %v1483 = vpop.f32.mrb[0].mxu0
        %v1484 = vadd.f32 0.0, %v1483
        %v1485 = vpop.f32.mrb[0].mxu0
        %v1486 = vpop.f32.mrb[0].mxu0
        %v1487 = vadd.f32 0.0, %v1486
        %v1488 = vpop.f32.mrb[0].mxu0
        %1489 = vmatprep.mubr.bf16.mxu0 0
        %1490 = vmatmul.mubr.bf16.gmra.mrb[0].mxu0 %v1045
        %v1491 = vpop.f32.mrb[0].mxu0
        %v1492 = vadd.f32 0.0, %v1491
        %v1493 = vpop.f32.mrb[0].mxu0
        %v1494 = vpop.f32.mrb[0].mxu0
        %v1495 = vadd.f32 0.0, %v1494
        %v1496 = vpop.f32.mrb[0].mxu0
        %1497 = vmatprep.mubr.bf16.mxu0 0
        %1498 = vmatmul.mubr.bf16.gmra.mrb[0].mxu0 %v1046
        %v1499 = vpop.f32.mrb[0].mxu0
        %v1500 = vadd.f32 0.0, %v1499
        %v1501 = vpop.f32.mrb[0].mxu0
        %v1502 = vpop.f32.mrb[0].mxu0
        %v1503 = vadd.f32 0.0, %v1502
        %v1504 = vpop.f32.mrb[0].mxu0
        %1505 = vmatprep.mubr.bf16.mxu0 0
        %1506 = vmatmul.mubr.bf16.gmra.mrb[0].mxu0 %v1047
        %v1507 = vpop.f32.mrb[0].mxu0
        %v1508 = vadd.f32 0.0, %v1507
        %v1509 = vpop.f32.mrb[0].mxu0
        %v1510 = vpop.f32.mrb[0].mxu0
        %v1511 = vadd.f32 0.0, %v1510
        %v1512 = vpop.f32.mrb[0].mxu0
        %1513 = vmatprep.mubr.bf16.mxu0 0
        %1514 = vmatmul.mubr.bf16.gmra.mrb[0].mxu0 %v1048
        %v1515 = vpop.f32.mrb[0].mxu0
        %v1516 = vadd.f32 0.0, %v1515
        %v1517 = vpop.f32.mrb[0].mxu0
        %v1518 = vpop.f32.mrb[0].mxu0
        %v1519 = vadd.f32 0.0, %v1518
        %v1520 = vpop.f32.mrb[0].mxu0
        %1521 = vmatprep.mubr.bf16.mxu0 0
        %1522 = vmatmul.mubr.bf16.gmra.mrb[0].mxu0 %v1049
        %v1523 = vpop.f32.mrb[0].mxu0
        %v1524 = vadd.f32 0.0, %v1523
        %v1525 = vpop.f32.mrb[0].mxu0
        %v1526 = vpop.f32.mrb[0].mxu0
        %v1527 = vadd.f32 0.0, %v1526
        %v1528 = vpop.f32.mrb[0].mxu0
        %1529 = vmatprep.mubr.bf16.mxu0 0
        %1530 = vmatmul.mubr.bf16.gmra.mrb[0].mxu0 %v1050
        %v1531 = vpop.f32.mrb[0].mxu0
        %v1532 = vadd.f32 0.0, %v1531
        %v1533 = vpop.f32.mrb[0].mxu0
        %v1534 = vpop.f32.mrb[0].mxu0
        %v1535 = vadd.f32 0.0, %v1534
        %v1536 = vpop.f32.mrb[0].mxu0
        %1537 = vdwg.mxu0
        %v1538 = vadd.f32 %v1314, %v1476
        %v1539 = vadd.f32 %v1317, %v1479
        %v1540 = vadd.f32 %v1322, %v1484
        %v1541 = vadd.f32 %v1325, %v1487
        %v1542 = vadd.f32 %v1330, %v1492
        %v1543 = vadd.f32 %v1333, %v1495
        %v1544 = vadd.f32 %v1338, %v1500
        %v1545 = vadd.f32 %v1341, %v1503
        %v1546 = vadd.f32 %v1346, %v1508
        %v1547 = vadd.f32 %v1349, %v1511
        %v1548 = vadd.f32 %v1354, %v1516
        %v1549 = vadd.f32 %v1357, %v1519
        %v1550 = vadd.f32 %v1362, %v1524
        %v1551 = vadd.f32 %v1365, %v1527
        %v1552 = vadd.f32 %v1370, %v1532
        %v1553 = vadd.f32 %v1373, %v1535
        %s1554 = scalar_lea.vmem [#allocation7], 192
        %v1555 = vld [vmem:[%s1554] sm:$0xf]
        %v1556 = vld [vmem:[%s1554 + $0x4] sm:$0xf]
        %v1557 = vld [vmem:[%s1554 + $0x8] sm:$0xf]
        %v1558 = vld [vmem:[%s1554 + $0xc] sm:$0xf]
        %v1559 = vld [vmem:[%s1554 + $0x10] sm:$0xf]
        %v1560 = vld [vmem:[%s1554 + $0x14] sm:$0xf]
        %v1561 = vld [vmem:[%s1554 + $0x18] sm:$0xf]
        %v1562 = vld [vmem:[%s1554 + $0x1c] sm:$0xf]
        %v1563 = vld [vmem:[%s1554 + $0x20] sm:$0xf]
        %v1564 = vld [vmem:[%s1554 + $0x24] sm:$0xf]
        %v1565 = vld [vmem:[%s1554 + $0x28] sm:$0xf]
        %v1566 = vld [vmem:[%s1554 + $0x2c] sm:$0xf]
        %v1567 = vld [vmem:[%s1554 + $0x30] sm:$0xf]
        %v1568 = vld [vmem:[%s1554 + $0x34] sm:$0xf]
        %v1569 = vld [vmem:[%s1554 + $0x38] sm:$0xf]
        %v1570 = vld [vmem:[%s1554 + $0x3c] sm:$0xf]
        %v1587 = vunpack.c.l.b16 %v1555
        %v1588 = vunpack.c.l.b16 %v1556
        %v1589 = vunpack.c.l.b16 %v1557
        %v1590 = vunpack.c.l.b16 %v1558
        %v1591 = vunpack.c.l.b16 %v1559
        %v1592 = vunpack.c.l.b16 %v1560
        %v1593 = vunpack.c.l.b16 %v1561
        %v1594 = vunpack.c.l.b16 %v1562
        %v1595 = vunpack.c.l.b16 %v1563
        %v1596 = vunpack.c.l.b16 %v1564
        %v1597 = vunpack.c.l.b16 %v1565
        %v1598 = vunpack.c.l.b16 %v1566
        %v1599 = vunpack.c.l.b16 %v1567
        %v1600 = vunpack.c.l.b16 %v1568
        %v1601 = vunpack.c.l.b16 %v1569
        %v1602 = vunpack.c.l.b16 %v1570
        %v1603 = vpack.c.b16 %v1588, %v1587
        %v1604 = vpack.c.b16 %v1590, %v1589
        %v1605 = vpack.c.b16 %v1592, %v1591
        %v1606 = vpack.c.b16 %v1594, %v1593
        %v1607 = vpack.c.b16 %v1596, %v1595
        %v1608 = vpack.c.b16 %v1598, %v1597
        %v1609 = vpack.c.b16 %v1600, %v1599
        %v1610 = vpack.c.b16 %v1602, %v1601
        %1619 = vmatprep.subr.bf16.mxu0 0
        %1620 = vmatpush1.bf16.msra.mxu0 %v1603
        %1621 = vmatprep.subr.bf16.mxu0 0
        %1622 = vmatpush1.bf16.msra.mxu0 %v1604
        %1623 = vmatprep.subr.bf16.mxu0 0
        %1624 = vmatpush1.bf16.msra.mxu0 %v1605
        %1625 = vmatprep.subr.bf16.mxu0 0
        %1626 = vmatpush1.bf16.msra.mxu0 %v1606
        %1627 = vmatprep.subr.bf16.mxu0 0
        %1628 = vmatpush1.bf16.msra.mxu0 %v1607
        %1629 = vmatprep.subr.bf16.mxu0 0
        %1630 = vmatpush1.bf16.msra.mxu0 %v1608
        %1631 = vmatprep.subr.bf16.mxu0 0
        %1632 = vmatpush1.bf16.msra.mxu0 %v1609
        %1633 = vmatprep.subr.bf16.mxu0 0
        %1634 = vmatpush1.bf16.msra.mxu0 %v1610
        %1635 = vmatprep.subr.bf16.mxu0 0
        %1636 = vmatpush1.bf16.msra.mxu0 0
        %1637 = vmatprep.subr.bf16.mxu0 0
        %1638 = vmatpush1.bf16.msra.mxu0 0
        %1639 = vmatprep.subr.bf16.mxu0 0
        %1640 = vmatpush1.bf16.msra.mxu0 0
        %1641 = vmatprep.subr.bf16.mxu0 0
        %1642 = vmatpush1.bf16.msra.mxu0 0
        %1643 = vmatprep.subr.bf16.mxu0 0
        %1644 = vmatpush1.bf16.msra.mxu0 0
        %1645 = vmatprep.subr.bf16.mxu0 0
        %1646 = vmatpush1.bf16.msra.mxu0 0
        %1647 = vmatprep.subr.bf16.mxu0 0
        %1648 = vmatpush1.bf16.msra.mxu0 0
        %1649 = vmatprep.subr.bf16.mxu0 0
        %1650 = vmatpush1.bf16.msra.mxu0 0
        %1651 = vmatprep.mubr.bf16.mxu0 0
        %1652 = vmatmul.mubr.bf16.gmra.mrb[0].mxu0 %v1001
        %v1653 = vpop.f32.mrb[0].mxu0
        %v1654 = vadd.f32 0.0, %v1653
        %v1655 = vpop.f32.mrb[0].mxu0
        %v1656 = vpop.f32.mrb[0].mxu0
        %v1657 = vadd.f32 0.0, %v1656
        %v1658 = vpop.f32.mrb[0].mxu0
        %1659 = vmatprep.mubr.bf16.mxu0 0
        %1660 = vmatmul.mubr.bf16.gmra.mrb[0].mxu0 %v1002
        %v1661 = vpop.f32.mrb[0].mxu0
        %v1662 = vadd.f32 0.0, %v1661
        %v1663 = vpop.f32.mrb[0].mxu0
        %v1664 = vpop.f32.mrb[0].mxu0
        %v1665 = vadd.f32 0.0, %v1664
        %v1666 = vpop.f32.mrb[0].mxu0
        %1667 = vmatprep.mubr.bf16.mxu0 0
        %1668 = vmatmul.mubr.bf16.gmra.mrb[0].mxu0 %v1003
        %v1669 = vpop.f32.mrb[0].mxu0
        %v1670 = vadd.f32 0.0, %v1669
        %v1671 = vpop.f32.mrb[0].mxu0
        %v1672 = vpop.f32.mrb[0].mxu0
        %v1673 = vadd.f32 0.0, %v1672
        %v1674 = vpop.f32.mrb[0].mxu0
        %1675 = vmatprep.mubr.bf16.mxu0 0
        %1676 = vmatmul.mubr.bf16.gmra.mrb[0].mxu0 %v1004
        %v1677 = vpop.f32.mrb[0].mxu0
        %v1678 = vadd.f32 0.0, %v1677
        %v1679 = vpop.f32.mrb[0].mxu0
        %v1680 = vpop.f32.mrb[0].mxu0
        %v1681 = vadd.f32 0.0, %v1680
        %v1682 = vpop.f32.mrb[0].mxu0
        %1683 = vmatprep.mubr.bf16.mxu0 0
        %1684 = vmatmul.mubr.bf16.gmra.mrb[0].mxu0 %v1005
        %v1685 = vpop.f32.mrb[0].mxu0
        %v1686 = vadd.f32 0.0, %v1685
        %v1687 = vpop.f32.mrb[0].mxu0
        %v1688 = vpop.f32.mrb[0].mxu0
        %v1689 = vadd.f32 0.0, %v1688
        %v1690 = vpop.f32.mrb[0].mxu0
        %1691 = vmatprep.mubr.bf16.mxu0 0
        %1692 = vmatmul.mubr.bf16.gmra.mrb[0].mxu0 %v1006
        %v1693 = vpop.f32.mrb[0].mxu0
        %v1694 = vadd.f32 0.0, %v1693
        %v1695 = vpop.f32.mrb[0].mxu0
        %v1696 = vpop.f32.mrb[0].mxu0
        %v1697 = vadd.f32 0.0, %v1696
        %v1698 = vpop.f32.mrb[0].mxu0
        %1699 = vmatprep.mubr.bf16.mxu0 0
        %1700 = vmatmul.mubr.bf16.gmra.mrb[0].mxu0 %v1007
        %v1701 = vpop.f32.mrb[0].mxu0
        %v1702 = vadd.f32 0.0, %v1701
        %v1703 = vpop.f32.mrb[0].mxu0
        %v1704 = vpop.f32.mrb[0].mxu0
        %v1705 = vadd.f32 0.0, %v1704
        %v1706 = vpop.f32.mrb[0].mxu0
        %1707 = vmatprep.mubr.bf16.mxu0 0
        %1708 = vmatmul.mubr.bf16.gmra.mrb[0].mxu0 %v1008
        %v1709 = vpop.f32.mrb[0].mxu0
        %v1710 = vadd.f32 0.0, %v1709
        %v1711 = vpop.f32.mrb[0].mxu0
        %v1712 = vpop.f32.mrb[0].mxu0
        %v1713 = vadd.f32 0.0, %v1712
        %v1714 = vpop.f32.mrb[0].mxu0
        %1715 = vdwg.mxu0
        %v1716 = vadd.f32 %v1538, %v1654
        %v1717 = vadd.f32 %v1539, %v1657
        %v1718 = vadd.f32 %v1540, %v1662
        %v1719 = vadd.f32 %v1541, %v1665
        %v1720 = vadd.f32 %v1542, %v1670
        %v1721 = vadd.f32 %v1543, %v1673
        %v1722 = vadd.f32 %v1544, %v1678
        %v1723 = vadd.f32 %v1545, %v1681
        %v1724 = vadd.f32 %v1546, %v1686
        %v1725 = vadd.f32 %v1547, %v1689
        %v1726 = vadd.f32 %v1548, %v1694
        %v1727 = vadd.f32 %v1549, %v1697
        %v1728 = vadd.f32 %v1550, %v1702
        %v1729 = vadd.f32 %v1551, %v1705
        %v1730 = vadd.f32 %v1552, %v1710
        %v1731 = vadd.f32 %v1553, %v1713
        %s1732 = scalar_lea.vmem [#allocation7], 256
        %v1733 = vld [vmem:[%s1732] sm:$0xf]
        %v1734 = vld [vmem:[%s1732 + $0x4] sm:$0xf]
        %v1735 = vld [vmem:[%s1732 + $0x8] sm:$0xf]
        %v1736 = vld [vmem:[%s1732 + $0xc] sm:$0xf]
        %v1737 = vld [vmem:[%s1732 + $0x10] sm:$0xf]
        %v1738 = vld [vmem:[%s1732 + $0x14] sm:$0xf]
        %v1739 = vld [vmem:[%s1732 + $0x18] sm:$0xf]
        %v1740 = vld [vmem:[%s1732 + $0x1c] sm:$0xf]
        %v1741 = vld [vmem:[%s1732 + $0x20] sm:$0xf]
        %v1742 = vld [vmem:[%s1732 + $0x24] sm:$0xf]
        %v1743 = vld [vmem:[%s1732 + $0x28] sm:$0xf]
        %v1744 = vld [vmem:[%s1732 + $0x2c] sm:$0xf]
        %v1745 = vld [vmem:[%s1732 + $0x30] sm:$0xf]
        %v1746 = vld [vmem:[%s1732 + $0x34] sm:$0xf]
        %v1747 = vld [vmem:[%s1732 + $0x38] sm:$0xf]
        %v1748 = vld [vmem:[%s1732 + $0x3c] sm:$0xf]
        %v1765 = vunpack.c.l.b16 %v1733
        %v1766 = vunpack.c.l.b16 %v1734
        %v1767 = vunpack.c.l.b16 %v1735
        %v1768 = vunpack.c.l.b16 %v1736
        %v1769 = vunpack.c.l.b16 %v1737
        %v1770 = vunpack.c.l.b16 %v1738
        %v1771 = vunpack.c.l.b16 %v1739
        %v1772 = vunpack.c.l.b16 %v1740
        %v1773 = vunpack.c.l.b16 %v1741
        %v1774 = vunpack.c.l.b16 %v1742
        %v1775 = vunpack.c.l.b16 %v1743
        %v1776 = vunpack.c.l.b16 %v1744
        %v1777 = vunpack.c.l.b16 %v1745
        %v1778 = vunpack.c.l.b16 %v1746
        %v1779 = vunpack.c.l.b16 %v1747
        %v1780 = vunpack.c.l.b16 %v1748
        %v1781 = vpack.c.b16 %v1766, %v1765
        %v1782 = vpack.c.b16 %v1768, %v1767
        %v1783 = vpack.c.b16 %v1770, %v1769
        %v1784 = vpack.c.b16 %v1772, %v1771
        %v1785 = vpack.c.b16 %v1774, %v1773
        %v1786 = vpack.c.b16 %v1776, %v1775
        %v1787 = vpack.c.b16 %v1778, %v1777
        %v1788 = vpack.c.b16 %v1780, %v1779
        %1797 = vmatprep.subr.bf16.mxu0 0
        %1798 = vmatpush1.bf16.msra.mxu0 %v1781
        %1799 = vmatprep.subr.bf16.mxu0 0
        %1800 = vmatpush1.bf16.msra.mxu0 %v1782
        %1801 = vmatprep.subr.bf16.mxu0 0
        %1802 = vmatpush1.bf16.msra.mxu0 %v1783
        %1803 = vmatprep.subr.bf16.mxu0 0
        %1804 = vmatpush1.bf16.msra.mxu0 %v1784
        %1805 = vmatprep.subr.bf16.mxu0 0
        %1806 = vmatpush1.bf16.msra.mxu0 %v1785
        %1807 = vmatprep.subr.bf16.mxu0 0
        %1808 = vmatpush1.bf16.msra.mxu0 %v1786
        %1809 = vmatprep.subr.bf16.mxu0 0
        %1810 = vmatpush1.bf16.msra.mxu0 %v1787
        %1811 = vmatprep.subr.bf16.mxu0 0
        %1812 = vmatpush1.bf16.msra.mxu0 %v1788
        %1813 = vmatprep.subr.bf16.mxu0 0
        %1814 = vmatpush1.bf16.msra.mxu0 0
        %1815 = vmatprep.subr.bf16.mxu0 0
        %1816 = vmatpush1.bf16.msra.mxu0 0
        %1817 = vmatprep.subr.bf16.mxu0 0
        %1818 = vmatpush1.bf16.msra.mxu0 0
        %1819 = vmatprep.subr.bf16.mxu0 0
        %1820 = vmatpush1.bf16.msra.mxu0 0
        %1821 = vmatprep.subr.bf16.mxu0 0
        %1822 = vmatpush1.bf16.msra.mxu0 0
        %1823 = vmatprep.subr.bf16.mxu0 0
        %1824 = vmatpush1.bf16.msra.mxu0 0
        %1825 = vmatprep.subr.bf16.mxu0 0
        %1826 = vmatpush1.bf16.msra.mxu0 0
        %1827 = vmatprep.subr.bf16.mxu0 0
        %1828 = vmatpush1.bf16.msra.mxu0 0
        %1829 = vmatprep.mubr.bf16.mxu0 0
        %1830 = vmatmul.mubr.bf16.gmra.mrb[0].mxu0 %v908
        %v1831 = vpop.f32.mrb[0].mxu0
        %v1832 = vadd.f32 0.0, %v1831
        %v1833 = vpop.f32.mrb[0].mxu0
        %v1834 = vpop.f32.mrb[0].mxu0
        %v1835 = vadd.f32 0.0, %v1834
        %v1836 = vpop.f32.mrb[0].mxu0
        %1837 = vmatprep.mubr.bf16.mxu0 0
        %1838 = vmatmul.mubr.bf16.gmra.mrb[0].mxu0 %v909
        %v1839 = vpop.f32.mrb[0].mxu0
        %v1840 = vadd.f32 0.0, %v1839
        %v1841 = vpop.f32.mrb[0].mxu0
        %v1842 = vpop.f32.mrb[0].mxu0
        %v1843 = vadd.f32 0.0, %v1842
        %v1844 = vpop.f32.mrb[0].mxu0
        %1845 = vmatprep.mubr.bf16.mxu0 0
        %1846 = vmatmul.mubr.bf16.gmra.mrb[0].mxu0 %v910
        %v1847 = vpop.f32.mrb[0].mxu0
        %v1848 = vadd.f32 0.0, %v1847
        %v1849 = vpop.f32.mrb[0].mxu0
        %v1850 = vpop.f32.mrb[0].mxu0
        %v1851 = vadd.f32 0.0, %v1850
        %v1852 = vpop.f32.mrb[0].mxu0
        %1853 = vmatprep.mubr.bf16.mxu0 0
        %1854 = vmatmul.mubr.bf16.gmra.mrb[0].mxu0 %v911
        %v1855 = vpop.f32.mrb[0].mxu0
        %v1856 = vadd.f32 0.0, %v1855
        %v1857 = vpop.f32.mrb[0].mxu0
        %v1858 = vpop.f32.mrb[0].mxu0
        %v1859 = vadd.f32 0.0, %v1858
        %v1860 = vpop.f32.mrb[0].mxu0
        %1861 = vmatprep.mubr.bf16.mxu0 0
        %1862 = vmatmul.mubr.bf16.gmra.mrb[0].mxu0 %v912
        %v1863 = vpop.f32.mrb[0].mxu0
        %v1864 = vadd.f32 0.0, %v1863
        %v1865 = vpop.f32.mrb[0].mxu0
        %v1866 = vpop.f32.mrb[0].mxu0
        %v1867 = vadd.f32 0.0, %v1866
        %v1868 = vpop.f32.mrb[0].mxu0
        %1869 = vmatprep.mubr.bf16.mxu0 0
        %1870 = vmatmul.mubr.bf16.gmra.mrb[0].mxu0 %v913
        %v1871 = vpop.f32.mrb[0].mxu0
        %v1872 = vadd.f32 0.0, %v1871
        %v1873 = vpop.f32.mrb[0].mxu0
        %v1874 = vpop.f32.mrb[0].mxu0
        %v1875 = vadd.f32 0.0, %v1874
        %v1876 = vpop.f32.mrb[0].mxu0
        %1877 = vmatprep.mubr.bf16.mxu0 0
        %1878 = vmatmul.mubr.bf16.gmra.mrb[0].mxu0 %v914
        %v1879 = vpop.f32.mrb[0].mxu0
        %v1880 = vadd.f32 0.0, %v1879
        %v1881 = vpop.f32.mrb[0].mxu0
        %v1882 = vpop.f32.mrb[0].mxu0
        %v1883 = vadd.f32 0.0, %v1882
        %v1884 = vpop.f32.mrb[0].mxu0
        %1885 = vmatprep.mubr.bf16.mxu0 0
        %1886 = vmatmul.mubr.bf16.gmra.mrb[0].mxu0 %v915
        %v1887 = vpop.f32.mrb[0].mxu0
        %v1888 = vadd.f32 0.0, %v1887
        %v1889 = vpop.f32.mrb[0].mxu0
        %v1890 = vpop.f32.mrb[0].mxu0
        %v1891 = vadd.f32 0.0, %v1890
        %v1892 = vpop.f32.mrb[0].mxu0
        %1893 = vdwg.mxu0
        %v1894 = vadd.f32 %v1716, %v1832
        %v1895 = vadd.f32 %v1717, %v1835
        %v1896 = vadd.f32 %v1718, %v1840
        %v1897 = vadd.f32 %v1719, %v1843
        %v1898 = vadd.f32 %v1720, %v1848
        %v1899 = vadd.f32 %v1721, %v1851
        %v1900 = vadd.f32 %v1722, %v1856
        %v1901 = vadd.f32 %v1723, %v1859
        %v1902 = vadd.f32 %v1724, %v1864
        %v1903 = vadd.f32 %v1725, %v1867
        %v1904 = vadd.f32 %v1726, %v1872
        %v1905 = vadd.f32 %v1727, %v1875
        %v1906 = vadd.f32 %v1728, %v1880
        %v1907 = vadd.f32 %v1729, %v1883
        %v1908 = vadd.f32 %v1730, %v1888
        %v1909 = vadd.f32 %v1731, %v1891
        %s1910 = scalar_lea.vmem [#allocation7], 320
        %v1911 = vld [vmem:[%s1910] sm:$0xf]
        %v1912 = vld [vmem:[%s1910 + $0x4] sm:$0xf]
        %v1913 = vld [vmem:[%s1910 + $0x8] sm:$0xf]
        %v1914 = vld [vmem:[%s1910 + $0xc] sm:$0xf]
        %v1915 = vld [vmem:[%s1910 + $0x10] sm:$0xf]
        %v1916 = vld [vmem:[%s1910 + $0x14] sm:$0xf]
        %v1917 = vld [vmem:[%s1910 + $0x18] sm:$0xf]
        %v1918 = vld [vmem:[%s1910 + $0x1c] sm:$0xf]
        %v1919 = vld [vmem:[%s1910 + $0x20] sm:$0xf]
        %v1920 = vld [vmem:[%s1910 + $0x24] sm:$0xf]
        %v1921 = vld [vmem:[%s1910 + $0x28] sm:$0xf]
        %v1922 = vld [vmem:[%s1910 + $0x2c] sm:$0xf]
        %v1923 = vld [vmem:[%s1910 + $0x30] sm:$0xf]
        %v1924 = vld [vmem:[%s1910 + $0x34] sm:$0xf]
        %v1925 = vld [vmem:[%s1910 + $0x38] sm:$0xf]
        %v1926 = vld [vmem:[%s1910 + $0x3c] sm:$0xf]
        %v1943 = vunpack.c.l.b16 %v1911
        %v1944 = vunpack.c.l.b16 %v1912
        %v1945 = vunpack.c.l.b16 %v1913
        %v1946 = vunpack.c.l.b16 %v1914
        %v1947 = vunpack.c.l.b16 %v1915
        %v1948 = vunpack.c.l.b16 %v1916
        %v1949 = vunpack.c.l.b16 %v1917
        %v1950 = vunpack.c.l.b16 %v1918
        %v1951 = vunpack.c.l.b16 %v1919
        %v1952 = vunpack.c.l.b16 %v1920
        %v1953 = vunpack.c.l.b16 %v1921
        %v1954 = vunpack.c.l.b16 %v1922
        %v1955 = vunpack.c.l.b16 %v1923
        %v1956 = vunpack.c.l.b16 %v1924
        %v1957 = vunpack.c.l.b16 %v1925
        %v1958 = vunpack.c.l.b16 %v1926
        %v1959 = vpack.c.b16 %v1944, %v1943
        %v1960 = vpack.c.b16 %v1946, %v1945
        %v1961 = vpack.c.b16 %v1948, %v1947
        %v1962 = vpack.c.b16 %v1950, %v1949
        %v1963 = vpack.c.b16 %v1952, %v1951
        %v1964 = vpack.c.b16 %v1954, %v1953
        %v1965 = vpack.c.b16 %v1956, %v1955
        %v1966 = vpack.c.b16 %v1958, %v1957
        %1975 = vmatprep.subr.bf16.mxu0 0
        %1976 = vmatpush1.bf16.msra.mxu0 %v1959
        %1977 = vmatprep.subr.bf16.mxu0 0
        %1978 = vmatpush1.bf16.msra.mxu0 %v1960
        %1979 = vmatprep.subr.bf16.mxu0 0
        %1980 = vmatpush1.bf16.msra.mxu0 %v1961
        %1981 = vmatprep.subr.bf16.mxu0 0
        %1982 = vmatpush1.bf16.msra.mxu0 %v1962
        %1983 = vmatprep.subr.bf16.mxu0 0
        %1984 = vmatpush1.bf16.msra.mxu0 %v1963
        %1985 = vmatprep.subr.bf16.mxu0 0
        %1986 = vmatpush1.bf16.msra.mxu0 %v1964
        %1987 = vmatprep.subr.bf16.mxu0 0
        %1988 = vmatpush1.bf16.msra.mxu0 %v1965
        %1989 = vmatprep.subr.bf16.mxu0 0
        %1990 = vmatpush1.bf16.msra.mxu0 %v1966
        %1991 = vmatprep.subr.bf16.mxu0 0
        %1992 = vmatpush1.bf16.msra.mxu0 0
        %1993 = vmatprep.subr.bf16.mxu0 0
        %1994 = vmatpush1.bf16.msra.mxu0 0
        %1995 = vmatprep.subr.bf16.mxu0 0
        %1996 = vmatpush1.bf16.msra.mxu0 0
        %1997 = vmatprep.subr.bf16.mxu0 0
        %1998 = vmatpush1.bf16.msra.mxu0 0
        %1999 = vmatprep.subr.bf16.mxu0 0
        %2000 = vmatpush1.bf16.msra.mxu0 0
        %2001 = vmatprep.subr.bf16.mxu0 0
        %2002 = vmatpush1.bf16.msra.mxu0 0
        %2003 = vmatprep.subr.bf16.mxu0 0
        %2004 = vmatpush1.bf16.msra.mxu0 0
        %2005 = vmatprep.subr.bf16.mxu0 0
        %2006 = vmatpush1.bf16.msra.mxu0 0
        %2007 = vmatprep.mubr.bf16.mxu0 0
        %2008 = vmatmul.mubr.bf16.gmra.mrb[0].mxu0 %v1044
        %v2009 = vpop.f32.mrb[0].mxu0
        %v2010 = vadd.f32 0.0, %v2009
        %v2011 = vpop.f32.mrb[0].mxu0
        %v2012 = vpop.f32.mrb[0].mxu0
        %v2013 = vadd.f32 0.0, %v2012
        %v2014 = vpop.f32.mrb[0].mxu0
        %2015 = vmatprep.mubr.bf16.mxu0 0
        %2016 = vmatmul.mubr.bf16.gmra.mrb[0].mxu0 %v1045
        %v2017 = vpop.f32.mrb[0].mxu0
        %v2018 = vadd.f32 0.0, %v2017
        %v2019 = vpop.f32.mrb[0].mxu0
        %v2020 = vpop.f32.mrb[0].mxu0
        %v2021 = vadd.f32 0.0, %v2020
        %v2022 = vpop.f32.mrb[0].mxu0
        %2023 = vmatprep.mubr.bf16.mxu0 0
        %2024 = vmatmul.mubr.bf16.gmra.mrb[0].mxu0 %v1046
        %v2025 = vpop.f32.mrb[0].mxu0
        %v2026 = vadd.f32 0.0, %v2025
        %v2027 = vpop.f32.mrb[0].mxu0
        %v2028 = vpop.f32.mrb[0].mxu0
        %v2029 = vadd.f32 0.0, %v2028
        %v2030 = vpop.f32.mrb[0].mxu0
        %2031 = vmatprep.mubr.bf16.mxu0 0
        %2032 = vmatmul.mubr.bf16.gmra.mrb[0].mxu0 %v1047
        %v2033 = vpop.f32.mrb[0].mxu0
        %v2034 = vadd.f32 0.0, %v2033
        %v2035 = vpop.f32.mrb[0].mxu0
        %v2036 = vpop.f32.mrb[0].mxu0
        %v2037 = vadd.f32 0.0, %v2036
        %v2038 = vpop.f32.mrb[0].mxu0
        %2039 = vmatprep.mubr.bf16.mxu0 0
        %2040 = vmatmul.mubr.bf16.gmra.mrb[0].mxu0 %v1048
        %v2041 = vpop.f32.mrb[0].mxu0
        %v2042 = vadd.f32 0.0, %v2041
        %v2043 = vpop.f32.mrb[0].mxu0
        %v2044 = vpop.f32.mrb[0].mxu0
        %v2045 = vadd.f32 0.0, %v2044
        %v2046 = vpop.f32.mrb[0].mxu0
        %2047 = vmatprep.mubr.bf16.mxu0 0
        %2048 = vmatmul.mubr.bf16.gmra.mrb[0].mxu0 %v1049
        %v2049 = vpop.f32.mrb[0].mxu0
        %v2050 = vadd.f32 0.0, %v2049
        %v2051 = vpop.f32.mrb[0].mxu0
        %v2052 = vpop.f32.mrb[0].mxu0
        %v2053 = vadd.f32 0.0, %v2052
        %v2054 = vpop.f32.mrb[0].mxu0
        %2055 = vmatprep.mubr.bf16.mxu0 0
        %2056 = vmatmul.mubr.bf16.gmra.mrb[0].mxu0 %v1050
        %v2057 = vpop.f32.mrb[0].mxu0
        %v2058 = vadd.f32 0.0, %v2057
        %v2059 = vpop.f32.mrb[0].mxu0
        %v2060 = vpop.f32.mrb[0].mxu0
        %v2061 = vadd.f32 0.0, %v2060
        %v2062 = vpop.f32.mrb[0].mxu0
        %2063 = vmatprep.mubr.bf16.mxu0 0
        %2064 = vmatmul.mubr.bf16.gmra.mrb[0].mxu0 %v1051
        %v2065 = vpop.f32.mrb[0].mxu0
        %v2066 = vadd.f32 0.0, %v2065
        %v2067 = vpop.f32.mrb[0].mxu0
        %v2068 = vpop.f32.mrb[0].mxu0
        %v2069 = vadd.f32 0.0, %v2068
        %v2070 = vpop.f32.mrb[0].mxu0
        %2071 = vdwg.mxu0
        %v2072 = vadd.f32 %v1894, %v2010
        %v2073 = vadd.f32 %v1895, %v2013
        %v2074 = vadd.f32 %v1896, %v2018
        %v2075 = vadd.f32 %v1897, %v2021
        %v2076 = vadd.f32 %v1898, %v2026
        %v2077 = vadd.f32 %v1899, %v2029
        %v2078 = vadd.f32 %v1900, %v2034
        %v2079 = vadd.f32 %v1901, %v2037
        %v2080 = vadd.f32 %v1902, %v2042
        %v2081 = vadd.f32 %v1903, %v2045
        %v2082 = vadd.f32 %v1904, %v2050
        %v2083 = vadd.f32 %v1905, %v2053
        %v2084 = vadd.f32 %v1906, %v2058
        %v2085 = vadd.f32 %v1907, %v2061
        %v2086 = vadd.f32 %v1908, %v2066
        %v2087 = vadd.f32 %v1909, %v2069
        %s2088 = scalar_lea.vmem [#allocation7], 384
        %v2089 = vld [vmem:[%s2088] sm:$0xf]
        %v2090 = vld [vmem:[%s2088 + $0x4] sm:$0xf]
        %v2091 = vld [vmem:[%s2088 + $0x8] sm:$0xf]
        %v2092 = vld [vmem:[%s2088 + $0xc] sm:$0xf]
        %v2093 = vld [vmem:[%s2088 + $0x10] sm:$0xf]
        %v2094 = vld [vmem:[%s2088 + $0x14] sm:$0xf]
        %v2095 = vld [vmem:[%s2088 + $0x18] sm:$0xf]
        %v2096 = vld [vmem:[%s2088 + $0x1c] sm:$0xf]
        %v2097 = vld [vmem:[%s2088 + $0x20] sm:$0xf]
        %v2098 = vld [vmem:[%s2088 + $0x24] sm:$0xf]
        %v2099 = vld [vmem:[%s2088 + $0x28] sm:$0xf]
        %v2100 = vld [vmem:[%s2088 + $0x2c] sm:$0xf]
        %v2101 = vld [vmem:[%s2088 + $0x30] sm:$0xf]
        %v2102 = vld [vmem:[%s2088 + $0x34] sm:$0xf]
        %v2103 = vld [vmem:[%s2088 + $0x38] sm:$0xf]
        %v2104 = vld [vmem:[%s2088 + $0x3c] sm:$0xf]
        %v2121 = vunpack.c.l.b16 %v2089
        %v2122 = vunpack.c.l.b16 %v2090
        %v2123 = vunpack.c.l.b16 %v2091
        %v2124 = vunpack.c.l.b16 %v2092
        %v2125 = vunpack.c.l.b16 %v2093
        %v2126 = vunpack.c.l.b16 %v2094
        %v2127 = vunpack.c.l.b16 %v2095
        %v2128 = vunpack.c.l.b16 %v2096
        %v2129 = vunpack.c.l.b16 %v2097
        %v2130 = vunpack.c.l.b16 %v2098
        %v2131 = vunpack.c.l.b16 %v2099
        %v2132 = vunpack.c.l.b16 %v2100
        %v2133 = vunpack.c.l.b16 %v2101
        %v2134 = vunpack.c.l.b16 %v2102
        %v2135 = vunpack.c.l.b16 %v2103
        %v2136 = vunpack.c.l.b16 %v2104
        %v2137 = vpack.c.b16 %v2122, %v2121
        %v2138 = vpack.c.b16 %v2124, %v2123
        %v2139 = vpack.c.b16 %v2126, %v2125
        %v2140 = vpack.c.b16 %v2128, %v2127
        %v2141 = vpack.c.b16 %v2130, %v2129
        %v2142 = vpack.c.b16 %v2132, %v2131
        %v2143 = vpack.c.b16 %v2134, %v2133
        %v2144 = vpack.c.b16 %v2136, %v2135
        %2153 = vmatprep.subr.bf16.mxu0 0
        %2154 = vmatpush1.bf16.msra.mxu0 %v2137
        %2155 = vmatprep.subr.bf16.mxu0 0
        %2156 = vmatpush1.bf16.msra.mxu0 %v2138
        %2157 = vmatprep.subr.bf16.mxu0 0
        %2158 = vmatpush1.bf16.msra.mxu0 %v2139
        %2159 = vmatprep.subr.bf16.mxu0 0
        %2160 = vmatpush1.bf16.msra.mxu0 %v2140
        %2161 = vmatprep.subr.bf16.mxu0 0
        %2162 = vmatpush1.bf16.msra.mxu0 %v2141
        %2163 = vmatprep.subr.bf16.mxu0 0
        %2164 = vmatpush1.bf16.msra.mxu0 %v2142
        %2165 = vmatprep.subr.bf16.mxu0 0
        %2166 = vmatpush1.bf16.msra.mxu0 %v2143
        %2167 = vmatprep.subr.bf16.mxu0 0
        %2168 = vmatpush1.bf16.msra.mxu0 %v2144
        %2169 = vmatprep.subr.bf16.mxu0 0
        %2170 = vmatpush1.bf16.msra.mxu0 0
        %2171 = vmatprep.subr.bf16.mxu0 0
        %2172 = vmatpush1.bf16.msra.mxu0 0
        %2173 = vmatprep.subr.bf16.mxu0 0
        %2174 = vmatpush1.bf16.msra.mxu0 0
        %2175 = vmatprep.subr.bf16.mxu0 0
        %2176 = vmatpush1.bf16.msra.mxu0 0
        %2177 = vmatprep.subr.bf16.mxu0 0
        %2178 = vmatpush1.bf16.msra.mxu0 0
        %2179 = vmatprep.subr.bf16.mxu0 0
        %2180 = vmatpush1.bf16.msra.mxu0 0
        %2181 = vmatprep.subr.bf16.mxu0 0
        %2182 = vmatpush1.bf16.msra.mxu0 0
        %2183 = vmatprep.subr.bf16.mxu0 0
        %2184 = vmatpush1.bf16.msra.mxu0 0
        %2185 = vmatprep.mubr.bf16.mxu0 0
        %2186 = vmatmul.mubr.bf16.gmra.mrb[0].mxu0 %v1002
        %v2187 = vpop.f32.mrb[0].mxu0
        %v2188 = vadd.f32 0.0, %v2187
        %v2189 = vpop.f32.mrb[0].mxu0
        %v2190 = vpop.f32.mrb[0].mxu0
        %v2191 = vadd.f32 0.0, %v2190
        %v2192 = vpop.f32.mrb[0].mxu0
        %2193 = vmatprep.mubr.bf16.mxu0 0
        %2194 = vmatmul.mubr.bf16.gmra.mrb[0].mxu0 %v1003
        %v2195 = vpop.f32.mrb[0].mxu0
        %v2196 = vadd.f32 0.0, %v2195
        %v2197 = vpop.f32.mrb[0].mxu0
        %v2198 = vpop.f32.mrb[0].mxu0
        %v2199 = vadd.f32 0.0, %v2198
        %v2200 = vpop.f32.mrb[0].mxu0
        %2201 = vmatprep.mubr.bf16.mxu0 0
        %2202 = vmatmul.mubr.bf16.gmra.mrb[0].mxu0 %v1004
        %v2203 = vpop.f32.mrb[0].mxu0
        %v2204 = vadd.f32 0.0, %v2203
        %v2205 = vpop.f32.mrb[0].mxu0
        %v2206 = vpop.f32.mrb[0].mxu0
        %v2207 = vadd.f32 0.0, %v2206
        %v2208 = vpop.f32.mrb[0].mxu0
        %2209 = vmatprep.mubr.bf16.mxu0 0
        %2210 = vmatmul.mubr.bf16.gmra.mrb[0].mxu0 %v1005
        %v2211 = vpop.f32.mrb[0].mxu0
        %v2212 = vadd.f32 0.0, %v2211
        %v2213 = vpop.f32.mrb[0].mxu0
        %v2214 = vpop.f32.mrb[0].mxu0
        %v2215 = vadd.f32 0.0, %v2214
        %v2216 = vpop.f32.mrb[0].mxu0
        %2217 = vmatprep.mubr.bf16.mxu0 0
        %2218 = vmatmul.mubr.bf16.gmra.mrb[0].mxu0 %v1006
        %v2219 = vpop.f32.mrb[0].mxu0
        %v2220 = vadd.f32 0.0, %v2219
        %v2221 = vpop.f32.mrb[0].mxu0
        %v2222 = vpop.f32.mrb[0].mxu0
        %v2223 = vadd.f32 0.0, %v2222
        %v2224 = vpop.f32.mrb[0].mxu0
        %2225 = vmatprep.mubr.bf16.mxu0 0
        %2226 = vmatmul.mubr.bf16.gmra.mrb[0].mxu0 %v1007
        %v2227 = vpop.f32.mrb[0].mxu0
        %v2228 = vadd.f32 0.0, %v2227
        %v2229 = vpop.f32.mrb[0].mxu0
        %v2230 = vpop.f32.mrb[0].mxu0
        %v2231 = vadd.f32 0.0, %v2230
        %v2232 = vpop.f32.mrb[0].mxu0
        %2233 = vmatprep.mubr.bf16.mxu0 0
        %2234 = vmatmul.mubr.bf16.gmra.mrb[0].mxu0 %v1008
        %v2235 = vpop.f32.mrb[0].mxu0
        %v2236 = vadd.f32 0.0, %v2235
        %v2237 = vpop.f32.mrb[0].mxu0
        %v2238 = vpop.f32.mrb[0].mxu0
        %v2239 = vadd.f32 0.0, %v2238
        %v2240 = vpop.f32.mrb[0].mxu0
        %2241 = vmatprep.mubr.bf16.mxu0 0
        %2242 = vmatmul.mubr.bf16.gmra.mrb[0].mxu0 %v1009
        %v2243 = vpop.f32.mrb[0].mxu0
        %v2244 = vadd.f32 0.0, %v2243
        %v2245 = vpop.f32.mrb[0].mxu0
        %v2246 = vpop.f32.mrb[0].mxu0
        %v2247 = vadd.f32 0.0, %v2246
        %v2248 = vpop.f32.mrb[0].mxu0
        %2249 = vdwg.mxu0
        %v2250 = vadd.f32 %v2072, %v2188
        %v2251 = vadd.f32 %v2073, %v2191
        %v2252 = vadd.f32 %v2074, %v2196
        %v2253 = vadd.f32 %v2075, %v2199
        %v2254 = vadd.f32 %v2076, %v2204
        %v2255 = vadd.f32 %v2077, %v2207
        %v2256 = vadd.f32 %v2078, %v2212
        %v2257 = vadd.f32 %v2079, %v2215
        %v2258 = vadd.f32 %v2080, %v2220
        %v2259 = vadd.f32 %v2081, %v2223
        %v2260 = vadd.f32 %v2082, %v2228
        %v2261 = vadd.f32 %v2083, %v2231
        %v2262 = vadd.f32 %v2084, %v2236
        %v2263 = vadd.f32 %v2085, %v2239
        %v2264 = vadd.f32 %v2086, %v2244
        %v2265 = vadd.f32 %v2087, %v2247
        %s2266 = scalar_lea.vmem [#allocation7], 448
        %v2267 = vld [vmem:[%s2266] sm:$0xf]
        %v2268 = vld [vmem:[%s2266 + $0x4] sm:$0xf]
        %v2269 = vld [vmem:[%s2266 + $0x8] sm:$0xf]
        %v2270 = vld [vmem:[%s2266 + $0xc] sm:$0xf]
        %v2271 = vld [vmem:[%s2266 + $0x10] sm:$0xf]
        %v2272 = vld [vmem:[%s2266 + $0x14] sm:$0xf]
        %v2273 = vld [vmem:[%s2266 + $0x18] sm:$0xf]
        %v2274 = vld [vmem:[%s2266 + $0x1c] sm:$0xf]
        %v2275 = vld [vmem:[%s2266 + $0x20] sm:$0xf]
        %v2276 = vld [vmem:[%s2266 + $0x24] sm:$0xf]
        %v2277 = vld [vmem:[%s2266 + $0x28] sm:$0xf]
        %v2278 = vld [vmem:[%s2266 + $0x2c] sm:$0xf]
        %v2279 = vld [vmem:[%s2266 + $0x30] sm:$0xf]
        %v2280 = vld [vmem:[%s2266 + $0x34] sm:$0xf]
        %v2281 = vld [vmem:[%s2266 + $0x38] sm:$0xf]
        %v2282 = vld [vmem:[%s2266 + $0x3c] sm:$0xf]
        %v2299 = vunpack.c.l.b16 %v2267
        %v2300 = vunpack.c.l.b16 %v2268
        %v2301 = vunpack.c.l.b16 %v2269
        %v2302 = vunpack.c.l.b16 %v2270
        %v2303 = vunpack.c.l.b16 %v2271
        %v2304 = vunpack.c.l.b16 %v2272
        %v2305 = vunpack.c.l.b16 %v2273
        %v2306 = vunpack.c.l.b16 %v2274
        %v2307 = vunpack.c.l.b16 %v2275
        %v2308 = vunpack.c.l.b16 %v2276
        %v2309 = vunpack.c.l.b16 %v2277
        %v2310 = vunpack.c.l.b16 %v2278
        %v2311 = vunpack.c.l.b16 %v2279
        %v2312 = vunpack.c.l.b16 %v2280
        %v2313 = vunpack.c.l.b16 %v2281
        %v2314 = vunpack.c.l.b16 %v2282
        %v2315 = vpack.c.b16 %v2300, %v2299
        %v2316 = vpack.c.b16 %v2302, %v2301
        %v2317 = vpack.c.b16 %v2304, %v2303
        %v2318 = vpack.c.b16 %v2306, %v2305
        %v2319 = vpack.c.b16 %v2308, %v2307
        %v2320 = vpack.c.b16 %v2310, %v2309
        %v2321 = vpack.c.b16 %v2312, %v2311
        %v2322 = vpack.c.b16 %v2314, %v2313
        %2331 = vmatprep.subr.bf16.mxu0 0
        %2332 = vmatpush1.bf16.msra.mxu0 %v2315
        %2333 = vmatprep.subr.bf16.mxu0 0
        %2334 = vmatpush1.bf16.msra.mxu0 %v2316
        %2335 = vmatprep.subr.bf16.mxu0 0
        %2336 = vmatpush1.bf16.msra.mxu0 %v2317
        %2337 = vmatprep.subr.bf16.mxu0 0
        %2338 = vmatpush1.bf16.msra.mxu0 %v2318
        %2339 = vmatprep.subr.bf16.mxu0 0
        %2340 = vmatpush1.bf16.msra.mxu0 %v2319
        %2341 = vmatprep.subr.bf16.mxu0 0
        %2342 = vmatpush1.bf16.msra.mxu0 %v2320
        %2343 = vmatprep.subr.bf16.mxu0 0
        %2344 = vmatpush1.bf16.msra.mxu0 %v2321
        %2345 = vmatprep.subr.bf16.mxu0 0
        %2346 = vmatpush1.bf16.msra.mxu0 %v2322
        %2347 = vmatprep.subr.bf16.mxu0 0
        %2348 = vmatpush1.bf16.msra.mxu0 0
        %2349 = vmatprep.subr.bf16.mxu0 0
        %2350 = vmatpush1.bf16.msra.mxu0 0
        %2351 = vmatprep.subr.bf16.mxu0 0
        %2352 = vmatpush1.bf16.msra.mxu0 0
        %2353 = vmatprep.subr.bf16.mxu0 0
        %2354 = vmatpush1.bf16.msra.mxu0 0
        %2355 = vmatprep.subr.bf16.mxu0 0
        %2356 = vmatpush1.bf16.msra.mxu0 0
        %2357 = vmatprep.subr.bf16.mxu0 0
        %2358 = vmatpush1.bf16.msra.mxu0 0
        %2359 = vmatprep.subr.bf16.mxu0 0
        %2360 = vmatpush1.bf16.msra.mxu0 0
        %2361 = vmatprep.subr.bf16.mxu0 0
        %2362 = vmatpush1.bf16.msra.mxu0 0
        %2363 = vmatprep.mubr.bf16.mxu0 0
        %2364 = vmatmul.mubr.bf16.gmra.mrb[0].mxu0 %v909
        %v2365 = vpop.f32.mrb[0].mxu0
        %v2366 = vadd.f32 0.0, %v2365
        %v2367 = vpop.f32.mrb[0].mxu0
        %v2368 = vpop.f32.mrb[0].mxu0
        %v2369 = vadd.f32 0.0, %v2368
        %v2370 = vpop.f32.mrb[0].mxu0
        %2371 = vmatprep.mubr.bf16.mxu0 0
        %2372 = vmatmul.mubr.bf16.gmra.mrb[0].mxu0 %v910
        %v2373 = vpop.f32.mrb[0].mxu0
        %v2374 = vadd.f32 0.0, %v2373
        %v2375 = vpop.f32.mrb[0].mxu0
        %v2376 = vpop.f32.mrb[0].mxu0
        %v2377 = vadd.f32 0.0, %v2376
        %v2378 = vpop.f32.mrb[0].mxu0
        %2379 = vmatprep.mubr.bf16.mxu0 0
        %2380 = vmatmul.mubr.bf16.gmra.mrb[0].mxu0 %v911
        %v2381 = vpop.f32.mrb[0].mxu0
        %v2382 = vadd.f32 0.0, %v2381
        %v2383 = vpop.f32.mrb[0].mxu0
        %v2384 = vpop.f32.mrb[0].mxu0
        %v2385 = vadd.f32 0.0, %v2384
        %v2386 = vpop.f32.mrb[0].mxu0
        %2387 = vmatprep.mubr.bf16.mxu0 0
        %2388 = vmatmul.mubr.bf16.gmra.mrb[0].mxu0 %v912
        %v2389 = vpop.f32.mrb[0].mxu0
        %v2390 = vadd.f32 0.0, %v2389
        %v2391 = vpop.f32.mrb[0].mxu0
        %v2392 = vpop.f32.mrb[0].mxu0
        %v2393 = vadd.f32 0.0, %v2392
        %v2394 = vpop.f32.mrb[0].mxu0
        %2395 = vmatprep.mubr.bf16.mxu0 0
        %2396 = vmatmul.mubr.bf16.gmra.mrb[0].mxu0 %v913
        %v2397 = vpop.f32.mrb[0].mxu0
        %v2398 = vadd.f32 0.0, %v2397
        %v2399 = vpop.f32.mrb[0].mxu0
        %v2400 = vpop.f32.mrb[0].mxu0
        %v2401 = vadd.f32 0.0, %v2400
        %v2402 = vpop.f32.mrb[0].mxu0
        %2403 = vmatprep.mubr.bf16.mxu0 0
        %2404 = vmatmul.mubr.bf16.gmra.mrb[0].mxu0 %v914
        %v2405 = vpop.f32.mrb[0].mxu0
        %v2406 = vadd.f32 0.0, %v2405
        %v2407 = vpop.f32.mrb[0].mxu0
        %v2408 = vpop.f32.mrb[0].mxu0
        %v2409 = vadd.f32 0.0, %v2408
        %v2410 = vpop.f32.mrb[0].mxu0
        %2411 = vmatprep.mubr.bf16.mxu0 0
        %2412 = vmatmul.mubr.bf16.gmra.mrb[0].mxu0 %v915
        %v2413 = vpop.f32.mrb[0].mxu0
        %v2414 = vadd.f32 0.0, %v2413
        %v2415 = vpop.f32.mrb[0].mxu0
        %v2416 = vpop.f32.mrb[0].mxu0
        %v2417 = vadd.f32 0.0, %v2416
        %v2418 = vpop.f32.mrb[0].mxu0
        %2419 = vmatprep.mubr.bf16.mxu0 0
        %2420 = vmatmul.mubr.bf16.gmra.mrb[0].mxu0 %v916
        %v2421 = vpop.f32.mrb[0].mxu0
        %v2422 = vadd.f32 0.0, %v2421
        %v2423 = vpop.f32.mrb[0].mxu0
        %v2424 = vpop.f32.mrb[0].mxu0
        %v2425 = vadd.f32 0.0, %v2424
        %v2426 = vpop.f32.mrb[0].mxu0
        %2427 = vdwg.mxu0
        %v2428 = vadd.f32 %v2250, %v2366
        %v2429 = vadd.f32 %v2251, %v2369
        %v2430 = vadd.f32 %v2252, %v2374
        %v2431 = vadd.f32 %v2253, %v2377
        %v2432 = vadd.f32 %v2254, %v2382
        %v2433 = vadd.f32 %v2255, %v2385
        %v2434 = vadd.f32 %v2256, %v2390
        %v2435 = vadd.f32 %v2257, %v2393
        %v2436 = vadd.f32 %v2258, %v2398
        %v2437 = vadd.f32 %v2259, %v2401
        %v2438 = vadd.f32 %v2260, %v2406
        %v2439 = vadd.f32 %v2261, %v2409
        %v2440 = vadd.f32 %v2262, %v2414
        %v2441 = vadd.f32 %v2263, %v2417
        %v2442 = vadd.f32 %v2264, %v2422
        %v2443 = vadd.f32 %v2265, %v2425
        %s2444 = scalar_lea.vmem [#allocation7], 512
        %v2445 = vld [vmem:[%s2444] sm:$0xf]
        %v2446 = vld [vmem:[%s2444 + $0x4] sm:$0xf]
        %v2447 = vld [vmem:[%s2444 + $0x8] sm:$0xf]
        %v2448 = vld [vmem:[%s2444 + $0xc] sm:$0xf]
        %v2449 = vld [vmem:[%s2444 + $0x10] sm:$0xf]
        %v2450 = vld [vmem:[%s2444 + $0x14] sm:$0xf]
        %v2451 = vld [vmem:[%s2444 + $0x18] sm:$0xf]
        %v2452 = vld [vmem:[%s2444 + $0x1c] sm:$0xf]
        %v2453 = vld [vmem:[%s2444 + $0x20] sm:$0xf]
        %v2454 = vld [vmem:[%s2444 + $0x24] sm:$0xf]
        %v2455 = vld [vmem:[%s2444 + $0x28] sm:$0xf]
        %v2456 = vld [vmem:[%s2444 + $0x2c] sm:$0xf]
        %v2457 = vld [vmem:[%s2444 + $0x30] sm:$0xf]
        %v2458 = vld [vmem:[%s2444 + $0x34] sm:$0xf]
        %v2459 = vld [vmem:[%s2444 + $0x38] sm:$0xf]
        %v2460 = vld [vmem:[%s2444 + $0x3c] sm:$0xf]
        %v2477 = vunpack.c.l.b16 %v2445
        %v2478 = vunpack.c.l.b16 %v2446
        %v2479 = vunpack.c.l.b16 %v2447
        %v2480 = vunpack.c.l.b16 %v2448
        %v2481 = vunpack.c.l.b16 %v2449
        %v2482 = vunpack.c.l.b16 %v2450
        %v2483 = vunpack.c.l.b16 %v2451
        %v2484 = vunpack.c.l.b16 %v2452
        %v2485 = vunpack.c.l.b16 %v2453
        %v2486 = vunpack.c.l.b16 %v2454
        %v2487 = vunpack.c.l.b16 %v2455
        %v2488 = vunpack.c.l.b16 %v2456
        %v2489 = vunpack.c.l.b16 %v2457
        %v2490 = vunpack.c.l.b16 %v2458
        %v2491 = vunpack.c.l.b16 %v2459
        %v2492 = vunpack.c.l.b16 %v2460
        %v2493 = vpack.c.b16 %v2478, %v2477
        %v2494 = vpack.c.b16 %v2480, %v2479
        %v2495 = vpack.c.b16 %v2482, %v2481
        %v2496 = vpack.c.b16 %v2484, %v2483
        %v2497 = vpack.c.b16 %v2486, %v2485
        %v2498 = vpack.c.b16 %v2488, %v2487
        %v2499 = vpack.c.b16 %v2490, %v2489
        %v2500 = vpack.c.b16 %v2492, %v2491
        %2509 = vmatprep.subr.bf16.mxu0 0
        %2510 = vmatpush1.bf16.msra.mxu0 %v2493
        %2511 = vmatprep.subr.bf16.mxu0 0
        %2512 = vmatpush1.bf16.msra.mxu0 %v2494
        %2513 = vmatprep.subr.bf16.mxu0 0
        %2514 = vmatpush1.bf16.msra.mxu0 %v2495
        %2515 = vmatprep.subr.bf16.mxu0 0
        %2516 = vmatpush1.bf16.msra.mxu0 %v2496
        %2517 = vmatprep.subr.bf16.mxu0 0
        %2518 = vmatpush1.bf16.msra.mxu0 %v2497
        %2519 = vmatprep.subr.bf16.mxu0 0
        %2520 = vmatpush1.bf16.msra.mxu0 %v2498
        %2521 = vmatprep.subr.bf16.mxu0 0
        %2522 = vmatpush1.bf16.msra.mxu0 %v2499
        %2523 = vmatprep.subr.bf16.mxu0 0
        %2524 = vmatpush1.bf16.msra.mxu0 %v2500
        %2525 = vmatprep.subr.bf16.mxu0 0
        %2526 = vmatpush1.bf16.msra.mxu0 0
        %2527 = vmatprep.subr.bf16.mxu0 0
        %2528 = vmatpush1.bf16.msra.mxu0 0
        %2529 = vmatprep.subr.bf16.mxu0 0
        %2530 = vmatpush1.bf16.msra.mxu0 0
        %2531 = vmatprep.subr.bf16.mxu0 0
        %2532 = vmatpush1.bf16.msra.mxu0 0
        %2533 = vmatprep.subr.bf16.mxu0 0
        %2534 = vmatpush1.bf16.msra.mxu0 0
        %2535 = vmatprep.subr.bf16.mxu0 0
        %2536 = vmatpush1.bf16.msra.mxu0 0
        %2537 = vmatprep.subr.bf16.mxu0 0
        %2538 = vmatpush1.bf16.msra.mxu0 0
        %2539 = vmatprep.subr.bf16.mxu0 0
        %2540 = vmatpush1.bf16.msra.mxu0 0
        %2541 = vmatprep.mubr.bf16.mxu0 0
        %2542 = vmatmul.mubr.bf16.gmra.mrb[0].mxu0 %v1045
        %v2543 = vpop.f32.mrb[0].mxu0
        %v2544 = vadd.f32 0.0, %v2543
        %v2545 = vpop.f32.mrb[0].mxu0
        %v2546 = vpop.f32.mrb[0].mxu0
        %v2547 = vadd.f32 0.0, %v2546
        %v2548 = vpop.f32.mrb[0].mxu0
        %2549 = vmatprep.mubr.bf16.mxu0 0
        %2550 = vmatmul.mubr.bf16.gmra.mrb[0].mxu0 %v1046
        %v2551 = vpop.f32.mrb[0].mxu0
        %v2552 = vadd.f32 0.0, %v2551
        %v2553 = vpop.f32.mrb[0].mxu0
        %v2554 = vpop.f32.mrb[0].mxu0
        %v2555 = vadd.f32 0.0, %v2554
        %v2556 = vpop.f32.mrb[0].mxu0
        %2557 = vmatprep.mubr.bf16.mxu0 0
        %2558 = vmatmul.mubr.bf16.gmra.mrb[0].mxu0 %v1047
        %v2559 = vpop.f32.mrb[0].mxu0
        %v2560 = vadd.f32 0.0, %v2559
        %v2561 = vpop.f32.mrb[0].mxu0
        %v2562 = vpop.f32.mrb[0].mxu0
        %v2563 = vadd.f32 0.0, %v2562
        %v2564 = vpop.f32.mrb[0].mxu0
        %2565 = vmatprep.mubr.bf16.mxu0 0
        %2566 = vmatmul.mubr.bf16.gmra.mrb[0].mxu0 %v1048
        %v2567 = vpop.f32.mrb[0].mxu0
        %v2568 = vadd.f32 0.0, %v2567
        %v2569 = vpop.f32.mrb[0].mxu0
        %v2570 = vpop.f32.mrb[0].mxu0
        %v2571 = vadd.f32 0.0, %v2570
        %v2572 = vpop.f32.mrb[0].mxu0
        %2573 = vmatprep.mubr.bf16.mxu0 0
        %2574 = vmatmul.mubr.bf16.gmra.mrb[0].mxu0 %v1049
        %v2575 = vpop.f32.mrb[0].mxu0
        %v2576 = vadd.f32 0.0, %v2575
        %v2577 = vpop.f32.mrb[0].mxu0
        %v2578 = vpop.f32.mrb[0].mxu0
        %v2579 = vadd.f32 0.0, %v2578
        %v2580 = vpop.f32.mrb[0].mxu0
        %2581 = vmatprep.mubr.bf16.mxu0 0
        %2582 = vmatmul.mubr.bf16.gmra.mrb[0].mxu0 %v1050
        %v2583 = vpop.f32.mrb[0].mxu0
        %v2584 = vadd.f32 0.0, %v2583
        %v2585 = vpop.f32.mrb[0].mxu0
        %v2586 = vpop.f32.mrb[0].mxu0
        %v2587 = vadd.f32 0.0, %v2586
        %v2588 = vpop.f32.mrb[0].mxu0
        %2589 = vmatprep.mubr.bf16.mxu0 0
        %2590 = vmatmul.mubr.bf16.gmra.mrb[0].mxu0 %v1051
        %v2591 = vpop.f32.mrb[0].mxu0
        %v2592 = vadd.f32 0.0, %v2591
        %v2593 = vpop.f32.mrb[0].mxu0
        %v2594 = vpop.f32.mrb[0].mxu0
        %v2595 = vadd.f32 0.0, %v2594
        %v2596 = vpop.f32.mrb[0].mxu0
        %2597 = vmatprep.mubr.bf16.mxu0 0
        %2598 = vmatmul.mubr.bf16.gmra.mrb[0].mxu0 %v1052
        %v2599 = vpop.f32.mrb[0].mxu0
        %v2600 = vadd.f32 0.0, %v2599
        %v2601 = vpop.f32.mrb[0].mxu0
        %v2602 = vpop.f32.mrb[0].mxu0
        %v2603 = vadd.f32 0.0, %v2602
        %v2604 = vpop.f32.mrb[0].mxu0
        %2605 = vdwg.mxu0
        %v2606 = vadd.f32 %v2428, %v2544
        %v2607 = vadd.f32 %v2429, %v2547
        %v2608 = vadd.f32 %v2430, %v2552
        %v2609 = vadd.f32 %v2431, %v2555
        %v2610 = vadd.f32 %v2432, %v2560
        %v2611 = vadd.f32 %v2433, %v2563
        %v2612 = vadd.f32 %v2434, %v2568
        %v2613 = vadd.f32 %v2435, %v2571
        %v2614 = vadd.f32 %v2436, %v2576
        %v2615 = vadd.f32 %v2437, %v2579
        %v2616 = vadd.f32 %v2438, %v2584
        %v2617 = vadd.f32 %v2439, %v2587
        %v2618 = vadd.f32 %v2440, %v2592
        %v2619 = vadd.f32 %v2441, %v2595
        %v2620 = vadd.f32 %v2442, %v2600
        %v2621 = vadd.f32 %v2443, %v2603
        %v2622 = vld [vmem:[%s5] sm:$0x1]
        %v2624 = vlaneseq
        %v2625 = vshrl.u32 %v2624, 7
        %v2626 = vsub.s32 0, %v2625
        %v2627 = vrot.slane %v2622, %v2626
        %v2629 = vmul.f32 %v2606, %v2627
        %v2630 = vmul.f32 %v2607, %v2627
        %v2631 = vmul.f32 %v2608, %v2627
        %v2632 = vmul.f32 %v2609, %v2627
        %v2633 = vmul.f32 %v2610, %v2627
        %v2634 = vmul.f32 %v2611, %v2627
        %v2635 = vmul.f32 %v2612, %v2627
        %v2636 = vmul.f32 %v2613, %v2627
        %v2637 = vmul.f32 %v2614, %v2627
        %v2638 = vmul.f32 %v2615, %v2627
        %v2639 = vmul.f32 %v2616, %v2627
        %v2640 = vmul.f32 %v2617, %v2627
        %v2641 = vmul.f32 %v2618, %v2627
        %v2642 = vmul.f32 %v2619, %v2627
        %v2643 = vmul.f32 %v2620, %v2627
        %v2644 = vmul.f32 %v2621, %v2627
        %v2645 = vld [vmem:[%s6] sm:$0x1]
        %v2647 = vlaneseq
        %v2648 = vshrl.u32 %v2647, 7
        %v2649 = vsub.s32 0, %v2648
        %v2650 = vrot.slane %v2645, %v2649
        %v2652 = vadd.f32 %v2629, %v2650
        %v2653 = vadd.f32 %v2630, %v2650
        %v2654 = vadd.f32 %v2631, %v2650
        %v2655 = vadd.f32 %v2632, %v2650
        %v2656 = vadd.f32 %v2633, %v2650
        %v2657 = vadd.f32 %v2634, %v2650
        %v2658 = vadd.f32 %v2635, %v2650
        %v2659 = vadd.f32 %v2636, %v2650
        %v2660 = vadd.f32 %v2637, %v2650
        %v2661 = vadd.f32 %v2638, %v2650
        %v2662 = vadd.f32 %v2639, %v2650
        %v2663 = vadd.f32 %v2640, %v2650
        %v2664 = vadd.f32 %v2641, %v2650
        %v2665 = vadd.f32 %v2642, %v2650
        %v2666 = vadd.f32 %v2643, %v2650
        %v2667 = vadd.f32 %v2644, %v2650
        %v2668 = vmax.f32 %v2652, 0.0
        %v2669 = vmax.f32 %v2653, 0.0
        %v2670 = vmax.f32 %v2654, 0.0
        %v2671 = vmax.f32 %v2655, 0.0
        %v2672 = vmax.f32 %v2656, 0.0
        %v2673 = vmax.f32 %v2657, 0.0
        %v2674 = vmax.f32 %v2658, 0.0
        %v2675 = vmax.f32 %v2659, 0.0
        %v2676 = vmax.f32 %v2660, 0.0
        %v2677 = vmax.f32 %v2661, 0.0
        %v2678 = vmax.f32 %v2662, 0.0
        %v2679 = vmax.f32 %v2663, 0.0
        %v2680 = vmax.f32 %v2664, 0.0
        %v2681 = vmax.f32 %v2665, 0.0
        %v2682 = vmax.f32 %v2666, 0.0
        %v2683 = vmax.f32 %v2667, 0.0
        %v2684 = vpack.c.bf16 %v2669, %v2668
        %v2685 = vpack.c.bf16 %v2671, %v2670
        %v2686 = vpack.c.bf16 %v2673, %v2672
        %v2687 = vpack.c.bf16 %v2675, %v2674
        %v2688 = vpack.c.bf16 %v2677, %v2676
        %v2689 = vpack.c.bf16 %v2679, %v2678
        %v2690 = vpack.c.bf16 %v2681, %v2680
        %v2691 = vpack.c.bf16 %v2683, %v2682
        %v2692 = vld [vmem:[#allocation8] sm:$0xf]
        %v2693 = vld [vmem:[#allocation8 + $0x4] sm:$0xf]
        %v2694 = vld [vmem:[#allocation8 + $0x8] sm:$0xf]
        %v2695 = vld [vmem:[#allocation8 + $0xc] sm:$0xf]
        %v2696 = vld [vmem:[#allocation8 + $0x10] sm:$0xf]
        %v2697 = vld [vmem:[#allocation8 + $0x14] sm:$0xf]
        %v2698 = vld [vmem:[#allocation8 + $0x18] sm:$0xf]
        %v2699 = vld [vmem:[#allocation8 + $0x1c] sm:$0xf]
        %v2700 = vld [vmem:[#allocation8 + $0x20] sm:$0xf]
        %v2701 = vld [vmem:[#allocation8 + $0x24] sm:$0xf]
        %v2702 = vld [vmem:[#allocation8 + $0x28] sm:$0xf]
        %v2703 = vld [vmem:[#allocation8 + $0x2c] sm:$0xf]
        %v2704 = vld [vmem:[#allocation8 + $0x30] sm:$0xf]
        %v2705 = vld [vmem:[#allocation8 + $0x34] sm:$0xf]
        %v2706 = vld [vmem:[#allocation8 + $0x38] sm:$0xf]
        %v2707 = vld [vmem:[#allocation8 + $0x3c] sm:$0xf]
        %v2724 = vunpack.c.l.b16 %v2692
        %v2725 = vunpack.c.l.b16 %v2693
        %v2726 = vunpack.c.l.b16 %v2694
        %v2727 = vunpack.c.l.b16 %v2695
        %v2728 = vunpack.c.l.b16 %v2696
        %v2729 = vunpack.c.l.b16 %v2697
        %v2730 = vunpack.c.l.b16 %v2698
        %v2731 = vunpack.c.l.b16 %v2699
        %v2732 = vunpack.c.l.b16 %v2700
        %v2733 = vunpack.c.l.b16 %v2701
        %v2734 = vunpack.c.l.b16 %v2702
        %v2735 = vunpack.c.l.b16 %v2703
        %v2736 = vunpack.c.l.b16 %v2704
        %v2737 = vunpack.c.l.b16 %v2705
        %v2738 = vunpack.c.l.b16 %v2706
        %v2739 = vunpack.c.l.b16 %v2707
        %v2740 = vpack.c.b16 %v2725, %v2724
        %v2741 = vpack.c.b16 %v2727, %v2726
        %v2742 = vpack.c.b16 %v2729, %v2728
        %v2743 = vpack.c.b16 %v2731, %v2730
        %v2744 = vpack.c.b16 %v2733, %v2732
        %v2745 = vpack.c.b16 %v2735, %v2734
        %v2746 = vpack.c.b16 %v2737, %v2736
        %v2747 = vpack.c.b16 %v2739, %v2738
        %2756 = vmatprep.subr.bf16.mxu0 0
        %2757 = vmatpush1.bf16.msra.mxu0 %v2740
        %2758 = vmatprep.subr.bf16.mxu0 0
        %2759 = vmatpush1.bf16.msra.mxu0 %v2741
        %2760 = vmatprep.subr.bf16.mxu0 0
        %2761 = vmatpush1.bf16.msra.mxu0 %v2742
        %2762 = vmatprep.subr.bf16.mxu0 0
        %2763 = vmatpush1.bf16.msra.mxu0 %v2743
        %2764 = vmatprep.subr.bf16.mxu0 0
        %2765 = vmatpush1.bf16.msra.mxu0 %v2744
        %2766 = vmatprep.subr.bf16.mxu0 0
        %2767 = vmatpush1.bf16.msra.mxu0 %v2745
        %2768 = vmatprep.subr.bf16.mxu0 0
        %2769 = vmatpush1.bf16.msra.mxu0 %v2746
        %2770 = vmatprep.subr.bf16.mxu0 0
        %2771 = vmatpush1.bf16.msra.mxu0 %v2747
        %2772 = vmatprep.subr.bf16.mxu0 0
        %2773 = vmatpush1.bf16.msra.mxu0 0
        %2774 = vmatprep.subr.bf16.mxu0 0
        %2775 = vmatpush1.bf16.msra.mxu0 0
        %2776 = vmatprep.subr.bf16.mxu0 0
        %2777 = vmatpush1.bf16.msra.mxu0 0
        %2778 = vmatprep.subr.bf16.mxu0 0
        %2779 = vmatpush1.bf16.msra.mxu0 0
        %2780 = vmatprep.subr.bf16.mxu0 0
        %2781 = vmatpush1.bf16.msra.mxu0 0
        %2782 = vmatprep.subr.bf16.mxu0 0
        %2783 = vmatpush1.bf16.msra.mxu0 0
        %2784 = vmatprep.subr.bf16.mxu0 0
        %2785 = vmatpush1.bf16.msra.mxu0 0
        %2786 = vmatprep.subr.bf16.mxu0 0
        %2787 = vmatpush1.bf16.msra.mxu0 0
        %2788 = vmatprep.mubr.bf16.mxu0 0
        %2789 = vmatmul.mubr.bf16.gmra.mrb[0].mxu0 %v2684
        %v2790 = vpop.f32.mrb[0].mxu0
        %v2791 = vadd.f32 0.0, %v2790
        %v2792 = vpop.f32.mrb[0].mxu0
        %v2793 = vpop.f32.mrb[0].mxu0
        %v2794 = vadd.f32 0.0, %v2793
        %v2795 = vpop.f32.mrb[0].mxu0
        %2796 = vmatprep.mubr.bf16.mxu0 0
        %2797 = vmatmul.mubr.bf16.gmra.mrb[0].mxu0 %v2685
        %v2798 = vpop.f32.mrb[0].mxu0
        %v2799 = vadd.f32 0.0, %v2798
        %v2800 = vpop.f32.mrb[0].mxu0
        %v2801 = vpop.f32.mrb[0].mxu0
        %v2802 = vadd.f32 0.0, %v2801
        %v2803 = vpop.f32.mrb[0].mxu0
        %2804 = vmatprep.mubr.bf16.mxu0 0
        %2805 = vmatmul.mubr.bf16.gmra.mrb[0].mxu0 %v2686
        %v2806 = vpop.f32.mrb[0].mxu0
        %v2807 = vadd.f32 0.0, %v2806
        %v2808 = vpop.f32.mrb[0].mxu0
        %v2809 = vpop.f32.mrb[0].mxu0
        %v2810 = vadd.f32 0.0, %v2809
        %v2811 = vpop.f32.mrb[0].mxu0
        %2812 = vmatprep.mubr.bf16.mxu0 0
        %2813 = vmatmul.mubr.bf16.gmra.mrb[0].mxu0 %v2687
        %v2814 = vpop.f32.mrb[0].mxu0
        %v2815 = vadd.f32 0.0, %v2814
        %v2816 = vpop.f32.mrb[0].mxu0
        %v2817 = vpop.f32.mrb[0].mxu0
        %v2818 = vadd.f32 0.0, %v2817
        %v2819 = vpop.f32.mrb[0].mxu0
        %2820 = vmatprep.mubr.bf16.mxu0 0
        %2821 = vmatmul.mubr.bf16.gmra.mrb[0].mxu0 %v2688
        %v2822 = vpop.f32.mrb[0].mxu0
        %v2823 = vadd.f32 0.0, %v2822
        %v2824 = vpop.f32.mrb[0].mxu0
        %v2825 = vpop.f32.mrb[0].mxu0
        %v2826 = vadd.f32 0.0, %v2825
        %v2827 = vpop.f32.mrb[0].mxu0
        %2828 = vmatprep.mubr.bf16.mxu0 0
        %2829 = vmatmul.mubr.bf16.gmra.mrb[0].mxu0 %v2689
        %v2830 = vpop.f32.mrb[0].mxu0
        %v2831 = vadd.f32 0.0, %v2830
        %v2832 = vpop.f32.mrb[0].mxu0
        %v2833 = vpop.f32.mrb[0].mxu0
        %v2834 = vadd.f32 0.0, %v2833
        %v2835 = vpop.f32.mrb[0].mxu0
        %2836 = vmatprep.mubr.bf16.mxu0 0
        %2837 = vmatmul.mubr.bf16.gmra.mrb[0].mxu0 %v2690
        %v2838 = vpop.f32.mrb[0].mxu0
        %v2839 = vadd.f32 0.0, %v2838
        %v2840 = vpop.f32.mrb[0].mxu0
        %v2841 = vpop.f32.mrb[0].mxu0
        %v2842 = vadd.f32 0.0, %v2841
        %v2843 = vpop.f32.mrb[0].mxu0
        %2844 = vmatprep.mubr.bf16.mxu0 0
        %2845 = vmatmul.mubr.bf16.gmra.mrb[0].mxu0 %v2691
        %v2846 = vpop.f32.mrb[0].mxu0
        %v2847 = vadd.f32 0.0, %v2846
        %v2848 = vpop.f32.mrb[0].mxu0
        %v2849 = vpop.f32.mrb[0].mxu0
        %v2850 = vadd.f32 0.0, %v2849
        %v2851 = vpop.f32.mrb[0].mxu0
        %2852 = vdwg.mxu0
        %v2853 = vld [vmem:[%s8] sm:$0x1]
        %v2855 = vlaneseq
        %v2856 = vshrl.u32 %v2855, 7
        %v2857 = vsub.s32 0, %v2856
        %v2858 = vrot.slane %v2853, %v2857
        %v2860 = vmul.f32 %v2791, %v2858
        %v2861 = vmul.f32 %v2794, %v2858
        %v2862 = vmul.f32 %v2799, %v2858
        %v2863 = vmul.f32 %v2802, %v2858
        %v2864 = vmul.f32 %v2807, %v2858
        %v2865 = vmul.f32 %v2810, %v2858
        %v2866 = vmul.f32 %v2815, %v2858
        %v2867 = vmul.f32 %v2818, %v2858
        %v2868 = vmul.f32 %v2823, %v2858
        %v2869 = vmul.f32 %v2826, %v2858
        %v2870 = vmul.f32 %v2831, %v2858
        %v2871 = vmul.f32 %v2834, %v2858
        %v2872 = vmul.f32 %v2839, %v2858
        %v2873 = vmul.f32 %v2842, %v2858
        %v2874 = vmul.f32 %v2847, %v2858
        %v2875 = vmul.f32 %v2850, %v2858
        %v2876 = vld [vmem:[%s9] sm:$0x1]
        %v2878 = vlaneseq
        %v2879 = vshrl.u32 %v2878, 7
        %v2880 = vsub.s32 0, %v2879
        %v2881 = vrot.slane %v2876, %v2880
        %v2883 = vadd.f32 %v2860, %v2881
        %v2884 = vadd.f32 %v2861, %v2881
        %v2885 = vadd.f32 %v2862, %v2881
        %v2886 = vadd.f32 %v2863, %v2881
        %v2887 = vadd.f32 %v2864, %v2881
        %v2888 = vadd.f32 %v2865, %v2881
        %v2889 = vadd.f32 %v2866, %v2881
        %v2890 = vadd.f32 %v2867, %v2881
        %v2891 = vadd.f32 %v2868, %v2881
        %v2892 = vadd.f32 %v2869, %v2881
        %v2893 = vadd.f32 %v2870, %v2881
        %v2894 = vadd.f32 %v2871, %v2881
        %v2895 = vadd.f32 %v2872, %v2881
        %v2896 = vadd.f32 %v2873, %v2881
        %v2897 = vadd.f32 %v2874, %v2881
        %v2898 = vadd.f32 %v2875, %v2881
        %v2899 = vadd.f32 %v2883, %v822
        %v2900 = vadd.f32 %v2884, %v824
        %v2901 = vadd.f32 %v2885, %v826
        %v2902 = vadd.f32 %v2886, %v828
        %v2903 = vadd.f32 %v2887, %v830
        %v2904 = vadd.f32 %v2888, %v832
        %v2905 = vadd.f32 %v2889, %v834
        %v2906 = vadd.f32 %v2890, %v836
        %v2907 = vadd.f32 %v2891, %v838
        %v2908 = vadd.f32 %v2892, %v840
        %v2909 = vadd.f32 %v2893, %v842
        %v2910 = vadd.f32 %v2894, %v844
        %v2911 = vadd.f32 %v2895, %v846
        %v2912 = vadd.f32 %v2896, %v848
        %v2913 = vadd.f32 %v2897, %v850
        %v2914 = vadd.f32 %v2898, %v852
        %v2915 = vmax.f32 %v2899, 0.0
        %v2916 = vmax.f32 %v2900, 0.0
        %v2917 = vmax.f32 %v2901, 0.0
        %v2918 = vmax.f32 %v2902, 0.0
        %v2919 = vmax.f32 %v2903, 0.0
        %v2920 = vmax.f32 %v2904, 0.0
        %v2921 = vmax.f32 %v2905, 0.0
        %v2922 = vmax.f32 %v2906, 0.0
        %v2923 = vmax.f32 %v2907, 0.0
        %v2924 = vmax.f32 %v2908, 0.0
        %v2925 = vmax.f32 %v2909, 0.0
        %v2926 = vmax.f32 %v2910, 0.0
        %v2927 = vmax.f32 %v2911, 0.0
        %v2928 = vmax.f32 %v2912, 0.0
        %v2929 = vmax.f32 %v2913, 0.0
        %v2930 = vmax.f32 %v2914, 0.0
        %2931 = vst [vmem:[%s435] sm:$0xff] %v2915
        %2932 = vst [vmem:[%s435 + $0x8] sm:$0xff] %v2916
        %2933 = vst [vmem:[%s435 + $0x10] sm:$0xff] %v2917
        %2934 = vst [vmem:[%s435 + $0x18] sm:$0xff] %v2918
        %2935 = vst [vmem:[%s435 + $0x20] sm:$0xff] %v2919
        %2936 = vst [vmem:[%s435 + $0x28] sm:$0xff] %v2920
        %2937 = vst [vmem:[%s435 + $0x30] sm:$0xff] %v2921
        %2938 = vst [vmem:[%s435 + $0x38] sm:$0xff] %v2922
        %2939 = vst [vmem:[%s435 + $0x40] sm:$0xff] %v2923
        %2940 = vst [vmem:[%s435 + $0x48] sm:$0xff] %v2924
        %2941 = vst [vmem:[%s435 + $0x50] sm:$0xff] %v2925
        %2942 = vst [vmem:[%s435 + $0x58] sm:$0xff] %v2926
        %2943 = vst [vmem:[%s435 + $0x60] sm:$0xff] %v2927
        %2944 = vst [vmem:[%s435 + $0x68] sm:$0xff] %v2928
        %2945 = vst [vmem:[%s435 + $0x70] sm:$0xff] %v2929
        %2946 = vst [vmem:[%s435 + $0x78] sm:$0xff] %v2930
        %s2947 = sand.u32 %s266, 1
        %s2948 = scalar_lea.sflag [#allocation4], %s2947
        %s2949 = sand.u32 %s266, 1
        %s2950 = smul.addr %s2949, 128
        %s2951 = scalar_lea.vmem [#allocation10], %s2950
        // Predicated region
        $region77: #{tpu_custom_call.1} parent=59 // pred_check
          %p2952 = pneg %p276
        $region78: #{tpu_custom_call.1} parent=59 // pred_check_branch
          %2954 = sbr.rel (%p2952) target = $region80
        $region79: #{tpu_custom_call.1} parent=59 // pred_region
          %s2955 = smul.u32 8, %s34
          %s2957 = ssub.s32 2048, 2048
          %2958 = vsyncadd %s2948, %s2957
          %s2959 = smul.addr %s2955, 2
          %s2960 = smul.addr %s33, 32
          %s2961 = sadd.s32 %s2959, %s2960
          %s2962 = smul.addr %s2961, 128
          %s2963 = scalar_lea.hbm %s10, %s2962
          %s2964 = sshll.u32 %s2951, 4
          %s2965 = int_to_ptr.vmem [resolvable:$true] %s2964
          %2970 = dma.vmem_to_hbm [thread:$0]  %s2965, 2048, %s2963, %s2948, 128, 128, 8
        $region80: #{tpu_custom_call.1} parent=59 // pred_fallthru
          _
      $region60: #{tpu_custom_call.1} parent=5 // pred_fallthru
        _
      %p2971 = scmp.le.s32.totalorder 2, %s24
      // Predicated region
      $region81: #{tpu_custom_call.1} parent=5 // pred_check
        %p2972 = pneg %p2971
      $region82: #{tpu_custom_call.1} parent=5 // pred_check_branch
        %2974 = sbr.rel (%p2972) target = $region84
      $region83: #{tpu_custom_call.1} parent=5 // pred_region
        %s2975 = ssub.s32 %s24, 2
        // Predicated region
        $region85: #{tpu_custom_call.1} parent=83 // pred_check
          %p2976 = pneg %p282
        $region86: #{tpu_custom_call.1} parent=83 // pred_check_branch
          %2978 = sbr.rel (%p2976) target = $region88
        $region87: #{tpu_custom_call.1} parent=83 // pred_region
          %s2979 = sand.u32 %s267, 1
          %s2980 = scalar_lea.sflag [#allocation4], %s2979
          %s2981 = sand.u32 %s267, 1
          %s2982 = smul.addr %s2981, 128
          %s2983 = scalar_lea.vmem [#allocation10], %s2982
          %2984 = dma.done %s2980, 2048
        $region88: #{tpu_custom_call.1} parent=83 // pred_fallthru
          _
      $region84: #{tpu_custom_call.1} parent=5 // pred_fallthru
        _
    $region6: #{tpu_custom_call.1} parent=1 // loop_footer
      %s28 = sadd.s32 1, %s24
    $region7: #{tpu_custom_call.1} parent=1 // loop_footer_branch
      %23 = sbr.rel target = $region3
    $region8: #{tpu_custom_call.1} parent=1 // loop_exit
      _
    %2985 = vsyncpa [#allocation3], 1
    %s2986 = scalar_lea.sflag [#allocation3], 1
    %2987 = vsyncpa %s2986, 1
    %2988 = vsyncpa [#allocation6], 1
    %2989 = vsyncpa [#allocation9], 1
    %2990 = vsyncpa [#allocation4], 1
    %s2991 = scalar_lea.sflag [#allocation4], 1
    %2992 = vsyncpa %s2991, 1

</llo_original>
